<compile_context>
chip_gen: v7x
topology: tpu7x:2x2x1
jax: 0.10.0
libtpu: 0.0.40
codegen_flags: <defaults>
</compile_context>

<pallas_src>
import functools
import math

import jax
import jax.numpy as jnp
from jax.experimental import pallas as pl
from jax.experimental.pallas import tpu as pltpu

BN_EPS = 1e-5
LEAKY_SLOPE = 0.01


def _pick_tile_h(h, max_tile=32):
    """Largest multiple-of-8 divisor of h, capped so there are >= 2 H tiles."""
    cap = min(max_tile, h // 2)
    best = 0
    t = 8
    while t <= cap:
        if h % t == 0:
            best = t
        t += 8
    return best if best else h      # fall back to a single full-height tile


# ----------------------------- Pallas kernel ---------------------------------

def _conv3x3_bn_lrelu_kernel(*refs, n_inputs, tile_h, use_halo, alpha):
    """Direct 3x3 conv (stride 1, pad 1) + BN + LeakyReLU for one row tile.

    refs layout (per logical input, halo path):
      main (1, TILE_H, W+2, Cin) bf16, halo (1, 2, W+2, Cin) bf16
    then per input: weights (3, 3, Cin, Cout) bf16
    then scale (1, Cout) f32, bias (1, Cout) f32, out (1, TILE_H*W, Cout).
    """
    per = 2 if use_halo else 1
    act_refs = refs[: per * n_inputs]
    w_refs = refs[per * n_inputs: (per + 1) * n_inputs]
    s_ref, b_ref, o_ref = refs[(per + 1) * n_inputs:]

    c_out = o_ref.shape[-1]
    m = o_ref.shape[1]                        # TILE_H * W
    w_out = m // tile_h

    acc = jnp.zeros((m, c_out), jnp.float32)
    for i in range(n_inputs):
        if use_halo:
            main = act_refs[per * i][0]       # (TILE_H, W+2, Cin) bf16
            halo = act_refs[per * i + 1][0]   # (2,      W+2, Cin) bf16
            win = jnp.concatenate([main, halo], axis=0)   # (TILE_H+2, W+2, Cin)
        else:
            win = act_refs[per * i][0]        # (H+2, W+2, Cin) bf16
        wf = w_refs[i][...]                   # (3, 3, Cin, Cout) bf16, one load
        cin = win.shape[-1]
        for dh in range(3):
            rows = win[dh:dh + tile_h]        # (TILE_H, W+2, Cin) static slice
            for dw in range(3):
                a = rows[:, dw:dw + w_out, :].reshape(m, cin)
                acc += jnp.dot(a, wf[dh, dw],
                               preferred_element_type=jnp.float32)

    # Fused BatchNorm (folded scale/bias) + LeakyReLU epilogue in f32.
    y = acc * s_ref[...] + b_ref[...]
    y = jnp.where(y >= 0.0, y, alpha * y)
    o_ref[0] = y.astype(o_ref.dtype)


# ----------------------------- wrappers ---------------------------------------

def conv3x3_bn_lrelu(inputs, scale, bias, *, alpha=LEAKY_SLOPE,
                     out_dtype=jnp.float32, max_tile_h=32):
    """3x3 conv (stride 1, pad 1) + folded BN + LeakyReLU.

    `inputs` is a list of (x_nhwc, w_hwio) pairs whose contributions are summed
    in the accumulator — this implements the channel concat without ever
    materializing the concatenated tensor.
    """
    N, H, W, _ = inputs[0][0].shape
    c_out = inputs[0][1].shape[-1]
    tile_h = _pick_tile_h(H, max_tile_h)
    use_halo = tile_h < H
    n_tiles = H // tile_h

    operands, in_specs = [], []
    for x, w in inputs:
        assert x.shape[:3] == (N, H, W)
        assert w.shape[:2] == (3, 3) and w.shape[2] == x.shape[-1]
        # Single small spatial-pad + bf16 cast (fused by XLA with the producer).
        xp = jnp.pad(x.astype(jnp.bfloat16), ((0, 0), (1, 1), (1, 1), (0, 0)))
        wp2, cin = xp.shape[2], xp.shape[3]
        if use_halo:
            # Main block: rows [h*TILE_H, h*TILE_H + TILE_H) of the padded map.
            operands.append(xp)
            in_specs.append(pl.BlockSpec((1, tile_h, wp2, cin),
                                         lambda n, h: (n, h, 0, 0)))
            # 2-row halo: rows [h*TILE_H + TILE_H, +2); TILE_H is even so the
            # element offset is a valid block index for block size 2.
            half = tile_h // 2
            operands.append(xp)
            in_specs.append(pl.BlockSpec(
                (1, 2, wp2, cin),
                lambda n, h, half=half: (n, (h + 1) * half, 0, 0)))
        else:
            operands.append(xp)
            in_specs.append(pl.BlockSpec((1, H + 2, wp2, cin),
                                         lambda n, h: (n, 0, 0, 0)))
    for _, w in inputs:
        wb = w.astype(jnp.bfloat16)
        operands.append(wb)
        # Constant block index -> weights are DMA'd once and stay resident.
        in_specs.append(pl.BlockSpec(wb.shape, lambda n, h: (0, 0, 0, 0)))

    s = scale.astype(jnp.float32).reshape(1, c_out)
    b = bias.astype(jnp.float32).reshape(1, c_out)
    operands += [s, b]
    in_specs += [pl.BlockSpec((1, c_out), lambda n, h: (0, 0)),
                 pl.BlockSpec((1, c_out), lambda n, h: (0, 0))]

    cin_total = sum(x.shape[-1] for x, _ in inputs)
    flops = 2 * N * H * W * 9 * cin_total * c_out
    bytes_accessed = int(
        sum(N * (H + 2 * n_tiles) * (W + 2) * x.shape[-1] * 2
            for x, _ in inputs)                                 # halo-deduped in
        + sum(w.size for _, w in inputs) * 2                    # weights, bf16
        + 2 * 4 * c_out                                         # scale/bias
        + N * H * W * c_out * jnp.dtype(out_dtype).itemsize)    # output

    out = pl.pallas_call(
        functools.partial(_conv3x3_bn_lrelu_kernel, n_inputs=len(inputs),
                          tile_h=tile_h, use_halo=use_halo, alpha=alpha),
        out_shape=jax.ShapeDtypeStruct((N, H * W, c_out), out_dtype),
        grid=(N, n_tiles),
        in_specs=in_specs,
        out_specs=pl.BlockSpec((1, tile_h * W, c_out), lambda n, h: (n, h, 0)),
        compiler_params=pltpu.CompilerParams(
            dimension_semantics=("parallel", "parallel")),
        cost_estimate=pl.CostEstimate(flops=flops, transcendentals=0,
                                      bytes_accessed=bytes_accessed),
    )(*operands)
    return out.reshape(N, H, W, c_out)   # pure metadata reshape


def bilinear_resize_align_corners(x, ho, wo):
    """NHWC bilinear resize matching F.interpolate(..., align_corners=True)."""
    # TODO(synk): data-dependent gather kept as plain-JAX glue (folding it into
    # conv1 via scalar prefetch is a further optimization).
    N, H, W, C = x.shape
    if (H, W) == (ho, wo):
        return x

    def coords(out_size, in_size):
        if out_size == 1:
            return jnp.zeros((out_size,), jnp.float32)
        return jnp.arange(out_size, dtype=jnp.float32) * (
            (in_size - 1) / (out_size - 1))

    ys, xs = coords(ho, H), coords(wo, W)
    y0 = jnp.clip(jnp.floor(ys).astype(jnp.int32), 0, H - 1)
    y1 = jnp.clip(y0 + 1, 0, H - 1)
    wy = ys - y0.astype(jnp.float32)
    x0 = jnp.clip(jnp.floor(xs).astype(jnp.int32), 0, W - 1)
    x1 = jnp.clip(x0 + 1, 0, W - 1)
    wx = xs - x0.astype(jnp.float32)

    r0 = jnp.take(x, y0, axis=1)
    r1 = jnp.take(x, y1, axis=1)
    rows = r0 * (1.0 - wy)[None, :, None, None] + r1 * wy[None, :, None, None]
    c0 = jnp.take(rows, x0, axis=2)
    c1 = jnp.take(rows, x1, axis=2)
    return c0 * (1.0 - wx)[None, None, :, None] + c1 * wx[None, None, :, None]


# ----------------------------- parameters -------------------------------------

def _fold_bn(conv_bias, gamma, beta, mean, var):
    scale = gamma / jnp.sqrt(var + BN_EPS)
    bias = beta + scale * (conv_bias - mean)
    return scale, bias


def init_upsample_bn_params(key, skip_input, output_features):
    ks = jax.random.split(key, 6)

    def conv_w(k, cin, cout):
        std = math.sqrt(2.0 / (cin * 9))
        return std * jax.random.normal(k, (3, 3, cin, cout), jnp.float32)

    def bn_stats(k, c):
        k1, k2, k3, k4 = jax.random.split(k, 4)
        gamma = 1.0 + 0.1 * jax.random.normal(k1, (c,), jnp.float32)
        beta = 0.1 * jax.random.normal(k2, (c,), jnp.float32)
        mean = 0.1 * jax.random.normal(k3, (c,), jnp.float32)
        var = jax.random.uniform(k4, (c,), jnp.float32, minval=0.5, maxval=1.5)
        return gamma, beta, mean, var

    w1 = conv_w(ks[0], skip_input, output_features)
    b1 = 0.05 * jax.random.normal(ks[1], (output_features,), jnp.float32)
    w2 = conv_w(ks[2], output_features, output_features)
    b2 = 0.05 * jax.random.normal(ks[3], (output_features,), jnp.float32)
    return {
        'w1': w1, 'bn1': _fold_bn(b1, *bn_stats(ks[4], output_features)),
        'w2': w2, 'bn2': _fold_bn(b2, *bn_stats(ks[5], output_features)),
    }


# ----------------------------- forward ----------------------------------------

def upsample_bn_forward(x_nchw, concat_nchw, params):
    """Matches UpSampleBN.forward (NCHW in / NCHW out)."""
    x = jnp.transpose(x_nchw, (0, 2, 3, 1)).astype(jnp.float32)        # NHWC
    skip = jnp.transpose(concat_nchw, (0, 2, 3, 1)).astype(jnp.float32)
    ho, wo = skip.shape[1], skip.shape[2]

    up = bilinear_resize_align_corners(x, ho, wo)
    c1 = up.shape[-1]
    w1 = params['w1']

    # Conv1 with the channel concat fused (split weight, summed in-kernel).
    h1 = conv3x3_bn_lrelu(
        [(up, w1[:, :, :c1, :]), (skip, w1[:, :, c1:, :])],
        *params['bn1'], out_dtype=jnp.bfloat16)

    # TODO(synk): conv1 -> conv2 could be fused at the row-tile level to avoid
    # the h1 HBM round trip.
    h2 = conv3x3_bn_lrelu([(h1, params['w2'])], *params['bn2'],
                          out_dtype=jnp.float32)
    return jnp.transpose(h2, (0, 3, 1, 2))                             # NCHW


# Plain-JAX reference (same bf16 operand casts, f32 accumulation) for checking.
def _reference_forward(x_nchw, concat_nchw, params, alpha=LEAKY_SLOPE):
    x = jnp.transpose(x_nchw, (0, 2, 3, 1)).astype(jnp.float32)
    skip = jnp.transpose(concat_nchw, (0, 2, 3, 1)).astype(jnp.float32)
    up = bilinear_resize_align_corners(x, skip.shape[1], skip.shape[2])
    f = jnp.concatenate([up, skip], axis=-1)

    def conv_bn_lrelu(h, w, s, b, out_dtype):
        y = jax.lax.conv_general_dilated(
            h.astype(jnp.bfloat16), w.astype(jnp.bfloat16),
            window_strides=(1, 1), padding=((1, 1), (1, 1)),
            dimension_numbers=('NHWC', 'HWIO', 'NHWC'),
            preferred_element_type=jnp.float32)
        y = y * s.reshape(1, 1, 1, -1) + b.reshape(1, 1, 1, -1)
        y = jnp.where(y >= 0.0, y, alpha * y)
        return y.astype(out_dtype)

    h1 = conv_bn_lrelu(f, params['w1'], *params['bn1'], jnp.bfloat16)
    h2 = conv_bn_lrelu(h1.astype(jnp.float32), params['w2'], *params['bn2'],
                       jnp.float32)
    return jnp.transpose(h2, (0, 3, 1, 2))


# ----------------------------- demo --------------------------------------------

if __name__ == "__main__":
    key = jax.random.PRNGKey(0)
    kp, kx, kc = jax.random.split(key, 3)

    C_X, C_SKIP, FEATS = 16, 16, 32
    # x is the coarse feature map, concat_with the higher-res skip connection.
    x = jax.random.normal(kx, (2, C_X, 8, 8), jnp.float32)
    concat_with = jax.random.normal(kc, (2, C_SKIP, 16, 16), jnp.float32)
    params = init_upsample_bn_params(kp, C_X + C_SKIP, FEATS)

    fwd = jax.jit(upsample_bn_forward)
    out = jax.block_until_ready(fwd(x, concat_with, params))

    assert out.shape == (2, FEATS, 16, 16), out.shape
    assert bool(jnp.all(jnp.isfinite(out)))

    ref = jax.block_until_ready(
        jax.jit(_reference_forward)(x, concat_with, params))
    max_err = float(jnp.max(jnp.abs(out - ref)))
    assert max_err < 2e-2, f"max abs error vs reference: {max_err}"

    print("KERNEL_OK")
</pallas_src>

<mosaic_0001>
module attributes {stable_mosaic.version = 11 : i64} {
  func.func @_conv3x3_bn_lrelu_kernel(%arg0: i32, %arg1: i32, %arg2: memref<1x8x18x16xbf16, #tpu.memory_space<vmem>>, %arg3: memref<1x2x18x16xbf16, #tpu.memory_space<vmem>>, %arg4: memref<1x8x18x16xbf16, #tpu.memory_space<vmem>>, %arg5: memref<1x2x18x16xbf16, #tpu.memory_space<vmem>>, %arg6: memref<3x3x16x32xbf16, #tpu.memory_space<vmem>>, %arg7: memref<3x3x16x32xbf16, #tpu.memory_space<vmem>>, %arg8: memref<1x32xf32, #tpu.memory_space<vmem>>, %arg9: memref<1x32xf32, #tpu.memory_space<vmem>>, %arg10: memref<1x128x32xbf16, #tpu.memory_space<vmem>>) attributes {dimension_semantics = [#tpu.dimension_semantics<parallel>, #tpu.dimension_semantics<parallel>], iteration_bounds = array<i64: 2, 2>, scalar_prefetch = 0 : i64, scratch_operands = 0 : i64, tpu.core_type = #tpu.core_type<tc>, window_params = [{transform_indices = @transform_0, window_bounds = array<i64: 1, 8, 18, 16>}, {transform_indices = @transform_1, window_bounds = array<i64: 1, 2, 18, 16>}, {transform_indices = @transform_2, window_bounds = array<i64: 1, 8, 18, 16>}, {transform_indices = @transform_3, window_bounds = array<i64: 1, 2, 18, 16>}, {pipeline_mode = #tpu.pipeline_mode<synchronous>, transform_indices = @transform_4, window_bounds = array<i64: 3, 3, 16, 32>}, {pipeline_mode = #tpu.pipeline_mode<synchronous>, transform_indices = @transform_5, window_bounds = array<i64: 3, 3, 16, 32>}, {pipeline_mode = #tpu.pipeline_mode<synchronous>, transform_indices = @transform_6, window_bounds = array<i64: 1, 32>}, {pipeline_mode = #tpu.pipeline_mode<synchronous>, transform_indices = @transform_7, window_bounds = array<i64: 1, 32>}, {transform_indices = @transform_8, window_bounds = array<i64: 1, 128, 32>}]} {
    %cst = arith.constant 0.000000e+00 : f32
    %0 = vector.broadcast %cst : f32 to vector<128x32xf32>
    %c0 = arith.constant 0 : index
    %c0_0 = arith.constant 0 : index
    %c0_1 = arith.constant 0 : index
    %c0_2 = arith.constant 0 : index
    %1 = vector.load %arg2[%c0, %c0_0, %c0_1, %c0_2] : memref<1x8x18x16xbf16, #tpu.memory_space<vmem>>, vector<1x8x18x16xbf16>
    %2 = vector.shape_cast %1 : vector<1x8x18x16xbf16> to vector<8x18x16xbf16>
    %c0_3 = arith.constant 0 : index
    %c0_4 = arith.constant 0 : index
    %c0_5 = arith.constant 0 : index
    %c0_6 = arith.constant 0 : index
    %3 = vector.load %arg3[%c0_3, %c0_4, %c0_5, %c0_6] : memref<1x2x18x16xbf16, #tpu.memory_space<vmem>>, vector<1x2x18x16xbf16>
    %4 = vector.shape_cast %3 : vector<1x2x18x16xbf16> to vector<2x18x16xbf16>
    %5 = tpu.concatenate %2, %4 in 0 : vector<8x18x16xbf16>, vector<2x18x16xbf16> -> vector<10x18x16xbf16>
    %c0_7 = arith.constant 0 : index
    %c0_8 = arith.constant 0 : index
    %c0_9 = arith.constant 0 : index
    %c0_10 = arith.constant 0 : index
    %6 = vector.load %arg6[%c0_7, %c0_8, %c0_9, %c0_10] : memref<3x3x16x32xbf16, #tpu.memory_space<vmem>>, vector<3x3x16x32xbf16>
    %7 = vector.extract_strided_slice %5 {offsets = [0, 0, 0], sizes = [8, 18, 16], strides = [1, 1, 1]} : vector<10x18x16xbf16> to vector<8x18x16xbf16>
    %8 = vector.extract_strided_slice %7 {offsets = [0, 0, 0], sizes = [8, 16, 16], strides = [1, 1, 1]} : vector<8x18x16xbf16> to vector<8x16x16xbf16>
    %9 = vector.shape_cast %8 : vector<8x16x16xbf16> to vector<128x16xbf16>
    %10 = vector.extract_strided_slice %6 {offsets = [0, 0, 0, 0], sizes = [1, 1, 16, 32], strides = [1, 1, 1, 1]} : vector<3x3x16x32xbf16> to vector<1x1x16x32xbf16>
    %11 = vector.shape_cast %10 : vector<1x1x16x32xbf16> to vector<16x32xbf16>
    %cst_11 = arith.constant dense<0.000000e+00> : vector<128x32xf32>
    %12 = tpu.matmul %9, %11, %cst_11 {dimension_numbers = #tpu.dot_dimension_numbers<[1], [0], [0], [1], [0, 0, 1, 1], [], []>} : vector<128x16xbf16>, vector<16x32xbf16>, vector<128x32xf32> -> vector<128x32xf32>
    %13 = arith.addf %0, %12 : vector<128x32xf32>
    %14 = vector.extract_strided_slice %7 {offsets = [0, 1, 0], sizes = [8, 16, 16], strides = [1, 1, 1]} : vector<8x18x16xbf16> to vector<8x16x16xbf16>
    %15 = vector.shape_cast %14 : vector<8x16x16xbf16> to vector<128x16xbf16>
    %16 = vector.extract_strided_slice %6 {offsets = [0, 1, 0, 0], sizes = [1, 1, 16, 32], strides = [1, 1, 1, 1]} : vector<3x3x16x32xbf16> to vector<1x1x16x32xbf16>
    %17 = vector.shape_cast %16 : vector<1x1x16x32xbf16> to vector<16x32xbf16>
    %cst_12 = arith.constant dense<0.000000e+00> : vector<128x32xf32>
    %18 = tpu.matmul %15, %17, %cst_12 {dimension_numbers = #tpu.dot_dimension_numbers<[1], [0], [0], [1], [0, 0, 1, 1], [], []>} : vector<128x16xbf16>, vector<16x32xbf16>, vector<128x32xf32> -> vector<128x32xf32>
    %19 = arith.addf %13, %18 : vector<128x32xf32>
    %20 = vector.extract_strided_slice %7 {offsets = [0, 2, 0], sizes = [8, 16, 16], strides = [1, 1, 1]} : vector<8x18x16xbf16> to vector<8x16x16xbf16>
    %21 = vector.shape_cast %20 : vector<8x16x16xbf16> to vector<128x16xbf16>
    %22 = vector.extract_strided_slice %6 {offsets = [0, 2, 0, 0], sizes = [1, 1, 16, 32], strides = [1, 1, 1, 1]} : vector<3x3x16x32xbf16> to vector<1x1x16x32xbf16>
    %23 = vector.shape_cast %22 : vector<1x1x16x32xbf16> to vector<16x32xbf16>
    %cst_13 = arith.constant dense<0.000000e+00> : vector<128x32xf32>
    %24 = tpu.matmul %21, %23, %cst_13 {dimension_numbers = #tpu.dot_dimension_numbers<[1], [0], [0], [1], [0, 0, 1, 1], [], []>} : vector<128x16xbf16>, vector<16x32xbf16>, vector<128x32xf32> -> vector<128x32xf32>
    %25 = arith.addf %19, %24 : vector<128x32xf32>
    %26 = vector.extract_strided_slice %5 {offsets = [1, 0, 0], sizes = [8, 18, 16], strides = [1, 1, 1]} : vector<10x18x16xbf16> to vector<8x18x16xbf16>
    %27 = vector.extract_strided_slice %26 {offsets = [0, 0, 0], sizes = [8, 16, 16], strides = [1, 1, 1]} : vector<8x18x16xbf16> to vector<8x16x16xbf16>
    %28 = vector.shape_cast %27 : vector<8x16x16xbf16> to vector<128x16xbf16>
    %29 = vector.extract_strided_slice %6 {offsets = [1, 0, 0, 0], sizes = [1, 1, 16, 32], strides = [1, 1, 1, 1]} : vector<3x3x16x32xbf16> to vector<1x1x16x32xbf16>
    %30 = vector.shape_cast %29 : vector<1x1x16x32xbf16> to vector<16x32xbf16>
    %cst_14 = arith.constant dense<0.000000e+00> : vector<128x32xf32>
    %31 = tpu.matmul %28, %30, %cst_14 {dimension_numbers = #tpu.dot_dimension_numbers<[1], [0], [0], [1], [0, 0, 1, 1], [], []>} : vector<128x16xbf16>, vector<16x32xbf16>, vector<128x32xf32> -> vector<128x32xf32>
    %32 = arith.addf %25, %31 : vector<128x32xf32>
    %33 = vector.extract_strided_slice %26 {offsets = [0, 1, 0], sizes = [8, 16, 16], strides = [1, 1, 1]} : vector<8x18x16xbf16> to vector<8x16x16xbf16>
    %34 = vector.shape_cast %33 : vector<8x16x16xbf16> to vector<128x16xbf16>
    %35 = vector.extract_strided_slice %6 {offsets = [1, 1, 0, 0], sizes = [1, 1, 16, 32], strides = [1, 1, 1, 1]} : vector<3x3x16x32xbf16> to vector<1x1x16x32xbf16>
    %36 = vector.shape_cast %35 : vector<1x1x16x32xbf16> to vector<16x32xbf16>
    %cst_15 = arith.constant dense<0.000000e+00> : vector<128x32xf32>
    %37 = tpu.matmul %34, %36, %cst_15 {dimension_numbers = #tpu.dot_dimension_numbers<[1], [0], [0], [1], [0, 0, 1, 1], [], []>} : vector<128x16xbf16>, vector<16x32xbf16>, vector<128x32xf32> -> vector<128x32xf32>
    %38 = arith.addf %32, %37 : vector<128x32xf32>
    %39 = vector.extract_strided_slice %26 {offsets = [0, 2, 0], sizes = [8, 16, 16], strides = [1, 1, 1]} : vector<8x18x16xbf16> to vector<8x16x16xbf16>
    %40 = vector.shape_cast %39 : vector<8x16x16xbf16> to vector<128x16xbf16>
    %41 = vector.extract_strided_slice %6 {offsets = [1, 2, 0, 0], sizes = [1, 1, 16, 32], strides = [1, 1, 1, 1]} : vector<3x3x16x32xbf16> to vector<1x1x16x32xbf16>
    %42 = vector.shape_cast %41 : vector<1x1x16x32xbf16> to vector<16x32xbf16>
    %cst_16 = arith.constant dense<0.000000e+00> : vector<128x32xf32>
    %43 = tpu.matmul %40, %42, %cst_16 {dimension_numbers = #tpu.dot_dimension_numbers<[1], [0], [0], [1], [0, 0, 1, 1], [], []>} : vector<128x16xbf16>, vector<16x32xbf16>, vector<128x32xf32> -> vector<128x32xf32>
    %44 = arith.addf %38, %43 : vector<128x32xf32>
    %45 = vector.extract_strided_slice %5 {offsets = [2, 0, 0], sizes = [8, 18, 16], strides = [1, 1, 1]} : vector<10x18x16xbf16> to vector<8x18x16xbf16>
    %46 = vector.extract_strided_slice %45 {offsets = [0, 0, 0], sizes = [8, 16, 16], strides = [1, 1, 1]} : vector<8x18x16xbf16> to vector<8x16x16xbf16>
    %47 = vector.shape_cast %46 : vector<8x16x16xbf16> to vector<128x16xbf16>
    %48 = vector.extract_strided_slice %6 {offsets = [2, 0, 0, 0], sizes = [1, 1, 16, 32], strides = [1, 1, 1, 1]} : vector<3x3x16x32xbf16> to vector<1x1x16x32xbf16>
    %49 = vector.shape_cast %48 : vector<1x1x16x32xbf16> to vector<16x32xbf16>
    %cst_17 = arith.constant dense<0.000000e+00> : vector<128x32xf32>
    %50 = tpu.matmul %47, %49, %cst_17 {dimension_numbers = #tpu.dot_dimension_numbers<[1], [0], [0], [1], [0, 0, 1, 1], [], []>} : vector<128x16xbf16>, vector<16x32xbf16>, vector<128x32xf32> -> vector<128x32xf32>
    %51 = arith.addf %44, %50 : vector<128x32xf32>
    %52 = vector.extract_strided_slice %45 {offsets = [0, 1, 0], sizes = [8, 16, 16], strides = [1, 1, 1]} : vector<8x18x16xbf16> to vector<8x16x16xbf16>
    %53 = vector.shape_cast %52 : vector<8x16x16xbf16> to vector<128x16xbf16>
    %54 = vector.extract_strided_slice %6 {offsets = [2, 1, 0, 0], sizes = [1, 1, 16, 32], strides = [1, 1, 1, 1]} : vector<3x3x16x32xbf16> to vector<1x1x16x32xbf16>
    %55 = vector.shape_cast %54 : vector<1x1x16x32xbf16> to vector<16x32xbf16>
    %cst_18 = arith.constant dense<0.000000e+00> : vector<128x32xf32>
    %56 = tpu.matmul %53, %55, %cst_18 {dimension_numbers = #tpu.dot_dimension_numbers<[1], [0], [0], [1], [0, 0, 1, 1], [], []>} : vector<128x16xbf16>, vector<16x32xbf16>, vector<128x32xf32> -> vector<128x32xf32>
    %57 = arith.addf %51, %56 : vector<128x32xf32>
    %58 = vector.extract_strided_slice %45 {offsets = [0, 2, 0], sizes = [8, 16, 16], strides = [1, 1, 1]} : vector<8x18x16xbf16> to vector<8x16x16xbf16>
    %59 = vector.shape_cast %58 : vector<8x16x16xbf16> to vector<128x16xbf16>
    %60 = vector.extract_strided_slice %6 {offsets = [2, 2, 0, 0], sizes = [1, 1, 16, 32], strides = [1, 1, 1, 1]} : vector<3x3x16x32xbf16> to vector<1x1x16x32xbf16>
    %61 = vector.shape_cast %60 : vector<1x1x16x32xbf16> to vector<16x32xbf16>
    %cst_19 = arith.constant dense<0.000000e+00> : vector<128x32xf32>
    %62 = tpu.matmul %59, %61, %cst_19 {dimension_numbers = #tpu.dot_dimension_numbers<[1], [0], [0], [1], [0, 0, 1, 1], [], []>} : vector<128x16xbf16>, vector<16x32xbf16>, vector<128x32xf32> -> vector<128x32xf32>
    %63 = arith.addf %57, %62 : vector<128x32xf32>
    %c0_20 = arith.constant 0 : index
    %c0_21 = arith.constant 0 : index
    %c0_22 = arith.constant 0 : index
    %c0_23 = arith.constant 0 : index
    %64 = vector.load %arg4[%c0_20, %c0_21, %c0_22, %c0_23] : memref<1x8x18x16xbf16, #tpu.memory_space<vmem>>, vector<1x8x18x16xbf16>
    %65 = vector.shape_cast %64 : vector<1x8x18x16xbf16> to vector<8x18x16xbf16>
    %c0_24 = arith.constant 0 : index
    %c0_25 = arith.constant 0 : index
    %c0_26 = arith.constant 0 : index
    %c0_27 = arith.constant 0 : index
    %66 = vector.load %arg5[%c0_24, %c0_25, %c0_26, %c0_27] : memref<1x2x18x16xbf16, #tpu.memory_space<vmem>>, vector<1x2x18x16xbf16>
    %67 = vector.shape_cast %66 : vector<1x2x18x16xbf16> to vector<2x18x16xbf16>
    %68 = tpu.concatenate %65, %67 in 0 : vector<8x18x16xbf16>, vector<2x18x16xbf16> -> vector<10x18x16xbf16>
    %c0_28 = arith.constant 0 : index
    %c0_29 = arith.constant 0 : index
    %c0_30 = arith.constant 0 : index
    %c0_31 = arith.constant 0 : index
    %69 = vector.load %arg7[%c0_28, %c0_29, %c0_30, %c0_31] : memref<3x3x16x32xbf16, #tpu.memory_space<vmem>>, vector<3x3x16x32xbf16>
    %70 = vector.extract_strided_slice %68 {offsets = [0, 0, 0], sizes = [8, 18, 16], strides = [1, 1, 1]} : vector<10x18x16xbf16> to vector<8x18x16xbf16>
    %71 = vector.extract_strided_slice %70 {offsets = [0, 0, 0], sizes = [8, 16, 16], strides = [1, 1, 1]} : vector<8x18x16xbf16> to vector<8x16x16xbf16>
    %72 = vector.shape_cast %71 : vector<8x16x16xbf16> to vector<128x16xbf16>
    %73 = vector.extract_strided_slice %69 {offsets = [0, 0, 0, 0], sizes = [1, 1, 16, 32], strides = [1, 1, 1, 1]} : vector<3x3x16x32xbf16> to vector<1x1x16x32xbf16>
    %74 = vector.shape_cast %73 : vector<1x1x16x32xbf16> to vector<16x32xbf16>
    %cst_32 = arith.constant dense<0.000000e+00> : vector<128x32xf32>
    %75 = tpu.matmul %72, %74, %cst_32 {dimension_numbers = #tpu.dot_dimension_numbers<[1], [0], [0], [1], [0, 0, 1, 1], [], []>} : vector<128x16xbf16>, vector<16x32xbf16>, vector<128x32xf32> -> vector<128x32xf32>
    %76 = arith.addf %63, %75 : vector<128x32xf32>
    %77 = vector.extract_strided_slice %70 {offsets = [0, 1, 0], sizes = [8, 16, 16], strides = [1, 1, 1]} : vector<8x18x16xbf16> to vector<8x16x16xbf16>
    %78 = vector.shape_cast %77 : vector<8x16x16xbf16> to vector<128x16xbf16>
    %79 = vector.extract_strided_slice %69 {offsets = [0, 1, 0, 0], sizes = [1, 1, 16, 32], strides = [1, 1, 1, 1]} : vector<3x3x16x32xbf16> to vector<1x1x16x32xbf16>
    %80 = vector.shape_cast %79 : vector<1x1x16x32xbf16> to vector<16x32xbf16>
    %cst_33 = arith.constant dense<0.000000e+00> : vector<128x32xf32>
    %81 = tpu.matmul %78, %80, %cst_33 {dimension_numbers = #tpu.dot_dimension_numbers<[1], [0], [0], [1], [0, 0, 1, 1], [], []>} : vector<128x16xbf16>, vector<16x32xbf16>, vector<128x32xf32> -> vector<128x32xf32>
    %82 = arith.addf %76, %81 : vector<128x32xf32>
    %83 = vector.extract_strided_slice %70 {offsets = [0, 2, 0], sizes = [8, 16, 16], strides = [1, 1, 1]} : vector<8x18x16xbf16> to vector<8x16x16xbf16>
    %84 = vector.shape_cast %83 : vector<8x16x16xbf16> to vector<128x16xbf16>
    %85 = vector.extract_strided_slice %69 {offsets = [0, 2, 0, 0], sizes = [1, 1, 16, 32], strides = [1, 1, 1, 1]} : vector<3x3x16x32xbf16> to vector<1x1x16x32xbf16>
    %86 = vector.shape_cast %85 : vector<1x1x16x32xbf16> to vector<16x32xbf16>
    %cst_34 = arith.constant dense<0.000000e+00> : vector<128x32xf32>
    %87 = tpu.matmul %84, %86, %cst_34 {dimension_numbers = #tpu.dot_dimension_numbers<[1], [0], [0], [1], [0, 0, 1, 1], [], []>} : vector<128x16xbf16>, vector<16x32xbf16>, vector<128x32xf32> -> vector<128x32xf32>
    %88 = arith.addf %82, %87 : vector<128x32xf32>
    %89 = vector.extract_strided_slice %68 {offsets = [1, 0, 0], sizes = [8, 18, 16], strides = [1, 1, 1]} : vector<10x18x16xbf16> to vector<8x18x16xbf16>
    %90 = vector.extract_strided_slice %89 {offsets = [0, 0, 0], sizes = [8, 16, 16], strides = [1, 1, 1]} : vector<8x18x16xbf16> to vector<8x16x16xbf16>
    %91 = vector.shape_cast %90 : vector<8x16x16xbf16> to vector<128x16xbf16>
    %92 = vector.extract_strided_slice %69 {offsets = [1, 0, 0, 0], sizes = [1, 1, 16, 32], strides = [1, 1, 1, 1]} : vector<3x3x16x32xbf16> to vector<1x1x16x32xbf16>
    %93 = vector.shape_cast %92 : vector<1x1x16x32xbf16> to vector<16x32xbf16>
    %cst_35 = arith.constant dense<0.000000e+00> : vector<128x32xf32>
    %94 = tpu.matmul %91, %93, %cst_35 {dimension_numbers = #tpu.dot_dimension_numbers<[1], [0], [0], [1], [0, 0, 1, 1], [], []>} : vector<128x16xbf16>, vector<16x32xbf16>, vector<128x32xf32> -> vector<128x32xf32>
    %95 = arith.addf %88, %94 : vector<128x32xf32>
    %96 = vector.extract_strided_slice %89 {offsets = [0, 1, 0], sizes = [8, 16, 16], strides = [1, 1, 1]} : vector<8x18x16xbf16> to vector<8x16x16xbf16>
    %97 = vector.shape_cast %96 : vector<8x16x16xbf16> to vector<128x16xbf16>
    %98 = vector.extract_strided_slice %69 {offsets = [1, 1, 0, 0], sizes = [1, 1, 16, 32], strides = [1, 1, 1, 1]} : vector<3x3x16x32xbf16> to vector<1x1x16x32xbf16>
    %99 = vector.shape_cast %98 : vector<1x1x16x32xbf16> to vector<16x32xbf16>
    %cst_36 = arith.constant dense<0.000000e+00> : vector<128x32xf32>
    %100 = tpu.matmul %97, %99, %cst_36 {dimension_numbers = #tpu.dot_dimension_numbers<[1], [0], [0], [1], [0, 0, 1, 1], [], []>} : vector<128x16xbf16>, vector<16x32xbf16>, vector<128x32xf32> -> vector<128x32xf32>
    %101 = arith.addf %95, %100 : vector<128x32xf32>
    %102 = vector.extract_strided_slice %89 {offsets = [0, 2, 0], sizes = [8, 16, 16], strides = [1, 1, 1]} : vector<8x18x16xbf16> to vector<8x16x16xbf16>
    %103 = vector.shape_cast %102 : vector<8x16x16xbf16> to vector<128x16xbf16>
    %104 = vector.extract_strided_slice %69 {offsets = [1, 2, 0, 0], sizes = [1, 1, 16, 32], strides = [1, 1, 1, 1]} : vector<3x3x16x32xbf16> to vector<1x1x16x32xbf16>
    %105 = vector.shape_cast %104 : vector<1x1x16x32xbf16> to vector<16x32xbf16>
    %cst_37 = arith.constant dense<0.000000e+00> : vector<128x32xf32>
    %106 = tpu.matmul %103, %105, %cst_37 {dimension_numbers = #tpu.dot_dimension_numbers<[1], [0], [0], [1], [0, 0, 1, 1], [], []>} : vector<128x16xbf16>, vector<16x32xbf16>, vector<128x32xf32> -> vector<128x32xf32>
    %107 = arith.addf %101, %106 : vector<128x32xf32>
    %108 = vector.extract_strided_slice %68 {offsets = [2, 0, 0], sizes = [8, 18, 16], strides = [1, 1, 1]} : vector<10x18x16xbf16> to vector<8x18x16xbf16>
    %109 = vector.extract_strided_slice %108 {offsets = [0, 0, 0], sizes = [8, 16, 16], strides = [1, 1, 1]} : vector<8x18x16xbf16> to vector<8x16x16xbf16>
    %110 = vector.shape_cast %109 : vector<8x16x16xbf16> to vector<128x16xbf16>
    %111 = vector.extract_strided_slice %69 {offsets = [2, 0, 0, 0], sizes = [1, 1, 16, 32], strides = [1, 1, 1, 1]} : vector<3x3x16x32xbf16> to vector<1x1x16x32xbf16>
    %112 = vector.shape_cast %111 : vector<1x1x16x32xbf16> to vector<16x32xbf16>
    %cst_38 = arith.constant dense<0.000000e+00> : vector<128x32xf32>
    %113 = tpu.matmul %110, %112, %cst_38 {dimension_numbers = #tpu.dot_dimension_numbers<[1], [0], [0], [1], [0, 0, 1, 1], [], []>} : vector<128x16xbf16>, vector<16x32xbf16>, vector<128x32xf32> -> vector<128x32xf32>
    %114 = arith.addf %107, %113 : vector<128x32xf32>
    %115 = vector.extract_strided_slice %108 {offsets = [0, 1, 0], sizes = [8, 16, 16], strides = [1, 1, 1]} : vector<8x18x16xbf16> to vector<8x16x16xbf16>
    %116 = vector.shape_cast %115 : vector<8x16x16xbf16> to vector<128x16xbf16>
    %117 = vector.extract_strided_slice %69 {offsets = [2, 1, 0, 0], sizes = [1, 1, 16, 32], strides = [1, 1, 1, 1]} : vector<3x3x16x32xbf16> to vector<1x1x16x32xbf16>
    %118 = vector.shape_cast %117 : vector<1x1x16x32xbf16> to vector<16x32xbf16>
    %cst_39 = arith.constant dense<0.000000e+00> : vector<128x32xf32>
    %119 = tpu.matmul %116, %118, %cst_39 {dimension_numbers = #tpu.dot_dimension_numbers<[1], [0], [0], [1], [0, 0, 1, 1], [], []>} : vector<128x16xbf16>, vector<16x32xbf16>, vector<128x32xf32> -> vector<128x32xf32>
    %120 = arith.addf %114, %119 : vector<128x32xf32>
    %121 = vector.extract_strided_slice %108 {offsets = [0, 2, 0], sizes = [8, 16, 16], strides = [1, 1, 1]} : vector<8x18x16xbf16> to vector<8x16x16xbf16>
    %122 = vector.shape_cast %121 : vector<8x16x16xbf16> to vector<128x16xbf16>
    %123 = vector.extract_strided_slice %69 {offsets = [2, 2, 0, 0], sizes = [1, 1, 16, 32], strides = [1, 1, 1, 1]} : vector<3x3x16x32xbf16> to vector<1x1x16x32xbf16>
    %124 = vector.shape_cast %123 : vector<1x1x16x32xbf16> to vector<16x32xbf16>
    %cst_40 = arith.constant dense<0.000000e+00> : vector<128x32xf32>
    %125 = tpu.matmul %122, %124, %cst_40 {dimension_numbers = #tpu.dot_dimension_numbers<[1], [0], [0], [1], [0, 0, 1, 1], [], []>} : vector<128x16xbf16>, vector<16x32xbf16>, vector<128x32xf32> -> vector<128x32xf32>
    %126 = arith.addf %120, %125 : vector<128x32xf32>
    %c0_41 = arith.constant 0 : index
    %c0_42 = arith.constant 0 : index
    %127 = vector.load %arg8[%c0_41, %c0_42] : memref<1x32xf32, #tpu.memory_space<vmem>>, vector<1x32xf32>
    %128 = vector.broadcast %127 : vector<1x32xf32> to vector<128x32xf32>
    %129 = arith.mulf %126, %128 : vector<128x32xf32>
    %c0_43 = arith.constant 0 : index
    %c0_44 = arith.constant 0 : index
    %130 = vector.load %arg9[%c0_43, %c0_44] : memref<1x32xf32, #tpu.memory_space<vmem>>, vector<1x32xf32>
    %131 = vector.broadcast %130 : vector<1x32xf32> to vector<128x32xf32>
    %132 = arith.addf %129, %131 : vector<128x32xf32>
    %cst_45 = arith.constant 0.000000e+00 : f32
    %133 = vector.broadcast %cst_45 : f32 to vector<128x32xf32>
    %134 = arith.cmpf oge, %132, %133 : vector<128x32xf32>
    %cst_46 = arith.constant 0.00999999977 : f32
    %135 = vector.broadcast %cst_46 : f32 to vector<128x32xf32>
    %136 = arith.mulf %135, %132 : vector<128x32xf32>
    %137 = arith.select %134, %132, %136 : vector<128x32xi1>, vector<128x32xf32>
    %138 = arith.truncf %137 : vector<128x32xf32> to vector<128x32xbf16>
    %c0_47 = arith.constant 0 : index
    %c0_48 = arith.constant 0 : index
    %c0_49 = arith.constant 0 : index
    %139 = vector.load %arg10[%c0_47, %c0_48, %c0_49] : memref<1x128x32xbf16, #tpu.memory_space<vmem>>, vector<1x128x32xbf16>
    %140 = vector.shape_cast %139 : vector<1x128x32xbf16> to vector<128x32xbf16>
    %141 = vector.shape_cast %138 : vector<128x32xbf16> to vector<1x128x32xbf16>
    tpu.vector_store %arg10[%c0_47, %c0_48, %c0_49], %141 {strides = array<i32>} : memref<1x128x32xbf16, #tpu.memory_space<vmem>>, vector<1x128x32xbf16>,
    return
  }
  func.func @transform_0(%arg0: i32, %arg1: i32) -> (i32, i32, i32, i32) {
    %c0_i32 = arith.constant 0 : i32
    %c0_i32_0 = arith.constant 0 : i32
    %c0_i32_1 = arith.constant 0 : i32
    return %arg0, %arg1, %c0_i32, %c0_i32_0 : i32, i32, i32, i32
  }
  func.func @transform_1(%arg0: i32, %arg1: i32) -> (i32, i32, i32, i32) {
    %c1_i32 = arith.constant 1 : i32
    %0 = arith.addi %arg1, %c1_i32 : i32
    %c4_i32 = arith.constant 4 : i32
    %1 = arith.muli %0, %c4_i32 : i32
    %c0_i32 = arith.constant 0 : i32
    %c0_i32_0 = arith.constant 0 : i32
    %c0_i32_1 = arith.constant 0 : i32
    return %arg0, %1, %c0_i32, %c0_i32_0 : i32, i32, i32, i32
  }
  func.func @transform_2(%arg0: i32, %arg1: i32) -> (i32, i32, i32, i32) {
    %c0_i32 = arith.constant 0 : i32
    %c0_i32_0 = arith.constant 0 : i32
    %c0_i32_1 = arith.constant 0 : i32
    return %arg0, %arg1, %c0_i32, %c0_i32_0 : i32, i32, i32, i32
  }
  func.func @transform_3(%arg0: i32, %arg1: i32) -> (i32, i32, i32, i32) {
    %c1_i32 = arith.constant 1 : i32
    %0 = arith.addi %arg1, %c1_i32 : i32
    %c4_i32 = arith.constant 4 : i32
    %1 = arith.muli %0, %c4_i32 : i32
    %c0_i32 = arith.constant 0 : i32
    %c0_i32_0 = arith.constant 0 : i32
    %c0_i32_1 = arith.constant 0 : i32
    return %arg0, %1, %c0_i32, %c0_i32_0 : i32, i32, i32, i32
  }
  func.func @transform_4(%arg0: i32, %arg1: i32) -> (i32, i32, i32, i32) {
    %c0_i32 = arith.constant 0 : i32
    %c0_i32_0 = arith.constant 0 : i32
    %c0_i32_1 = arith.constant 0 : i32
    %c0_i32_2 = arith.constant 0 : i32
    %c0_i32_3 = arith.constant 0 : i32
    return %c0_i32, %c0_i32_0, %c0_i32_1, %c0_i32_2 : i32, i32, i32, i32
  }
  func.func @transform_5(%arg0: i32, %arg1: i32) -> (i32, i32, i32, i32) {
    %c0_i32 = arith.constant 0 : i32
    %c0_i32_0 = arith.constant 0 : i32
    %c0_i32_1 = arith.constant 0 : i32
    %c0_i32_2 = arith.constant 0 : i32
    %c0_i32_3 = arith.constant 0 : i32
    return %c0_i32, %c0_i32_0, %c0_i32_1, %c0_i32_2 : i32, i32, i32, i32
  }
  func.func @transform_6(%arg0: i32, %arg1: i32) -> (i32, i32) {
    %c0_i32 = arith.constant 0 : i32
    %c0_i32_0 = arith.constant 0 : i32
    %c0_i32_1 = arith.constant 0 : i32
    return %c0_i32, %c0_i32_0 : i32, i32
  }
  func.func @transform_7(%arg0: i32, %arg1: i32) -> (i32, i32) {
    %c0_i32 = arith.constant 0 : i32
    %c0_i32_0 = arith.constant 0 : i32
    %c0_i32_1 = arith.constant 0 : i32
    return %c0_i32, %c0_i32_0 : i32, i32
  }
  func.func @transform_8(%arg0: i32, %arg1: i32) -> (i32, i32, i32) {
    %c0_i32 = arith.constant 0 : i32
    %c0_i32_0 = arith.constant 0 : i32
    return %arg0, %arg1, %c0_i32 : i32, i32, i32
  }
}

module attributes {stable_mosaic.version = 11 : i64} {
  func.func @_conv3x3_bn_lrelu_kernel(%arg0: i32, %arg1: i32, %arg2: memref<1x8x18x32xbf16, #tpu.memory_space<vmem>>, %arg3: memref<1x2x18x32xbf16, #tpu.memory_space<vmem>>, %arg4: memref<3x3x32x32xbf16, #tpu.memory_space<vmem>>, %arg5: memref<1x32xf32, #tpu.memory_space<vmem>>, %arg6: memref<1x32xf32, #tpu.memory_space<vmem>>, %arg7: memref<1x128x32xf32, #tpu.memory_space<vmem>>) attributes {dimension_semantics = [#tpu.dimension_semantics<parallel>, #tpu.dimension_semantics<parallel>], iteration_bounds = array<i64: 2, 2>, scalar_prefetch = 0 : i64, scratch_operands = 0 : i64, tpu.core_type = #tpu.core_type<tc>, window_params = [{transform_indices = @transform_0, window_bounds = array<i64: 1, 8, 18, 32>}, {transform_indices = @transform_1, window_bounds = array<i64: 1, 2, 18, 32>}, {pipeline_mode = #tpu.pipeline_mode<synchronous>, transform_indices = @transform_2, window_bounds = array<i64: 3, 3, 32, 32>}, {pipeline_mode = #tpu.pipeline_mode<synchronous>, transform_indices = @transform_3, window_bounds = array<i64: 1, 32>}, {pipeline_mode = #tpu.pipeline_mode<synchronous>, transform_indices = @transform_4, window_bounds = array<i64: 1, 32>}, {transform_indices = @transform_5, window_bounds = array<i64: 1, 128, 32>}]} {
    %cst = arith.constant 0.000000e+00 : f32
    %0 = vector.broadcast %cst : f32 to vector<128x32xf32>
    %c0 = arith.constant 0 : index
    %c0_0 = arith.constant 0 : index
    %c0_1 = arith.constant 0 : index
    %c0_2 = arith.constant 0 : index
    %1 = vector.load %arg2[%c0, %c0_0, %c0_1, %c0_2] : memref<1x8x18x32xbf16, #tpu.memory_space<vmem>>, vector<1x8x18x32xbf16>
    %2 = vector.shape_cast %1 : vector<1x8x18x32xbf16> to vector<8x18x32xbf16>
    %c0_3 = arith.constant 0 : index
    %c0_4 = arith.constant 0 : index
    %c0_5 = arith.constant 0 : index
    %c0_6 = arith.constant 0 : index
    %3 = vector.load %arg3[%c0_3, %c0_4, %c0_5, %c0_6] : memref<1x2x18x32xbf16, #tpu.memory_space<vmem>>, vector<1x2x18x32xbf16>
    %4 = vector.shape_cast %3 : vector<1x2x18x32xbf16> to vector<2x18x32xbf16>
    %5 = tpu.concatenate %2, %4 in 0 : vector<8x18x32xbf16>, vector<2x18x32xbf16> -> vector<10x18x32xbf16>
    %c0_7 = arith.constant 0 : index
    %c0_8 = arith.constant 0 : index
    %c0_9 = arith.constant 0 : index
    %c0_10 = arith.constant 0 : index
    %6 = vector.load %arg4[%c0_7, %c0_8, %c0_9, %c0_10] : memref<3x3x32x32xbf16, #tpu.memory_space<vmem>>, vector<3x3x32x32xbf16>
    %7 = vector.extract_strided_slice %5 {offsets = [0, 0, 0], sizes = [8, 18, 32], strides = [1, 1, 1]} : vector<10x18x32xbf16> to vector<8x18x32xbf16>
    %8 = vector.extract_strided_slice %7 {offsets = [0, 0, 0], sizes = [8, 16, 32], strides = [1, 1, 1]} : vector<8x18x32xbf16> to vector<8x16x32xbf16>
    %9 = vector.shape_cast %8 : vector<8x16x32xbf16> to vector<128x32xbf16>
    %10 = vector.extract_strided_slice %6 {offsets = [0, 0, 0, 0], sizes = [1, 1, 32, 32], strides = [1, 1, 1, 1]} : vector<3x3x32x32xbf16> to vector<1x1x32x32xbf16>
    %11 = vector.shape_cast %10 : vector<1x1x32x32xbf16> to vector<32x32xbf16>
    %cst_11 = arith.constant dense<0.000000e+00> : vector<128x32xf32>
    %12 = tpu.matmul %9, %11, %cst_11 {dimension_numbers = #tpu.dot_dimension_numbers<[1], [0], [0], [1], [0, 0, 1, 1], [], []>} : vector<128x32xbf16>, vector<32x32xbf16>, vector<128x32xf32> -> vector<128x32xf32>
    %13 = arith.addf %0, %12 : vector<128x32xf32>
    %14 = vector.extract_strided_slice %7 {offsets = [0, 1, 0], sizes = [8, 16, 32], strides = [1, 1, 1]} : vector<8x18x32xbf16> to vector<8x16x32xbf16>
    %15 = vector.shape_cast %14 : vector<8x16x32xbf16> to vector<128x32xbf16>
    %16 = vector.extract_strided_slice %6 {offsets = [0, 1, 0, 0], sizes = [1, 1, 32, 32], strides = [1, 1, 1, 1]} : vector<3x3x32x32xbf16> to vector<1x1x32x32xbf16>
    %17 = vector.shape_cast %16 : vector<1x1x32x32xbf16> to vector<32x32xbf16>
    %cst_12 = arith.constant dense<0.000000e+00> : vector<128x32xf32>
    %18 = tpu.matmul %15, %17, %cst_12 {dimension_numbers = #tpu.dot_dimension_numbers<[1], [0], [0], [1], [0, 0, 1, 1], [], []>} : vector<128x32xbf16>, vector<32x32xbf16>, vector<128x32xf32> -> vector<128x32xf32>
    %19 = arith.addf %13, %18 : vector<128x32xf32>
    %20 = vector.extract_strided_slice %7 {offsets = [0, 2, 0], sizes = [8, 16, 32], strides = [1, 1, 1]} : vector<8x18x32xbf16> to vector<8x16x32xbf16>
    %21 = vector.shape_cast %20 : vector<8x16x32xbf16> to vector<128x32xbf16>
    %22 = vector.extract_strided_slice %6 {offsets = [0, 2, 0, 0], sizes = [1, 1, 32, 32], strides = [1, 1, 1, 1]} : vector<3x3x32x32xbf16> to vector<1x1x32x32xbf16>
    %23 = vector.shape_cast %22 : vector<1x1x32x32xbf16> to vector<32x32xbf16>
    %cst_13 = arith.constant dense<0.000000e+00> : vector<128x32xf32>
    %24 = tpu.matmul %21, %23, %cst_13 {dimension_numbers = #tpu.dot_dimension_numbers<[1], [0], [0], [1], [0, 0, 1, 1], [], []>} : vector<128x32xbf16>, vector<32x32xbf16>, vector<128x32xf32> -> vector<128x32xf32>
    %25 = arith.addf %19, %24 : vector<128x32xf32>
    %26 = vector.extract_strided_slice %5 {offsets = [1, 0, 0], sizes = [8, 18, 32], strides = [1, 1, 1]} : vector<10x18x32xbf16> to vector<8x18x32xbf16>
    %27 = vector.extract_strided_slice %26 {offsets = [0, 0, 0], sizes = [8, 16, 32], strides = [1, 1, 1]} : vector<8x18x32xbf16> to vector<8x16x32xbf16>
    %28 = vector.shape_cast %27 : vector<8x16x32xbf16> to vector<128x32xbf16>
    %29 = vector.extract_strided_slice %6 {offsets = [1, 0, 0, 0], sizes = [1, 1, 32, 32], strides = [1, 1, 1, 1]} : vector<3x3x32x32xbf16> to vector<1x1x32x32xbf16>
    %30 = vector.shape_cast %29 : vector<1x1x32x32xbf16> to vector<32x32xbf16>
    %cst_14 = arith.constant dense<0.000000e+00> : vector<128x32xf32>
    %31 = tpu.matmul %28, %30, %cst_14 {dimension_numbers = #tpu.dot_dimension_numbers<[1], [0], [0], [1], [0, 0, 1, 1], [], []>} : vector<128x32xbf16>, vector<32x32xbf16>, vector<128x32xf32> -> vector<128x32xf32>
    %32 = arith.addf %25, %31 : vector<128x32xf32>
    %33 = vector.extract_strided_slice %26 {offsets = [0, 1, 0], sizes = [8, 16, 32], strides = [1, 1, 1]} : vector<8x18x32xbf16> to vector<8x16x32xbf16>
    %34 = vector.shape_cast %33 : vector<8x16x32xbf16> to vector<128x32xbf16>
    %35 = vector.extract_strided_slice %6 {offsets = [1, 1, 0, 0], sizes = [1, 1, 32, 32], strides = [1, 1, 1, 1]} : vector<3x3x32x32xbf16> to vector<1x1x32x32xbf16>
    %36 = vector.shape_cast %35 : vector<1x1x32x32xbf16> to vector<32x32xbf16>
    %cst_15 = arith.constant dense<0.000000e+00> : vector<128x32xf32>
    %37 = tpu.matmul %34, %36, %cst_15 {dimension_numbers = #tpu.dot_dimension_numbers<[1], [0], [0], [1], [0, 0, 1, 1], [], []>} : vector<128x32xbf16>, vector<32x32xbf16>, vector<128x32xf32> -> vector<128x32xf32>
    %38 = arith.addf %32, %37 : vector<128x32xf32>
    %39 = vector.extract_strided_slice %26 {offsets = [0, 2, 0], sizes = [8, 16, 32], strides = [1, 1, 1]} : vector<8x18x32xbf16> to vector<8x16x32xbf16>
    %40 = vector.shape_cast %39 : vector<8x16x32xbf16> to vector<128x32xbf16>
    %41 = vector.extract_strided_slice %6 {offsets = [1, 2, 0, 0], sizes = [1, 1, 32, 32], strides = [1, 1, 1, 1]} : vector<3x3x32x32xbf16> to vector<1x1x32x32xbf16>
    %42 = vector.shape_cast %41 : vector<1x1x32x32xbf16> to vector<32x32xbf16>
    %cst_16 = arith.constant dense<0.000000e+00> : vector<128x32xf32>
    %43 = tpu.matmul %40, %42, %cst_16 {dimension_numbers = #tpu.dot_dimension_numbers<[1], [0], [0], [1], [0, 0, 1, 1], [], []>} : vector<128x32xbf16>, vector<32x32xbf16>, vector<128x32xf32> -> vector<128x32xf32>
    %44 = arith.addf %38, %43 : vector<128x32xf32>
    %45 = vector.extract_strided_slice %5 {offsets = [2, 0, 0], sizes = [8, 18, 32], strides = [1, 1, 1]} : vector<10x18x32xbf16> to vector<8x18x32xbf16>
    %46 = vector.extract_strided_slice %45 {offsets = [0, 0, 0], sizes = [8, 16, 32], strides = [1, 1, 1]} : vector<8x18x32xbf16> to vector<8x16x32xbf16>
    %47 = vector.shape_cast %46 : vector<8x16x32xbf16> to vector<128x32xbf16>
    %48 = vector.extract_strided_slice %6 {offsets = [2, 0, 0, 0], sizes = [1, 1, 32, 32], strides = [1, 1, 1, 1]} : vector<3x3x32x32xbf16> to vector<1x1x32x32xbf16>
    %49 = vector.shape_cast %48 : vector<1x1x32x32xbf16> to vector<32x32xbf16>
    %cst_17 = arith.constant dense<0.000000e+00> : vector<128x32xf32>
    %50 = tpu.matmul %47, %49, %cst_17 {dimension_numbers = #tpu.dot_dimension_numbers<[1], [0], [0], [1], [0, 0, 1, 1], [], []>} : vector<128x32xbf16>, vector<32x32xbf16>, vector<128x32xf32> -> vector<128x32xf32>
    %51 = arith.addf %44, %50 : vector<128x32xf32>
    %52 = vector.extract_strided_slice %45 {offsets = [0, 1, 0], sizes = [8, 16, 32], strides = [1, 1, 1]} : vector<8x18x32xbf16> to vector<8x16x32xbf16>
    %53 = vector.shape_cast %52 : vector<8x16x32xbf16> to vector<128x32xbf16>
    %54 = vector.extract_strided_slice %6 {offsets = [2, 1, 0, 0], sizes = [1, 1, 32, 32], strides = [1, 1, 1, 1]} : vector<3x3x32x32xbf16> to vector<1x1x32x32xbf16>
    %55 = vector.shape_cast %54 : vector<1x1x32x32xbf16> to vector<32x32xbf16>
    %cst_18 = arith.constant dense<0.000000e+00> : vector<128x32xf32>
    %56 = tpu.matmul %53, %55, %cst_18 {dimension_numbers = #tpu.dot_dimension_numbers<[1], [0], [0], [1], [0, 0, 1, 1], [], []>} : vector<128x32xbf16>, vector<32x32xbf16>, vector<128x32xf32> -> vector<128x32xf32>
    %57 = arith.addf %51, %56 : vector<128x32xf32>
    %58 = vector.extract_strided_slice %45 {offsets = [0, 2, 0], sizes = [8, 16, 32], strides = [1, 1, 1]} : vector<8x18x32xbf16> to vector<8x16x32xbf16>
    %59 = vector.shape_cast %58 : vector<8x16x32xbf16> to vector<128x32xbf16>
    %60 = vector.extract_strided_slice %6 {offsets = [2, 2, 0, 0], sizes = [1, 1, 32, 32], strides = [1, 1, 1, 1]} : vector<3x3x32x32xbf16> to vector<1x1x32x32xbf16>
    %61 = vector.shape_cast %60 : vector<1x1x32x32xbf16> to vector<32x32xbf16>
    %cst_19 = arith.constant dense<0.000000e+00> : vector<128x32xf32>
    %62 = tpu.matmul %59, %61, %cst_19 {dimension_numbers = #tpu.dot_dimension_numbers<[1], [0], [0], [1], [0, 0, 1, 1], [], []>} : vector<128x32xbf16>, vector<32x32xbf16>, vector<128x32xf32> -> vector<128x32xf32>
    %63 = arith.addf %57, %62 : vector<128x32xf32>
    %c0_20 = arith.constant 0 : index
    %c0_21 = arith.constant 0 : index
    %64 = vector.load %arg5[%c0_20, %c0_21] : memref<1x32xf32, #tpu.memory_space<vmem>>, vector<1x32xf32>
    %65 = vector.broadcast %64 : vector<1x32xf32> to vector<128x32xf32>
    %66 = arith.mulf %63, %65 : vector<128x32xf32>
    %c0_22 = arith.constant 0 : index
    %c0_23 = arith.constant 0 : index
    %67 = vector.load %arg6[%c0_22, %c0_23] : memref<1x32xf32, #tpu.memory_space<vmem>>, vector<1x32xf32>
    %68 = vector.broadcast %67 : vector<1x32xf32> to vector<128x32xf32>
    %69 = arith.addf %66, %68 : vector<128x32xf32>
    %cst_24 = arith.constant 0.000000e+00 : f32
    %70 = vector.broadcast %cst_24 : f32 to vector<128x32xf32>
    %71 = arith.cmpf oge, %69, %70 : vector<128x32xf32>
    %cst_25 = arith.constant 0.00999999977 : f32
    %72 = vector.broadcast %cst_25 : f32 to vector<128x32xf32>
    %73 = arith.mulf %72, %69 : vector<128x32xf32>
    %74 = arith.select %71, %69, %73 : vector<128x32xi1>, vector<128x32xf32>
    %c0_26 = arith.constant 0 : index
    %c0_27 = arith.constant 0 : index
    %c0_28 = arith.constant 0 : index
    %75 = vector.load %arg7[%c0_26, %c0_27, %c0_28] : memref<1x128x32xf32, #tpu.memory_space<vmem>>, vector<1x128x32xf32>
    %76 = vector.shape_cast %75 : vector<1x128x32xf32> to vector<128x32xf32>
    %77 = vector.shape_cast %74 : vector<128x32xf32> to vector<1x128x32xf32>
    tpu.vector_store %arg7[%c0_26, %c0_27, %c0_28], %77 {strides = array<i32>} : memref<1x128x32xf32, #tpu.memory_space<vmem>>, vector<1x128x32xf32>,
    return
  }
  func.func @transform_0(%arg0: i32, %arg1: i32) -> (i32, i32, i32, i32) {
    %c0_i32 = arith.constant 0 : i32
    %c0_i32_0 = arith.constant 0 : i32
    %c0_i32_1 = arith.constant 0 : i32
    return %arg0, %arg1, %c0_i32, %c0_i32_0 : i32, i32, i32, i32
  }
  func.func @transform_1(%arg0: i32, %arg1: i32) -> (i32, i32, i32, i32) {
    %c1_i32 = arith.constant 1 : i32
    %0 = arith.addi %arg1, %c1_i32 : i32
    %c4_i32 = arith.constant 4 : i32
    %1 = arith.muli %0, %c4_i32 : i32
    %c0_i32 = arith.constant 0 : i32
    %c0_i32_0 = arith.constant 0 : i32
    %c0_i32_1 = arith.constant 0 : i32
    return %arg0, %1, %c0_i32, %c0_i32_0 : i32, i32, i32, i32
  }
  func.func @transform_2(%arg0: i32, %arg1: i32) -> (i32, i32, i32, i32) {
    %c0_i32 = arith.constant 0 : i32
    %c0_i32_0 = arith.constant 0 : i32
    %c0_i32_1 = arith.constant 0 : i32
    %c0_i32_2 = arith.constant 0 : i32
    %c0_i32_3 = arith.constant 0 : i32
    return %c0_i32, %c0_i32_0, %c0_i32_1, %c0_i32_2 : i32, i32, i32, i32
  }
  func.func @transform_3(%arg0: i32, %arg1: i32) -> (i32, i32) {
    %c0_i32 = arith.constant 0 : i32
    %c0_i32_0 = arith.constant 0 : i32
    %c0_i32_1 = arith.constant 0 : i32
    return %c0_i32, %c0_i32_0 : i32, i32
  }
  func.func @transform_4(%arg0: i32, %arg1: i32) -> (i32, i32) {
    %c0_i32 = arith.constant 0 : i32
    %c0_i32_0 = arith.constant 0 : i32
    %c0_i32_1 = arith.constant 0 : i32
    return %c0_i32, %c0_i32_0 : i32, i32
  }
  func.func @transform_5(%arg0: i32, %arg1: i32) -> (i32, i32, i32) {
    %c0_i32 = arith.constant 0 : i32
    %c0_i32_0 = arith.constant 0 : i32
    return %arg0, %arg1, %c0_i32 : i32, i32, i32
  }
}

</mosaic_0001>

<llo_original>
// kernel: upsample_bn_forward.3
$region0: #{upsample_bn_forward.3}
  #allocation0 [shape = 'u32[]', space=smem, size = 0x4, offset = 0x4, fixed_abs, tag = 'smem constant byte address 0x4 - core index']
  #allocation1 [shape = 'u32[144,128]{1,0:T(1,128)}', space=vmem, size = 0x12000, scoped, tag = 'internal scratch']
  %s0 = inlined_call_operand.vmem [shape: bf16[2,18,18,32], index: 0, kind: input, shape index: {}, may-alias: {0,1}]
  %s1 = inlined_call_operand.vmem [shape: bf16[2,18,18,32], index: 1, kind: input, shape index: {}, may-alias: {0,1}]
  %s2 = inlined_call_operand.vmem [shape: bf16[3,3,32,32], index: 2, kind: input, shape index: {}]
  %s3 = inlined_call_operand.vmem [shape: f32[1,32], index: 3, kind: input, shape index: {}]
  %s4 = inlined_call_operand.vmem [shape: f32[1,32], index: 4, kind: input, shape index: {}]
  %s5 = inlined_call_operand.hbm [shape: f32[2,256,32], index: 5, kind: output, shape index: {}]
  %s6 = sld [smem:[#allocation0]]
  $region53: #{upsample_bn_forward.3} parent=0
    _
  %s8 = ssub.s32 1, %s6
  %s9 = scalar_select 0, %s8, %s6
  $region1: #{upsample_bn_forward.3} parent=0
    #allocation2 [shape = 'u8[131072]{0}', space=vmem, size = 0x20000, scoped, tag = 'output window, operand 0']
    #allocation3 [shape = 's32[2]{0}', space=sflag, size = 0x8, scoped, tag = 'scoped memory for upsample_bn_forward.3']
    %10 = vsyncpa [#allocation3], 0
    %s11 = scalar_lea.sflag [#allocation3], 1
    %12 = vsyncpa %s11, 0
    loop: start=0, step=1, limit=6
    $region2: #{upsample_bn_forward.3} parent=1 // loop_pre_header
      _
    $region3: #{upsample_bn_forward.3} parent=1 // loop_header
      %s14 = sphi 0, %s18
      %p15 = scmp.ge.s32.totalorder %s14, 6
      %s21 = sphi 0, %s33
      %s22 = sphi 0, %s29
      %s23 = sphi 0, %s21
      %s24 = sphi 0, %s22
      %s25 = sphi 0, %s23
      %s26 = sphi 0, %s24
      %s38 = sphi 0, %s40
      %s41 = sphi 0, %s38
      %s42 = sphi 0, %s41
      %s58 = sphi 0, %s42
      %s70 = sphi 0, %s72
      %s73 = sphi 0, %s70
      %s74 = sphi 0, %s73
      %s90 = sphi 0, %s74
      %s94 = sphi 0, %s94
      %s96 = sphi 0, %s94
      %s97 = sphi 0, %s96
      %s111 = sphi 0, %s97
      %s115 = sphi 0, %s115
      %s117 = sphi 0, %s115
      %s118 = sphi 0, %s117
      %s132 = sphi 0, %s118
      %s136 = sphi 0, %s136
      %s138 = sphi 0, %s136
      %s139 = sphi 0, %s138
      %s153 = sphi 0, %s139
      %s161 = sphi 0, %s163
      %s164 = sphi 0, %s161
      %s165 = sphi 0, %s164
      %s181 = sphi 0, %s165
    $region4: #{upsample_bn_forward.3} parent=1 // loop_header_branch
      %17 = sbr.rel (%p15) target = $region8
    $region5: #{upsample_bn_forward.3} parent=1 // loop_body
      %s19 = ssub.s32 %s14, 1
      %s20 = ssub.s32 %s14, 2
      %s27 = sadd.s32 1, %s22
      %p28 = scmp.ge.s32.totalorder %s27, 2
      %s29 = scalar_select %p28, 0, %s27
      %s30 = sadd.s32 1, %s21
      %s31 = scalar_select %p28, %s30, %s21
      %p32 = scmp.ge.s32.totalorder %s31, 2
      %s33 = scalar_select %p32, 0, %s31
      %s34 = ssub.s32 %s21, %s33
      %s35 = ssub.s32 %s22, %s29
      %s36 = sor.u32 %s34, %s35
      %p37 = scmp.eq.s32.totalorder %s36, 0
      %s39 = sadd.s32 %s38, 1
      %s40 = scalar_select %p37, %s38, %s39
      %p43 = pneg %p37
      %p44 = scmp.eq.s32.totalorder %s14, 3
      %p45 = por %p43, %p44
      %p46 = scmp.ne.s32.totalorder %s38, %s41
      %p47 = scmp.eq.s32.totalorder %s14, 0
      %p48 = por %p46, %p47
      %p49 = scmp.ne.s32.totalorder %s38, %s41
      %p50 = scmp.eq.s32.totalorder %s19, 3
      %p51 = por %p49, %p50
      %p52 = scmp.ne.s32.totalorder %s41, %s42
      %p53 = scmp.eq.s32.totalorder %s19, 0
      %p54 = por %p52, %p53
      %p55 = scmp.ne.s32.totalorder %s41, %s42
      %p56 = scmp.eq.s32.totalorder %s20, 3
      %p57 = por %p55, %p56
      %p59 = scmp.ne.s32.totalorder %s42, %s58
      %p60 = scmp.eq.s32.totalorder %s20, 0
      %p61 = por %p59, %p60
      %s62 = sadd.s32 %s22, 1
      %s63 = smul.u32 %s62, 4
      %s64 = sadd.s32 %s29, 1
      %s65 = smul.u32 %s64, 4
      %s66 = ssub.s32 %s21, %s33
      %s67 = ssub.s32 %s63, %s65
      %s68 = sor.u32 %s66, %s67
      %p69 = scmp.eq.s32.totalorder %s68, 0
      %s71 = sadd.s32 %s70, 1
      %s72 = scalar_select %p69, %s70, %s71
      %p75 = pneg %p69
      %p76 = scmp.eq.s32.totalorder %s14, 3
      %p77 = por %p75, %p76
      %p78 = scmp.ne.s32.totalorder %s70, %s73
      %p79 = scmp.eq.s32.totalorder %s14, 0
      %p80 = por %p78, %p79
      %p81 = scmp.ne.s32.totalorder %s70, %s73
      %p82 = scmp.eq.s32.totalorder %s19, 3
      %p83 = por %p81, %p82
      %p84 = scmp.ne.s32.totalorder %s73, %s74
      %p85 = scmp.eq.s32.totalorder %s19, 0
      %p86 = por %p84, %p85
      %p87 = scmp.ne.s32.totalorder %s73, %s74
      %p88 = scmp.eq.s32.totalorder %s20, 3
      %p89 = por %p87, %p88
      %p91 = scmp.ne.s32.totalorder %s74, %s90
      %p92 = scmp.eq.s32.totalorder %s20, 0
      %p93 = por %p91, %p92
      %s95 = sadd.s32 %s94, 1
      %p98 = scmp.eq.s32.totalorder %s14, 3
      %p99 = scmp.ne.s32.totalorder %s94, %s96
      %p100 = scmp.eq.s32.totalorder %s14, 0
      %p101 = por %p99, %p100
      %p102 = scmp.ne.s32.totalorder %s94, %s96
      %p103 = scmp.eq.s32.totalorder %s19, 3
      %p104 = por %p102, %p103
      %p105 = scmp.ne.s32.totalorder %s96, %s97
      %p106 = scmp.eq.s32.totalorder %s19, 0
      %p107 = por %p105, %p106
      %p108 = scmp.ne.s32.totalorder %s96, %s97
      %p109 = scmp.eq.s32.totalorder %s20, 3
      %p110 = por %p108, %p109
      %p112 = scmp.ne.s32.totalorder %s97, %s111
      %p113 = scmp.eq.s32.totalorder %s20, 0
      %p114 = por %p112, %p113
      %s116 = sadd.s32 %s115, 1
      %p119 = scmp.eq.s32.totalorder %s14, 3
      %p120 = scmp.ne.s32.totalorder %s115, %s117
      %p121 = scmp.eq.s32.totalorder %s14, 0
      %p122 = por %p120, %p121
      %p123 = scmp.ne.s32.totalorder %s115, %s117
      %p124 = scmp.eq.s32.totalorder %s19, 3
      %p125 = por %p123, %p124
      %p126 = scmp.ne.s32.totalorder %s117, %s118
      %p127 = scmp.eq.s32.totalorder %s19, 0
      %p128 = por %p126, %p127
      %p129 = scmp.ne.s32.totalorder %s117, %s118
      %p130 = scmp.eq.s32.totalorder %s20, 3
      %p131 = por %p129, %p130
      %p133 = scmp.ne.s32.totalorder %s118, %s132
      %p134 = scmp.eq.s32.totalorder %s20, 0
      %p135 = por %p133, %p134
      %s137 = sadd.s32 %s136, 1
      %p140 = scmp.eq.s32.totalorder %s14, 3
      %p141 = scmp.ne.s32.totalorder %s136, %s138
      %p142 = scmp.eq.s32.totalorder %s14, 0
      %p143 = por %p141, %p142
      %p144 = scmp.ne.s32.totalorder %s136, %s138
      %p145 = scmp.eq.s32.totalorder %s19, 3
      %p146 = por %p144, %p145
      %p147 = scmp.ne.s32.totalorder %s138, %s139
      %p148 = scmp.eq.s32.totalorder %s19, 0
      %p149 = por %p147, %p148
      %p150 = scmp.ne.s32.totalorder %s138, %s139
      %p151 = scmp.eq.s32.totalorder %s20, 3
      %p152 = por %p150, %p151
      %p154 = scmp.ne.s32.totalorder %s139, %s153
      %p155 = scmp.eq.s32.totalorder %s20, 0
      %p156 = por %p154, %p155
      %s157 = ssub.s32 %s21, %s33
      %s158 = ssub.s32 %s22, %s29
      %s159 = sor.u32 %s157, %s158
      %p160 = scmp.eq.s32.totalorder %s159, 0
      %s162 = sadd.s32 %s161, 1
      %s163 = scalar_select %p160, %s161, %s162
      %p166 = pneg %p160
      %p167 = scmp.eq.s32.totalorder %s14, 3
      %p168 = por %p166, %p167
      %p169 = scmp.ne.s32.totalorder %s161, %s164
      %p170 = scmp.eq.s32.totalorder %s14, 0
      %p171 = por %p169, %p170
      %p172 = scmp.ne.s32.totalorder %s161, %s164
      %p173 = scmp.eq.s32.totalorder %s19, 3
      %p174 = por %p172, %p173
      %p175 = scmp.ne.s32.totalorder %s164, %s165
      %p176 = scmp.eq.s32.totalorder %s19, 0
      %p177 = por %p175, %p176
      %p178 = scmp.ne.s32.totalorder %s164, %s165
      %p179 = scmp.eq.s32.totalorder %s20, 3
      %p180 = por %p178, %p179
      %p182 = scmp.ne.s32.totalorder %s165, %s181
      %p183 = scmp.eq.s32.totalorder %s20, 0
      %p184 = por %p182, %p183
      %p185 = scmp.le.s32.totalorder 1, %s14
      %p186 = scmp.lt.s32.totalorder %s14, 5
      %p187 = pnand %p185, %p186
      %p188 = pneg %p187
      // Predicated region
      $region9: #{upsample_bn_forward.3} parent=5 // pred_check
        _
      $region10: #{upsample_bn_forward.3} parent=5 // pred_check_branch
        %190 = sbr.rel (%p187) target = $region12
      $region11: #{upsample_bn_forward.3} parent=5 // pred_region
        %s191 = ssub.s32 %s14, 1
        // Predicated region
        $region13: #{upsample_bn_forward.3} parent=11 // pred_check
          %p192 = pneg %p107
        $region14: #{upsample_bn_forward.3} parent=11 // pred_check_branch
          %194 = sbr.rel (%p192) target = $region16
        $region15: #{upsample_bn_forward.3} parent=11 // pred_region
          _
        $region16: #{upsample_bn_forward.3} parent=11 // pred_fallthru
          _
        // Predicated region
        $region17: #{upsample_bn_forward.3} parent=11 // pred_check
          %p195 = pneg %p128
        $region18: #{upsample_bn_forward.3} parent=11 // pred_check_branch
          %197 = sbr.rel (%p195) target = $region20
        $region19: #{upsample_bn_forward.3} parent=11 // pred_region
          _
        $region20: #{upsample_bn_forward.3} parent=11 // pred_fallthru
          _
        // Predicated region
        $region21: #{upsample_bn_forward.3} parent=11 // pred_check
          %p198 = pneg %p149
        $region22: #{upsample_bn_forward.3} parent=11 // pred_check_branch
          %200 = sbr.rel (%p198) target = $region24
        $region23: #{upsample_bn_forward.3} parent=11 // pred_region
          _
        $region24: #{upsample_bn_forward.3} parent=11 // pred_fallthru
          _
      $region12: #{upsample_bn_forward.3} parent=5 // pred_fallthru
        _
      %p201 = scmp.lt.s32.totalorder %s14, 4
      // Predicated region
      $region25: #{upsample_bn_forward.3} parent=5 // pred_check
        %p202 = pneg %p201
      $region26: #{upsample_bn_forward.3} parent=5 // pred_check_branch
        %204 = sbr.rel (%p202) target = $region28
      $region27: #{upsample_bn_forward.3} parent=5 // pred_region
        // Predicated region
        $region29: #{upsample_bn_forward.3} parent=27 // pred_check
          %p205 = pneg %p48
        $region30: #{upsample_bn_forward.3} parent=27 // pred_check_branch
          %207 = sbr.rel (%p205) target = $region32
        $region31: #{upsample_bn_forward.3} parent=27 // pred_region
          %s208 = smul.u32 8, %s22
          %s209 = ssub.s32 18, %s208
          %p210 = scmp.lt.s32.totalorder %s209, 8
          %s211 = scalar_select %p210, %s209, 8
          %s212 = smul.u32 64, %s211
          %s213 = smul.u32 %s212, 3
          %p214 = scmp.lt.s32.totalorder %s21, 1
          %s215 = scalar_select %p214, %s21, 1
          %p216 = scmp.lt.s32.totalorder %s208, 17
          %s217 = scalar_select %p216, %s208, 17
          %s218 = smul.addr %s217, 3
          %s219 = smul.addr %s215, 54
          %s220 = sadd.s32 %s218, %s219
          %s221 = smul.addr %s220, 4
          %s222 = scalar_lea.vmem %s0, %s221
          %s223 = smul.u32 8, %s22
          %s224 = ssub.s32 18, %s223
          %p225 = scmp.lt.s32.totalorder %s224, 8
          %s226 = scalar_select %p225, %s224, 8
          %s227 = smul.u32 64, %s226
          %s228 = smul.u32 %s227, 3
        $region32: #{upsample_bn_forward.3} parent=27 // pred_fallthru
          _
        // Predicated region
        $region33: #{upsample_bn_forward.3} parent=27 // pred_check
          %p229 = pneg %p80
        $region34: #{upsample_bn_forward.3} parent=27 // pred_check_branch
          %231 = sbr.rel (%p229) target = $region36
        $region35: #{upsample_bn_forward.3} parent=27 // pred_region
          %s232 = sadd.s32 %s22, 1
          %s233 = smul.u32 %s232, 4
          %s234 = smul.u32 2, %s233
          %p235 = scmp.lt.s32.totalorder %s21, 1
          %s236 = scalar_select %p235, %s21, 1
          %p237 = scmp.lt.s32.totalorder %s234, 17
          %s238 = scalar_select %p237, %s234, 17
          %s239 = smul.addr %s238, 3
          %s240 = smul.addr %s236, 54
          %s241 = sadd.s32 %s239, %s240
          %s242 = smul.addr %s241, 4
          %s243 = scalar_lea.vmem %s1, %s242
          %s244 = sadd.s32 %s22, 1
          %s245 = smul.u32 %s244, 4
          %s246 = smul.u32 2, %s245
        $region36: #{upsample_bn_forward.3} parent=27 // pred_fallthru
          _
      $region28: #{upsample_bn_forward.3} parent=5 // pred_fallthru
        _
      %p247 = scmp.le.s32.totalorder 1, %s14
      %p248 = scmp.lt.s32.totalorder %s14, 5
      %p249 = pnand %p247, %p248
      %p250 = pneg %p249
      // Predicated region
      $region37: #{upsample_bn_forward.3} parent=5 // pred_check
        _
      $region38: #{upsample_bn_forward.3} parent=5 // pred_check_branch
        %252 = sbr.rel (%p249) target = $region40
      $region39: #{upsample_bn_forward.3} parent=5 // pred_region
        %s253 = ssub.s32 %s14, 1
        %s254 = smul.u32 8, %s24
        %s255 = ssub.s32 18, %s254
        %p256 = scmp.lt.s32.totalorder %s255, 8
        %s257 = scalar_select %p256, %s255, 8
        %s258 = smul.u32 64, %s257
        %s259 = smul.u32 %s258, 3
        %p260 = scmp.lt.s32.totalorder %s23, 1
        %s261 = scalar_select %p260, %s23, 1
        %p262 = scmp.lt.s32.totalorder %s254, 17
        %s263 = scalar_select %p262, %s254, 17
        %s264 = smul.addr %s263, 3
        %s265 = smul.addr %s261, 54
        %s266 = sadd.s32 %s264, %s265
        %s267 = smul.addr %s266, 4
        %s268 = scalar_lea.vmem %s0, %s267
        %p269 = pneg %p54
        %p270 = pneg %p51
        %s271 = sadd.s32 %s24, 1
        %s272 = smul.u32 %s271, 4
        %s273 = smul.u32 2, %s272
        %p274 = scmp.lt.s32.totalorder %s23, 1
        %s275 = scalar_select %p274, %s23, 1
        %p276 = scmp.lt.s32.totalorder %s273, 17
        %s277 = scalar_select %p276, %s273, 17
        %s278 = smul.addr %s277, 3
        %s279 = smul.addr %s275, 54
        %s280 = sadd.s32 %s278, %s279
        %s281 = smul.addr %s280, 4
        %s282 = scalar_lea.vmem %s1, %s281
        %p283 = pneg %p86
        %p284 = pneg %p83
        %p285 = pneg %p107
        %p286 = pneg %p104
        %p287 = pneg %p128
        %p288 = pneg %p125
        %p289 = pneg %p149
        %p290 = pneg %p146
        %p291 = pneg %p177
        %p292 = pneg %p174
        %s293 = sand.u32 %s164, 1
        %s294 = scalar_lea.sflag [#allocation3], %s293
        %s295 = sand.u32 %s164, 1
        %s296 = smul.addr %s295, 128
        %s297 = scalar_lea.vmem [#allocation2], %s296
        %s298 = smul.u32 8, %s24
        %s299 = ssub.s32 18, %s298
        %p300 = scmp.lt.s32.totalorder %s299, 8
        %s301 = scalar_select %p300, %s299, 8
        %s302 = smul.u32 64, %s301
        %s303 = smul.u32 %s302, 3
        %p304 = scmp.lt.s32.totalorder %s23, 1
        %s305 = scalar_select %p304, %s23, 1
        %p306 = scmp.lt.s32.totalorder %s298, 17
        %s307 = scalar_select %p306, %s298, 17
        %s308 = smul.addr %s307, 3
        %s309 = smul.addr %s305, 54
        %s310 = sadd.s32 %s308, %s309
        %s311 = smul.addr %s310, 4
        %s312 = scalar_lea.vmem %s0, %s311
        %s313 = smul.u32 8, %s24
        %s314 = ssub.s32 18, %s313
        %p315 = scmp.lt.s32.totalorder %s314, 8
        %s316 = scalar_select %p315, %s314, 8
        %s317 = smul.u32 64, %s316
        %s318 = smul.u32 %s317, 3
        %s319 = sadd.s32 %s24, 1
        %s320 = smul.u32 %s319, 4
        %s321 = smul.u32 2, %s320
        %p322 = scmp.lt.s32.totalorder %s23, 1
        %s323 = scalar_select %p322, %s23, 1
        %p324 = scmp.lt.s32.totalorder %s321, 17
        %s325 = scalar_select %p324, %s321, 17
        %s326 = smul.addr %s325, 3
        %s327 = smul.addr %s323, 54
        %s328 = sadd.s32 %s326, %s327
        %s329 = smul.addr %s328, 4
        %s330 = scalar_lea.vmem %s1, %s329
        %s331 = sadd.s32 %s24, 1
        %s332 = smul.u32 %s331, 4
        %s333 = smul.u32 2, %s332
        %s334 = smul.u32 16, %s24
        %v336 = vld [vmem:[%s312] sm:$0xf]
        %v337 = vld [vmem:[%s312 + $0x4] sm:$0xf]
        %v338 = vld [vmem:[%s312 + $0x8] sm:$0x1]
        %v339 = vld [vmem:[%s312 + $0xc] sm:$0xf]
        %v340 = vld [vmem:[%s312 + $0x10] sm:$0xf]
        %v341 = vld [vmem:[%s312 + $0x14] sm:$0x1]
        %v342 = vld [vmem:[%s312 + $0x18] sm:$0xf]
        %v343 = vld [vmem:[%s312 + $0x1c] sm:$0xf]
        %v344 = vld [vmem:[%s312 + $0x20] sm:$0x1]
        %v345 = vld [vmem:[%s312 + $0x24] sm:$0xf]
        %v346 = vld [vmem:[%s312 + $0x28] sm:$0xf]
        %v347 = vld [vmem:[%s312 + $0x2c] sm:$0x1]
        %v348 = vld [vmem:[%s312 + $0x30] sm:$0xf]
        %v349 = vld [vmem:[%s312 + $0x34] sm:$0xf]
        %v350 = vld [vmem:[%s312 + $0x38] sm:$0x1]
        %v351 = vld [vmem:[%s312 + $0x3c] sm:$0xf]
        %v352 = vld [vmem:[%s312 + $0x40] sm:$0xf]
        %v353 = vld [vmem:[%s312 + $0x44] sm:$0x1]
        %v354 = vld [vmem:[%s312 + $0x48] sm:$0xf]
        %v355 = vld [vmem:[%s312 + $0x4c] sm:$0xf]
        %v356 = vld [vmem:[%s312 + $0x50] sm:$0x1]
        %v357 = vld [vmem:[%s312 + $0x54] sm:$0xf]
        %v358 = vld [vmem:[%s312 + $0x58] sm:$0xf]
        %v359 = vld [vmem:[%s312 + $0x5c] sm:$0x1]
        %v360 = vld [vmem:[%s330] sm:$0xf]
        %v361 = vld [vmem:[%s330 + $0x4] sm:$0xf]
        %v362 = vld [vmem:[%s330 + $0x8] sm:$0x1]
        %v363 = vld [vmem:[%s330 + $0xc] sm:$0xf]
        %v364 = vld [vmem:[%s330 + $0x10] sm:$0xf]
        %v365 = vld [vmem:[%s330 + $0x14] sm:$0x1]
        %v366 = vld [vmem:[%s2] sm:$0xf]
        %v367 = vld [vmem:[%s2 + $0x4] sm:$0xf]
        %v368 = vld [vmem:[%s2 + $0x8] sm:$0xf]
        %v369 = vld [vmem:[%s2 + $0xc] sm:$0xf]
        %v370 = vld [vmem:[%s2 + $0x10] sm:$0xf]
        %v371 = vld [vmem:[%s2 + $0x14] sm:$0xf]
        %v372 = vld [vmem:[%s2 + $0x18] sm:$0xf]
        %v373 = vld [vmem:[%s2 + $0x1c] sm:$0xf]
        %v374 = vld [vmem:[%s2 + $0x20] sm:$0xf]
        %v375 = vld [vmem:[%s2 + $0x24] sm:$0xf]
        %v376 = vld [vmem:[%s2 + $0x28] sm:$0xf]
        %v377 = vld [vmem:[%s2 + $0x2c] sm:$0xf]
        %v378 = vld [vmem:[%s2 + $0x30] sm:$0xf]
        %v379 = vld [vmem:[%s2 + $0x34] sm:$0xf]
        %v380 = vld [vmem:[%s2 + $0x38] sm:$0xf]
        %v381 = vld [vmem:[%s2 + $0x3c] sm:$0xf]
        %v382 = vld [vmem:[%s2 + $0x40] sm:$0xf]
        %v383 = vld [vmem:[%s2 + $0x44] sm:$0xf]
        %v384 = vld [vmem:[%s2 + $0x48] sm:$0xf]
        %v385 = vld [vmem:[%s2 + $0x4c] sm:$0xf]
        %v386 = vld [vmem:[%s2 + $0x50] sm:$0xf]
        %v387 = vld [vmem:[%s2 + $0x54] sm:$0xf]
        %v388 = vld [vmem:[%s2 + $0x58] sm:$0xf]
        %v389 = vld [vmem:[%s2 + $0x5c] sm:$0xf]
        %v390 = vld [vmem:[%s2 + $0x60] sm:$0xf]
        %v391 = vld [vmem:[%s2 + $0x64] sm:$0xf]
        %v392 = vld [vmem:[%s2 + $0x68] sm:$0xf]
        %v393 = vld [vmem:[%s2 + $0x6c] sm:$0xf]
        %v394 = vld [vmem:[%s2 + $0x70] sm:$0xf]
        %v395 = vld [vmem:[%s2 + $0x74] sm:$0xf]
        %v396 = vld [vmem:[%s2 + $0x78] sm:$0xf]
        %v397 = vld [vmem:[%s2 + $0x7c] sm:$0xf]
        %v398 = vld [vmem:[%s2 + $0x80] sm:$0xf]
        %v399 = vld [vmem:[%s2 + $0x84] sm:$0xf]
        %v400 = vld [vmem:[%s2 + $0x88] sm:$0xf]
        %v401 = vld [vmem:[%s2 + $0x8c] sm:$0xf]
        %vm402 = vsmask.f32 3328
        %vm403 = vsmask.f32 7440
        %vm404 = vmor %vm402, %vm403
        %v406 = vshrl.u32 %v336, 16
        %v408 = vrot.slane %v406, 4
        %v409 = vshll.u32 %v336, 16
        %v411 = vrot.slane %v409, 5
        %v412 = vor.u32 %v408, %v411
        %v413 = vrot.slane %v412, 4
        %v415 = vshll.u32 %v337, 16
        %v417 = vrot.slane %v415, 5
        %v418 = vsel %vm404, %v413, %v417
        %v419 = vshrl.u32 %v337, 16
        %v421 = vrot.slane %v419, 4
        %v422 = vor.u32 %v421, %v417
        %v423 = vrot.slane %v422, 4
        %v425 = vshll.u32 %v338, 16
        %v427 = vrot.slane %v425, 5
        %v428 = vsel %vm404, %v423, %v427
        %v430 = vshrl.u32 %v339, 16
        %v432 = vrot.slane %v430, 4
        %v433 = vshll.u32 %v339, 16
        %v435 = vrot.slane %v433, 5
        %v436 = vor.u32 %v432, %v435
        %v437 = vrot.slane %v436, 4
        %v439 = vshll.u32 %v340, 16
        %v441 = vrot.slane %v439, 5
        %v442 = vsel %vm404, %v437, %v441
        %v443 = vshrl.u32 %v340, 16
        %v445 = vrot.slane %v443, 4
        %v446 = vor.u32 %v445, %v441
        %v447 = vrot.slane %v446, 4
        %v449 = vshll.u32 %v341, 16
        %v451 = vrot.slane %v449, 5
        %v452 = vsel %vm404, %v447, %v451
        %v454 = vshrl.u32 %v342, 16
        %v456 = vrot.slane %v454, 4
        %v457 = vshll.u32 %v342, 16
        %v459 = vrot.slane %v457, 5
        %v460 = vor.u32 %v456, %v459
        %v461 = vrot.slane %v460, 4
        %v463 = vshll.u32 %v343, 16
        %v465 = vrot.slane %v463, 5
        %v466 = vsel %vm404, %v461, %v465
        %v467 = vshrl.u32 %v343, 16
        %v469 = vrot.slane %v467, 4
        %v470 = vor.u32 %v469, %v465
        %v471 = vrot.slane %v470, 4
        %v473 = vshll.u32 %v344, 16
        %v475 = vrot.slane %v473, 5
        %v476 = vsel %vm404, %v471, %v475
        %v478 = vshrl.u32 %v345, 16
        %v480 = vrot.slane %v478, 4
        %v481 = vshll.u32 %v345, 16
        %v483 = vrot.slane %v481, 5
        %v484 = vor.u32 %v480, %v483
        %v485 = vrot.slane %v484, 4
        %v487 = vshll.u32 %v346, 16
        %v489 = vrot.slane %v487, 5
        %v490 = vsel %vm404, %v485, %v489
        %v491 = vshrl.u32 %v346, 16
        %v493 = vrot.slane %v491, 4
        %v494 = vor.u32 %v493, %v489
        %v495 = vrot.slane %v494, 4
        %v497 = vshll.u32 %v347, 16
        %v499 = vrot.slane %v497, 5
        %v500 = vsel %vm404, %v495, %v499
        %v502 = vshrl.u32 %v348, 16
        %v504 = vrot.slane %v502, 4
        %v505 = vshll.u32 %v348, 16
        %v507 = vrot.slane %v505, 5
        %v508 = vor.u32 %v504, %v507
        %v509 = vrot.slane %v508, 4
        %v511 = vshll.u32 %v349, 16
        %v513 = vrot.slane %v511, 5
        %v514 = vsel %vm404, %v509, %v513
        %v515 = vshrl.u32 %v349, 16
        %v517 = vrot.slane %v515, 4
        %v518 = vor.u32 %v517, %v513
        %v519 = vrot.slane %v518, 4
        %v521 = vshll.u32 %v350, 16
        %v523 = vrot.slane %v521, 5
        %v524 = vsel %vm404, %v519, %v523
        %v526 = vshrl.u32 %v351, 16
        %v528 = vrot.slane %v526, 4
        %v529 = vshll.u32 %v351, 16
        %v531 = vrot.slane %v529, 5
        %v532 = vor.u32 %v528, %v531
        %v533 = vrot.slane %v532, 4
        %v535 = vshll.u32 %v352, 16
        %v537 = vrot.slane %v535, 5
        %v538 = vsel %vm404, %v533, %v537
        %v539 = vshrl.u32 %v352, 16
        %v541 = vrot.slane %v539, 4
        %v542 = vor.u32 %v541, %v537
        %v543 = vrot.slane %v542, 4
        %v545 = vshll.u32 %v353, 16
        %v547 = vrot.slane %v545, 5
        %v548 = vsel %vm404, %v543, %v547
        %v550 = vshrl.u32 %v354, 16
        %v552 = vrot.slane %v550, 4
        %v553 = vshll.u32 %v354, 16
        %v555 = vrot.slane %v553, 5
        %v556 = vor.u32 %v552, %v555
        %v557 = vrot.slane %v556, 4
        %v559 = vshll.u32 %v355, 16
        %v561 = vrot.slane %v559, 5
        %v562 = vsel %vm404, %v557, %v561
        %v563 = vshrl.u32 %v355, 16
        %v565 = vrot.slane %v563, 4
        %v566 = vor.u32 %v565, %v561
        %v567 = vrot.slane %v566, 4
        %v569 = vshll.u32 %v356, 16
        %v571 = vrot.slane %v569, 5
        %v572 = vsel %vm404, %v567, %v571
        %v574 = vshrl.u32 %v357, 16
        %v576 = vrot.slane %v574, 4
        %v577 = vshll.u32 %v357, 16
        %v579 = vrot.slane %v577, 5
        %v580 = vor.u32 %v576, %v579
        %v581 = vrot.slane %v580, 4
        %v583 = vshll.u32 %v358, 16
        %v585 = vrot.slane %v583, 5
        %v586 = vsel %vm404, %v581, %v585
        %v587 = vshrl.u32 %v358, 16
        %v589 = vrot.slane %v587, 4
        %v590 = vor.u32 %v589, %v585
        %v591 = vrot.slane %v590, 4
        %v593 = vshll.u32 %v359, 16
        %v595 = vrot.slane %v593, 5
        %v596 = vsel %vm404, %v591, %v595
        %v597 = vunpack.c.l.b16 %v418
        %v598 = vunpack.c.l.b16 %v428
        %v599 = vunpack.c.l.b16 %v442
        %v600 = vunpack.c.l.b16 %v452
        %v601 = vunpack.c.l.b16 %v466
        %v602 = vunpack.c.l.b16 %v476
        %v603 = vunpack.c.l.b16 %v490
        %v604 = vunpack.c.l.b16 %v500
        %v605 = vunpack.c.l.b16 %v514
        %v606 = vunpack.c.l.b16 %v524
        %v607 = vunpack.c.l.b16 %v538
        %v608 = vunpack.c.l.b16 %v548
        %v609 = vunpack.c.l.b16 %v562
        %v610 = vunpack.c.l.b16 %v572
        %v611 = vunpack.c.l.b16 %v586
        %v612 = vunpack.c.l.b16 %v596
        %v613 = vpack.c.b16 %v598, %v597
        %v614 = vpack.c.b16 %v600, %v599
        %v615 = vpack.c.b16 %v602, %v601
        %v616 = vpack.c.b16 %v604, %v603
        %v617 = vpack.c.b16 %v606, %v605
        %v618 = vpack.c.b16 %v608, %v607
        %v619 = vpack.c.b16 %v610, %v609
        %v620 = vpack.c.b16 %v612, %v611
        %v625 = vunpack.c.l.b16 %v370
        %v626 = vunpack.c.l.b16 %v371
        %v627 = vunpack.c.l.b16 %v372
        %v628 = vunpack.c.l.b16 %v373
        %v629 = vpack.c.b16 %v626, %v625
        %v630 = vpack.c.b16 %v628, %v627
        %vm633 = vcmask 261120
        %v635 = vsel %vm633, %v613, 0
        %v638 = vsel %vm633, %v614, 0
        %v641 = vsel %vm633, %v615, 0
        %v644 = vsel %vm633, %v616, 0
        %v647 = vsel %vm633, %v617, 0
        %v650 = vsel %vm633, %v618, 0
        %v653 = vsel %vm633, %v619, 0
        %v656 = vsel %vm633, %v620, 0
        %658 = vmatprep.subr.bf16.mxu0 0
        %659 = vmatpush1.bf16.msra.mxu0 %v629
        %660 = vmatprep.subr.bf16.mxu0 0
        %661 = vmatpush1.bf16.msra.mxu0 %v630
        %662 = vmatprep.subr.bf16.mxu0 0
        %663 = vmatpush1.bf16.msra.mxu0 0
        %664 = vmatprep.subr.bf16.mxu0 0
        %665 = vmatpush1.bf16.msra.mxu0 0
        %666 = vmatprep.subr.bf16.mxu0 0
        %667 = vmatpush1.bf16.msra.mxu0 0
        %668 = vmatprep.subr.bf16.mxu0 0
        %669 = vmatpush1.bf16.msra.mxu0 0
        %670 = vmatprep.subr.bf16.mxu0 0
        %671 = vmatpush1.bf16.msra.mxu0 0
        %672 = vmatprep.subr.bf16.mxu0 0
        %673 = vmatpush1.bf16.msra.mxu0 0
        %674 = vmatprep.subr.bf16.mxu0 0
        %675 = vmatpush1.bf16.msra.mxu0 0
        %676 = vmatprep.subr.bf16.mxu0 0
        %677 = vmatpush1.bf16.msra.mxu0 0
        %678 = vmatprep.subr.bf16.mxu0 0
        %679 = vmatpush1.bf16.msra.mxu0 0
        %680 = vmatprep.subr.bf16.mxu0 0
        %681 = vmatpush1.bf16.msra.mxu0 0
        %682 = vmatprep.subr.bf16.mxu0 0
        %683 = vmatpush1.bf16.msra.mxu0 0
        %684 = vmatprep.subr.bf16.mxu0 0
        %685 = vmatpush1.bf16.msra.mxu0 0
        %686 = vmatprep.subr.bf16.mxu0 0
        %687 = vmatpush1.bf16.msra.mxu0 0
        %688 = vmatprep.subr.bf16.mxu0 0
        %689 = vmatpush1.bf16.msra.mxu0 0
        %690 = vmatprep.mubr.bf16.mxu0 0
        %691 = vmatmul.mubr.bf16.gmra.mrb[0].mxu0 %v635
        %v692 = vpop.f32.mrb[0].mxu0
        %v693 = vadd.f32 0.0, %v692
        %v694 = vpop.f32.mrb[0].mxu0
        %v695 = vpop.f32.mrb[0].mxu0
        %v696 = vadd.f32 0.0, %v695
        %v697 = vpop.f32.mrb[0].mxu0
        %698 = vmatprep.mubr.bf16.mxu0 0
        %699 = vmatmul.mubr.bf16.gmra.mrb[0].mxu0 %v638
        %v700 = vpop.f32.mrb[0].mxu0
        %v701 = vadd.f32 0.0, %v700
        %v702 = vpop.f32.mrb[0].mxu0
        %v703 = vpop.f32.mrb[0].mxu0
        %v704 = vadd.f32 0.0, %v703
        %v705 = vpop.f32.mrb[0].mxu0
        %706 = vmatprep.mubr.bf16.mxu0 0
        %707 = vmatmul.mubr.bf16.gmra.mrb[0].mxu0 %v641
        %v708 = vpop.f32.mrb[0].mxu0
        %v709 = vadd.f32 0.0, %v708
        %v710 = vpop.f32.mrb[0].mxu0
        %v711 = vpop.f32.mrb[0].mxu0
        %v712 = vadd.f32 0.0, %v711
        %v713 = vpop.f32.mrb[0].mxu0
        %714 = vmatprep.mubr.bf16.mxu0 0
        %715 = vmatmul.mubr.bf16.gmra.mrb[0].mxu0 %v644
        %v716 = vpop.f32.mrb[0].mxu0
        %v717 = vadd.f32 0.0, %v716
        %v718 = vpop.f32.mrb[0].mxu0
        %v719 = vpop.f32.mrb[0].mxu0
        %v720 = vadd.f32 0.0, %v719
        %v721 = vpop.f32.mrb[0].mxu0
        %722 = vmatprep.mubr.bf16.mxu0 0
        %723 = vmatmul.mubr.bf16.gmra.mrb[0].mxu0 %v647
        %v724 = vpop.f32.mrb[0].mxu0
        %v725 = vadd.f32 0.0, %v724
        %v726 = vpop.f32.mrb[0].mxu0
        %v727 = vpop.f32.mrb[0].mxu0
        %v728 = vadd.f32 0.0, %v727
        %v729 = vpop.f32.mrb[0].mxu0
        %730 = vmatprep.mubr.bf16.mxu0 0
        %731 = vmatmul.mubr.bf16.gmra.mrb[0].mxu0 %v650
        %v732 = vpop.f32.mrb[0].mxu0
        %v733 = vadd.f32 0.0, %v732
        %v734 = vpop.f32.mrb[0].mxu0
        %v735 = vpop.f32.mrb[0].mxu0
        %v736 = vadd.f32 0.0, %v735
        %v737 = vpop.f32.mrb[0].mxu0
        %738 = vmatprep.mubr.bf16.mxu0 0
        %739 = vmatmul.mubr.bf16.gmra.mrb[0].mxu0 %v653
        %v740 = vpop.f32.mrb[0].mxu0
        %v741 = vadd.f32 0.0, %v740
        %v742 = vpop.f32.mrb[0].mxu0
        %v743 = vpop.f32.mrb[0].mxu0
        %v744 = vadd.f32 0.0, %v743
        %v745 = vpop.f32.mrb[0].mxu0
        %746 = vmatprep.mubr.bf16.mxu0 0
        %747 = vmatmul.mubr.bf16.gmra.mrb[0].mxu0 %v656
        %v748 = vpop.f32.mrb[0].mxu0
        %v749 = vadd.f32 0.0, %v748
        %v750 = vpop.f32.mrb[0].mxu0
        %v751 = vpop.f32.mrb[0].mxu0
        %v752 = vadd.f32 0.0, %v751
        %v753 = vpop.f32.mrb[0].mxu0
        %754 = vdwg.mxu0
        %v771 = vunpack.c.l.b16 %v336
        %v772 = vunpack.c.l.b16 %v337
        %v773 = vunpack.c.l.b16 %v339
        %v774 = vunpack.c.l.b16 %v340
        %v775 = vunpack.c.l.b16 %v342
        %v776 = vunpack.c.l.b16 %v343
        %v777 = vunpack.c.l.b16 %v345
        %v778 = vunpack.c.l.b16 %v346
        %v779 = vunpack.c.l.b16 %v348
        %v780 = vunpack.c.l.b16 %v349
        %v781 = vunpack.c.l.b16 %v351
        %v782 = vunpack.c.l.b16 %v352
        %v783 = vunpack.c.l.b16 %v354
        %v784 = vunpack.c.l.b16 %v355
        %v785 = vunpack.c.l.b16 %v357
        %v786 = vunpack.c.l.b16 %v358
        %v787 = vpack.c.b16 %v772, %v771
        %v788 = vpack.c.b16 %v774, %v773
        %v789 = vpack.c.b16 %v776, %v775
        %v790 = vpack.c.b16 %v778, %v777
        %v791 = vpack.c.b16 %v780, %v779
        %v792 = vpack.c.b16 %v782, %v781
        %v793 = vpack.c.b16 %v784, %v783
        %v794 = vpack.c.b16 %v786, %v785
        %v799 = vunpack.c.l.b16 %v366
        %v800 = vunpack.c.l.b16 %v367
        %v801 = vunpack.c.l.b16 %v368
        %v802 = vunpack.c.l.b16 %v369
        %v803 = vpack.c.b16 %v800, %v799
        %v804 = vpack.c.b16 %v802, %v801
        %v808 = vsel %vm633, %v787, 0
        %v811 = vsel %vm633, %v788, 0
        %v814 = vsel %vm633, %v789, 0
        %v817 = vsel %vm633, %v790, 0
        %v820 = vsel %vm633, %v791, 0
        %v823 = vsel %vm633, %v792, 0
        %v826 = vsel %vm633, %v793, 0
        %v829 = vsel %vm633, %v794, 0
        %831 = vmatprep.subr.bf16.mxu0 0
        %832 = vmatpush1.bf16.msra.mxu0 %v803
        %833 = vmatprep.subr.bf16.mxu0 0
        %834 = vmatpush1.bf16.msra.mxu0 %v804
        %835 = vmatprep.subr.bf16.mxu0 0
        %836 = vmatpush1.bf16.msra.mxu0 0
        %837 = vmatprep.subr.bf16.mxu0 0
        %838 = vmatpush1.bf16.msra.mxu0 0
        %839 = vmatprep.subr.bf16.mxu0 0
        %840 = vmatpush1.bf16.msra.mxu0 0
        %841 = vmatprep.subr.bf16.mxu0 0
        %842 = vmatpush1.bf16.msra.mxu0 0
        %843 = vmatprep.subr.bf16.mxu0 0
        %844 = vmatpush1.bf16.msra.mxu0 0
        %845 = vmatprep.subr.bf16.mxu0 0
        %846 = vmatpush1.bf16.msra.mxu0 0
        %847 = vmatprep.subr.bf16.mxu0 0
        %848 = vmatpush1.bf16.msra.mxu0 0
        %849 = vmatprep.subr.bf16.mxu0 0
        %850 = vmatpush1.bf16.msra.mxu0 0
        %851 = vmatprep.subr.bf16.mxu0 0
        %852 = vmatpush1.bf16.msra.mxu0 0
        %853 = vmatprep.subr.bf16.mxu0 0
        %854 = vmatpush1.bf16.msra.mxu0 0
        %855 = vmatprep.subr.bf16.mxu0 0
        %856 = vmatpush1.bf16.msra.mxu0 0
        %857 = vmatprep.subr.bf16.mxu0 0
        %858 = vmatpush1.bf16.msra.mxu0 0
        %859 = vmatprep.subr.bf16.mxu0 0
        %860 = vmatpush1.bf16.msra.mxu0 0
        %861 = vmatprep.subr.bf16.mxu0 0
        %862 = vmatpush1.bf16.msra.mxu0 0
        %863 = vmatprep.mubr.bf16.mxu0 0
        %864 = vmatmul.mubr.bf16.gmra.mrb[0].mxu0 %v808
        %v865 = vpop.f32.mrb[0].mxu0
        %v866 = vadd.f32 %v693, %v865
        %v867 = vpop.f32.mrb[0].mxu0
        %v868 = vpop.f32.mrb[0].mxu0
        %v869 = vadd.f32 %v696, %v868
        %v870 = vpop.f32.mrb[0].mxu0
        %871 = vmatprep.mubr.bf16.mxu0 0
        %872 = vmatmul.mubr.bf16.gmra.mrb[0].mxu0 %v811
        %v873 = vpop.f32.mrb[0].mxu0
        %v874 = vadd.f32 %v701, %v873
        %v875 = vpop.f32.mrb[0].mxu0
        %v876 = vpop.f32.mrb[0].mxu0
        %v877 = vadd.f32 %v704, %v876
        %v878 = vpop.f32.mrb[0].mxu0
        %879 = vmatprep.mubr.bf16.mxu0 0
        %880 = vmatmul.mubr.bf16.gmra.mrb[0].mxu0 %v814
        %v881 = vpop.f32.mrb[0].mxu0
        %v882 = vadd.f32 %v709, %v881
        %v883 = vpop.f32.mrb[0].mxu0
        %v884 = vpop.f32.mrb[0].mxu0
        %v885 = vadd.f32 %v712, %v884
        %v886 = vpop.f32.mrb[0].mxu0
        %887 = vmatprep.mubr.bf16.mxu0 0
        %888 = vmatmul.mubr.bf16.gmra.mrb[0].mxu0 %v817
        %v889 = vpop.f32.mrb[0].mxu0
        %v890 = vadd.f32 %v717, %v889
        %v891 = vpop.f32.mrb[0].mxu0
        %v892 = vpop.f32.mrb[0].mxu0
        %v893 = vadd.f32 %v720, %v892
        %v894 = vpop.f32.mrb[0].mxu0
        %895 = vmatprep.mubr.bf16.mxu0 0
        %896 = vmatmul.mubr.bf16.gmra.mrb[0].mxu0 %v820
        %v897 = vpop.f32.mrb[0].mxu0
        %v898 = vadd.f32 %v725, %v897
        %v899 = vpop.f32.mrb[0].mxu0
        %v900 = vpop.f32.mrb[0].mxu0
        %v901 = vadd.f32 %v728, %v900
        %v902 = vpop.f32.mrb[0].mxu0
        %903 = vmatprep.mubr.bf16.mxu0 0
        %904 = vmatmul.mubr.bf16.gmra.mrb[0].mxu0 %v823
        %v905 = vpop.f32.mrb[0].mxu0
        %v906 = vadd.f32 %v733, %v905
        %v907 = vpop.f32.mrb[0].mxu0
        %v908 = vpop.f32.mrb[0].mxu0
        %v909 = vadd.f32 %v736, %v908
        %v910 = vpop.f32.mrb[0].mxu0
        %911 = vmatprep.mubr.bf16.mxu0 0
        %912 = vmatmul.mubr.bf16.gmra.mrb[0].mxu0 %v826
        %v913 = vpop.f32.mrb[0].mxu0
        %v914 = vadd.f32 %v741, %v913
        %v915 = vpop.f32.mrb[0].mxu0
        %v916 = vpop.f32.mrb[0].mxu0
        %v917 = vadd.f32 %v744, %v916
        %v918 = vpop.f32.mrb[0].mxu0
        %919 = vmatprep.mubr.bf16.mxu0 0
        %920 = vmatmul.mubr.bf16.gmra.mrb[0].mxu0 %v829
        %v921 = vpop.f32.mrb[0].mxu0
        %v922 = vadd.f32 %v749, %v921
        %v923 = vpop.f32.mrb[0].mxu0
        %v924 = vpop.f32.mrb[0].mxu0
        %v925 = vadd.f32 %v752, %v924
        %v926 = vpop.f32.mrb[0].mxu0
        %927 = vdwg.mxu0
        %vm936 = vcmask 1042432
        %vm937 = vcmask 1046532
        %vm938 = vmor %vm936, %vm937
        %v939 = vrot.slane %v336, 5
        %v940 = vrot.slane %v939, 4
        %v941 = vrot.slane %v337, 5
        %v942 = vsel %vm938, %v940, %v941
        %v943 = vrot.slane %v941, 4
        %v944 = vrot.slane %v338, 5
        %v945 = vsel %vm938, %v943, %v944
        %v946 = vrot.slane %v339, 5
        %v947 = vrot.slane %v946, 4
        %v948 = vrot.slane %v340, 5
        %v949 = vsel %vm938, %v947, %v948
        %v950 = vrot.slane %v948, 4
        %v951 = vrot.slane %v341, 5
        %v952 = vsel %vm938, %v950, %v951
        %v953 = vrot.slane %v342, 5
        %v954 = vrot.slane %v953, 4
        %v955 = vrot.slane %v343, 5
        %v956 = vsel %vm938, %v954, %v955
        %v957 = vrot.slane %v955, 4
        %v958 = vrot.slane %v344, 5
        %v959 = vsel %vm938, %v957, %v958
        %v960 = vrot.slane %v345, 5
        %v961 = vrot.slane %v960, 4
        %v962 = vrot.slane %v346, 5
        %v963 = vsel %vm938, %v961, %v962
        %v964 = vrot.slane %v962, 4
        %v965 = vrot.slane %v347, 5
        %v966 = vsel %vm938, %v964, %v965
        %v967 = vrot.slane %v348, 5
        %v968 = vrot.slane %v967, 4
        %v969 = vrot.slane %v349, 5
        %v970 = vsel %vm938, %v968, %v969
        %v971 = vrot.slane %v969, 4
        %v972 = vrot.slane %v350, 5
        %v973 = vsel %vm938, %v971, %v972
        %v974 = vrot.slane %v351, 5
        %v975 = vrot.slane %v974, 4
        %v976 = vrot.slane %v352, 5
        %v977 = vsel %vm938, %v975, %v976
        %v978 = vrot.slane %v976, 4
        %v979 = vrot.slane %v353, 5
        %v980 = vsel %vm938, %v978, %v979
        %v981 = vrot.slane %v354, 5
        %v982 = vrot.slane %v981, 4
        %v983 = vrot.slane %v355, 5
        %v984 = vsel %vm938, %v982, %v983
        %v985 = vrot.slane %v983, 4
        %v986 = vrot.slane %v356, 5
        %v987 = vsel %vm938, %v985, %v986
        %v988 = vrot.slane %v357, 5
        %v989 = vrot.slane %v988, 4
        %v990 = vrot.slane %v358, 5
        %v991 = vsel %vm938, %v989, %v990
        %v992 = vrot.slane %v990, 4
        %v993 = vrot.slane %v359, 5
        %v994 = vsel %vm938, %v992, %v993
        %v995 = vunpack.c.l.b16 %v942
        %v996 = vunpack.c.l.b16 %v945
        %v997 = vunpack.c.l.b16 %v949
        %v998 = vunpack.c.l.b16 %v952
        %v999 = vunpack.c.l.b16 %v956
        %v1000 = vunpack.c.l.b16 %v959
        %v1001 = vunpack.c.l.b16 %v963
        %v1002 = vunpack.c.l.b16 %v966
        %v1003 = vunpack.c.l.b16 %v970
        %v1004 = vunpack.c.l.b16 %v973
        %v1005 = vunpack.c.l.b16 %v977
        %v1006 = vunpack.c.l.b16 %v980
        %v1007 = vunpack.c.l.b16 %v984
        %v1008 = vunpack.c.l.b16 %v987
        %v1009 = vunpack.c.l.b16 %v991
        %v1010 = vunpack.c.l.b16 %v994
        %v1011 = vpack.c.b16 %v996, %v995
        %v1012 = vpack.c.b16 %v998, %v997
        %v1013 = vpack.c.b16 %v1000, %v999
        %v1014 = vpack.c.b16 %v1002, %v1001
        %v1015 = vpack.c.b16 %v1004, %v1003
        %v1016 = vpack.c.b16 %v1006, %v1005
        %v1017 = vpack.c.b16 %v1008, %v1007
        %v1018 = vpack.c.b16 %v1010, %v1009
        %v1023 = vunpack.c.l.b16 %v374
        %v1024 = vunpack.c.l.b16 %v375
        %v1025 = vunpack.c.l.b16 %v376
        %v1026 = vunpack.c.l.b16 %v377
        %v1027 = vpack.c.b16 %v1024, %v1023
        %v1028 = vpack.c.b16 %v1026, %v1025
        %v1032 = vsel %vm633, %v1011, 0
        %v1035 = vsel %vm633, %v1012, 0
        %v1038 = vsel %vm633, %v1013, 0
        %v1041 = vsel %vm633, %v1014, 0
        %v1044 = vsel %vm633, %v1015, 0
        %v1047 = vsel %vm633, %v1016, 0
        %v1050 = vsel %vm633, %v1017, 0
        %v1053 = vsel %vm633, %v1018, 0
        %1055 = vmatprep.subr.bf16.mxu0 0
        %1056 = vmatpush1.bf16.msra.mxu0 %v1027
        %1057 = vmatprep.subr.bf16.mxu0 0
        %1058 = vmatpush1.bf16.msra.mxu0 %v1028
        %1059 = vmatprep.subr.bf16.mxu0 0
        %1060 = vmatpush1.bf16.msra.mxu0 0
        %1061 = vmatprep.subr.bf16.mxu0 0
        %1062 = vmatpush1.bf16.msra.mxu0 0
        %1063 = vmatprep.subr.bf16.mxu0 0
        %1064 = vmatpush1.bf16.msra.mxu0 0
        %1065 = vmatprep.subr.bf16.mxu0 0
        %1066 = vmatpush1.bf16.msra.mxu0 0
        %1067 = vmatprep.subr.bf16.mxu0 0
        %1068 = vmatpush1.bf16.msra.mxu0 0
        %1069 = vmatprep.subr.bf16.mxu0 0
        %1070 = vmatpush1.bf16.msra.mxu0 0
        %1071 = vmatprep.subr.bf16.mxu0 0
        %1072 = vmatpush1.bf16.msra.mxu0 0
        %1073 = vmatprep.subr.bf16.mxu0 0
        %1074 = vmatpush1.bf16.msra.mxu0 0
        %1075 = vmatprep.subr.bf16.mxu0 0
        %1076 = vmatpush1.bf16.msra.mxu0 0
        %1077 = vmatprep.subr.bf16.mxu0 0
        %1078 = vmatpush1.bf16.msra.mxu0 0
        %1079 = vmatprep.subr.bf16.mxu0 0
        %1080 = vmatpush1.bf16.msra.mxu0 0
        %1081 = vmatprep.subr.bf16.mxu0 0
        %1082 = vmatpush1.bf16.msra.mxu0 0
        %1083 = vmatprep.subr.bf16.mxu0 0
        %1084 = vmatpush1.bf16.msra.mxu0 0
        %1085 = vmatprep.subr.bf16.mxu0 0
        %1086 = vmatpush1.bf16.msra.mxu0 0
        %1087 = vmatprep.mubr.bf16.mxu0 0
        %1088 = vmatmul.mubr.bf16.gmra.mrb[0].mxu0 %v1032
        %v1089 = vpop.f32.mrb[0].mxu0
        %v1090 = vadd.f32 0.0, %v1089
        %v1091 = vpop.f32.mrb[0].mxu0
        %v1092 = vpop.f32.mrb[0].mxu0
        %v1093 = vadd.f32 0.0, %v1092
        %v1094 = vpop.f32.mrb[0].mxu0
        %1095 = vmatprep.mubr.bf16.mxu0 0
        %1096 = vmatmul.mubr.bf16.gmra.mrb[0].mxu0 %v1035
        %v1097 = vpop.f32.mrb[0].mxu0
        %v1098 = vadd.f32 0.0, %v1097
        %v1099 = vpop.f32.mrb[0].mxu0
        %v1100 = vpop.f32.mrb[0].mxu0
        %v1101 = vadd.f32 0.0, %v1100
        %v1102 = vpop.f32.mrb[0].mxu0
        %1103 = vmatprep.mubr.bf16.mxu0 0
        %1104 = vmatmul.mubr.bf16.gmra.mrb[0].mxu0 %v1038
        %v1105 = vpop.f32.mrb[0].mxu0
        %v1106 = vadd.f32 0.0, %v1105
        %v1107 = vpop.f32.mrb[0].mxu0
        %v1108 = vpop.f32.mrb[0].mxu0
        %v1109 = vadd.f32 0.0, %v1108
        %v1110 = vpop.f32.mrb[0].mxu0
        %1111 = vmatprep.mubr.bf16.mxu0 0
        %1112 = vmatmul.mubr.bf16.gmra.mrb[0].mxu0 %v1041
        %v1113 = vpop.f32.mrb[0].mxu0
        %v1114 = vadd.f32 0.0, %v1113
        %v1115 = vpop.f32.mrb[0].mxu0
        %v1116 = vpop.f32.mrb[0].mxu0
        %v1117 = vadd.f32 0.0, %v1116
        %v1118 = vpop.f32.mrb[0].mxu0
        %1119 = vmatprep.mubr.bf16.mxu0 0
        %1120 = vmatmul.mubr.bf16.gmra.mrb[0].mxu0 %v1044
        %v1121 = vpop.f32.mrb[0].mxu0
        %v1122 = vadd.f32 0.0, %v1121
        %v1123 = vpop.f32.mrb[0].mxu0
        %v1124 = vpop.f32.mrb[0].mxu0
        %v1125 = vadd.f32 0.0, %v1124
        %v1126 = vpop.f32.mrb[0].mxu0
        %1127 = vmatprep.mubr.bf16.mxu0 0
        %1128 = vmatmul.mubr.bf16.gmra.mrb[0].mxu0 %v1047
        %v1129 = vpop.f32.mrb[0].mxu0
        %v1130 = vadd.f32 0.0, %v1129
        %v1131 = vpop.f32.mrb[0].mxu0
        %v1132 = vpop.f32.mrb[0].mxu0
        %v1133 = vadd.f32 0.0, %v1132
        %v1134 = vpop.f32.mrb[0].mxu0
        %1135 = vmatprep.mubr.bf16.mxu0 0
        %1136 = vmatmul.mubr.bf16.gmra.mrb[0].mxu0 %v1050
        %v1137 = vpop.f32.mrb[0].mxu0
        %v1138 = vadd.f32 0.0, %v1137
        %v1139 = vpop.f32.mrb[0].mxu0
        %v1140 = vpop.f32.mrb[0].mxu0
        %v1141 = vadd.f32 0.0, %v1140
        %v1142 = vpop.f32.mrb[0].mxu0
        %1143 = vmatprep.mubr.bf16.mxu0 0
        %1144 = vmatmul.mubr.bf16.gmra.mrb[0].mxu0 %v1053
        %v1145 = vpop.f32.mrb[0].mxu0
        %v1146 = vadd.f32 0.0, %v1145
        %v1147 = vpop.f32.mrb[0].mxu0
        %v1148 = vpop.f32.mrb[0].mxu0
        %v1149 = vadd.f32 0.0, %v1148
        %v1150 = vpop.f32.mrb[0].mxu0
        %1151 = vdwg.mxu0
        %v1152 = vadd.f32 %v866, %v1090
        %v1153 = vadd.f32 %v869, %v1093
        %v1154 = vadd.f32 %v874, %v1098
        %v1155 = vadd.f32 %v877, %v1101
        %v1156 = vadd.f32 %v882, %v1106
        %v1157 = vadd.f32 %v885, %v1109
        %v1158 = vadd.f32 %v890, %v1114
        %v1159 = vadd.f32 %v893, %v1117
        %v1160 = vadd.f32 %v898, %v1122
        %v1161 = vadd.f32 %v901, %v1125
        %v1162 = vadd.f32 %v906, %v1130
        %v1163 = vadd.f32 %v909, %v1133
        %v1164 = vadd.f32 %v914, %v1138
        %v1165 = vadd.f32 %v917, %v1141
        %v1166 = vadd.f32 %v922, %v1146
        %v1167 = vadd.f32 %v925, %v1149
        %v1170 = vunpack.c.l.b16 %v360
        %v1171 = vunpack.c.l.b16 %v361
        %v1172 = vpack.c.b16 %v1171, %v1170
        %v1177 = vunpack.c.l.b16 %v378
        %v1178 = vunpack.c.l.b16 %v379
        %v1179 = vunpack.c.l.b16 %v380
        %v1180 = vunpack.c.l.b16 %v381
        %v1181 = vpack.c.b16 %v1178, %v1177
        %v1182 = vpack.c.b16 %v1180, %v1179
        %v1186 = vsel %vm633, %v1172, 0
        %1188 = vmatprep.subr.bf16.mxu0 0
        %1189 = vmatpush1.bf16.msra.mxu0 %v1181
        %1190 = vmatprep.subr.bf16.mxu0 0
        %1191 = vmatpush1.bf16.msra.mxu0 %v1182
        %1192 = vmatprep.subr.bf16.mxu0 0
        %1193 = vmatpush1.bf16.msra.mxu0 0
        %1194 = vmatprep.subr.bf16.mxu0 0
        %1195 = vmatpush1.bf16.msra.mxu0 0
        %1196 = vmatprep.subr.bf16.mxu0 0
        %1197 = vmatpush1.bf16.msra.mxu0 0
        %1198 = vmatprep.subr.bf16.mxu0 0
        %1199 = vmatpush1.bf16.msra.mxu0 0
        %1200 = vmatprep.subr.bf16.mxu0 0
        %1201 = vmatpush1.bf16.msra.mxu0 0
        %1202 = vmatprep.subr.bf16.mxu0 0
        %1203 = vmatpush1.bf16.msra.mxu0 0
        %1204 = vmatprep.subr.bf16.mxu0 0
        %1205 = vmatpush1.bf16.msra.mxu0 0
        %1206 = vmatprep.subr.bf16.mxu0 0
        %1207 = vmatpush1.bf16.msra.mxu0 0
        %1208 = vmatprep.subr.bf16.mxu0 0
        %1209 = vmatpush1.bf16.msra.mxu0 0
        %1210 = vmatprep.subr.bf16.mxu0 0
        %1211 = vmatpush1.bf16.msra.mxu0 0
        %1212 = vmatprep.subr.bf16.mxu0 0
        %1213 = vmatpush1.bf16.msra.mxu0 0
        %1214 = vmatprep.subr.bf16.mxu0 0
        %1215 = vmatpush1.bf16.msra.mxu0 0
        %1216 = vmatprep.subr.bf16.mxu0 0
        %1217 = vmatpush1.bf16.msra.mxu0 0
        %1218 = vmatprep.subr.bf16.mxu0 0
        %1219 = vmatpush1.bf16.msra.mxu0 0
        %1220 = vmatprep.mubr.bf16.mxu0 0
        %1221 = vmatmul.mubr.bf16.gmra.mrb[0].mxu0 %v811
        %v1222 = vpop.f32.mrb[0].mxu0
        %v1223 = vadd.f32 0.0, %v1222
        %v1224 = vpop.f32.mrb[0].mxu0
        %v1225 = vpop.f32.mrb[0].mxu0
        %v1226 = vadd.f32 0.0, %v1225
        %v1227 = vpop.f32.mrb[0].mxu0
        %1228 = vmatprep.mubr.bf16.mxu0 0
        %1229 = vmatmul.mubr.bf16.gmra.mrb[0].mxu0 %v814
        %v1230 = vpop.f32.mrb[0].mxu0
        %v1231 = vadd.f32 0.0, %v1230
        %v1232 = vpop.f32.mrb[0].mxu0
        %v1233 = vpop.f32.mrb[0].mxu0
        %v1234 = vadd.f32 0.0, %v1233
        %v1235 = vpop.f32.mrb[0].mxu0
        %1236 = vmatprep.mubr.bf16.mxu0 0
        %1237 = vmatmul.mubr.bf16.gmra.mrb[0].mxu0 %v817
        %v1238 = vpop.f32.mrb[0].mxu0
        %v1239 = vadd.f32 0.0, %v1238
        %v1240 = vpop.f32.mrb[0].mxu0
        %v1241 = vpop.f32.mrb[0].mxu0
        %v1242 = vadd.f32 0.0, %v1241
        %v1243 = vpop.f32.mrb[0].mxu0
        %1244 = vmatprep.mubr.bf16.mxu0 0
        %1245 = vmatmul.mubr.bf16.gmra.mrb[0].mxu0 %v820
        %v1246 = vpop.f32.mrb[0].mxu0
        %v1247 = vadd.f32 0.0, %v1246
        %v1248 = vpop.f32.mrb[0].mxu0
        %v1249 = vpop.f32.mrb[0].mxu0
        %v1250 = vadd.f32 0.0, %v1249
        %v1251 = vpop.f32.mrb[0].mxu0
        %1252 = vmatprep.mubr.bf16.mxu0 0
        %1253 = vmatmul.mubr.bf16.gmra.mrb[0].mxu0 %v823
        %v1254 = vpop.f32.mrb[0].mxu0
        %v1255 = vadd.f32 0.0, %v1254
        %v1256 = vpop.f32.mrb[0].mxu0
        %v1257 = vpop.f32.mrb[0].mxu0
        %v1258 = vadd.f32 0.0, %v1257
        %v1259 = vpop.f32.mrb[0].mxu0
        %1260 = vmatprep.mubr.bf16.mxu0 0
        %1261 = vmatmul.mubr.bf16.gmra.mrb[0].mxu0 %v826
        %v1262 = vpop.f32.mrb[0].mxu0
        %v1263 = vadd.f32 0.0, %v1262
        %v1264 = vpop.f32.mrb[0].mxu0
        %v1265 = vpop.f32.mrb[0].mxu0
        %v1266 = vadd.f32 0.0, %v1265
        %v1267 = vpop.f32.mrb[0].mxu0
        %1268 = vmatprep.mubr.bf16.mxu0 0
        %1269 = vmatmul.mubr.bf16.gmra.mrb[0].mxu0 %v829
        %v1270 = vpop.f32.mrb[0].mxu0
        %v1271 = vadd.f32 0.0, %v1270
        %v1272 = vpop.f32.mrb[0].mxu0
        %v1273 = vpop.f32.mrb[0].mxu0
        %v1274 = vadd.f32 0.0, %v1273
        %v1275 = vpop.f32.mrb[0].mxu0
        %1276 = vmatprep.mubr.bf16.mxu0 0
        %1277 = vmatmul.mubr.bf16.gmra.mrb[0].mxu0 %v1186
        %v1278 = vpop.f32.mrb[0].mxu0
        %v1279 = vadd.f32 0.0, %v1278
        %v1280 = vpop.f32.mrb[0].mxu0
        %v1281 = vpop.f32.mrb[0].mxu0
        %v1282 = vadd.f32 0.0, %v1281
        %v1283 = vpop.f32.mrb[0].mxu0
        %1284 = vdwg.mxu0
        %v1285 = vadd.f32 %v1152, %v1223
        %v1286 = vadd.f32 %v1153, %v1226
        %v1287 = vadd.f32 %v1154, %v1231
        %v1288 = vadd.f32 %v1155, %v1234
        %v1289 = vadd.f32 %v1156, %v1239
        %v1290 = vadd.f32 %v1157, %v1242
        %v1291 = vadd.f32 %v1158, %v1247
        %v1292 = vadd.f32 %v1159, %v1250
        %v1293 = vadd.f32 %v1160, %v1255
        %v1294 = vadd.f32 %v1161, %v1258
        %v1295 = vadd.f32 %v1162, %v1263
        %v1296 = vadd.f32 %v1163, %v1266
        %v1297 = vadd.f32 %v1164, %v1271
        %v1298 = vadd.f32 %v1165, %v1274
        %v1299 = vadd.f32 %v1166, %v1279
        %v1300 = vadd.f32 %v1167, %v1282
        %v1302 = vshrl.u32 %v360, 16
        %v1304 = vrot.slane %v1302, 4
        %v1305 = vshll.u32 %v360, 16
        %v1307 = vrot.slane %v1305, 5
        %v1308 = vor.u32 %v1304, %v1307
        %v1309 = vrot.slane %v1308, 4
        %v1311 = vshll.u32 %v361, 16
        %v1313 = vrot.slane %v1311, 5
        %v1314 = vsel %vm404, %v1309, %v1313
        %v1315 = vshrl.u32 %v361, 16
        %v1317 = vrot.slane %v1315, 4
        %v1318 = vor.u32 %v1317, %v1313
        %v1319 = vrot.slane %v1318, 4
        %v1321 = vshll.u32 %v362, 16
        %v1323 = vrot.slane %v1321, 5
        %v1324 = vsel %vm404, %v1319, %v1323
        %v1325 = vunpack.c.l.b16 %v1314
        %v1326 = vunpack.c.l.b16 %v1324
        %v1327 = vpack.c.b16 %v1326, %v1325
        %v1332 = vunpack.c.l.b16 %v382
        %v1333 = vunpack.c.l.b16 %v383
        %v1334 = vunpack.c.l.b16 %v384
        %v1335 = vunpack.c.l.b16 %v385
        %v1336 = vpack.c.b16 %v1333, %v1332
        %v1337 = vpack.c.b16 %v1335, %v1334
        %v1341 = vsel %vm633, %v1327, 0
        %1343 = vmatprep.subr.bf16.mxu0 0
        %1344 = vmatpush1.bf16.msra.mxu0 %v1336
        %1345 = vmatprep.subr.bf16.mxu0 0
        %1346 = vmatpush1.bf16.msra.mxu0 %v1337
        %1347 = vmatprep.subr.bf16.mxu0 0
        %1348 = vmatpush1.bf16.msra.mxu0 0
        %1349 = vmatprep.subr.bf16.mxu0 0
        %1350 = vmatpush1.bf16.msra.mxu0 0
        %1351 = vmatprep.subr.bf16.mxu0 0
        %1352 = vmatpush1.bf16.msra.mxu0 0
        %1353 = vmatprep.subr.bf16.mxu0 0
        %1354 = vmatpush1.bf16.msra.mxu0 0
        %1355 = vmatprep.subr.bf16.mxu0 0
        %1356 = vmatpush1.bf16.msra.mxu0 0
        %1357 = vmatprep.subr.bf16.mxu0 0
        %1358 = vmatpush1.bf16.msra.mxu0 0
        %1359 = vmatprep.subr.bf16.mxu0 0
        %1360 = vmatpush1.bf16.msra.mxu0 0
        %1361 = vmatprep.subr.bf16.mxu0 0
        %1362 = vmatpush1.bf16.msra.mxu0 0
        %1363 = vmatprep.subr.bf16.mxu0 0
        %1364 = vmatpush1.bf16.msra.mxu0 0
        %1365 = vmatprep.subr.bf16.mxu0 0
        %1366 = vmatpush1.bf16.msra.mxu0 0
        %1367 = vmatprep.subr.bf16.mxu0 0
        %1368 = vmatpush1.bf16.msra.mxu0 0
        %1369 = vmatprep.subr.bf16.mxu0 0
        %1370 = vmatpush1.bf16.msra.mxu0 0
        %1371 = vmatprep.subr.bf16.mxu0 0
        %1372 = vmatpush1.bf16.msra.mxu0 0
        %1373 = vmatprep.subr.bf16.mxu0 0
        %1374 = vmatpush1.bf16.msra.mxu0 0
        %1375 = vmatprep.mubr.bf16.mxu0 0
        %1376 = vmatmul.mubr.bf16.gmra.mrb[0].mxu0 %v638
        %v1377 = vpop.f32.mrb[0].mxu0
        %v1378 = vadd.f32 0.0, %v1377
        %v1379 = vpop.f32.mrb[0].mxu0
        %v1380 = vpop.f32.mrb[0].mxu0
        %v1381 = vadd.f32 0.0, %v1380
        %v1382 = vpop.f32.mrb[0].mxu0
        %1383 = vmatprep.mubr.bf16.mxu0 0
        %1384 = vmatmul.mubr.bf16.gmra.mrb[0].mxu0 %v641
        %v1385 = vpop.f32.mrb[0].mxu0
        %v1386 = vadd.f32 0.0, %v1385
        %v1387 = vpop.f32.mrb[0].mxu0
        %v1388 = vpop.f32.mrb[0].mxu0
        %v1389 = vadd.f32 0.0, %v1388
        %v1390 = vpop.f32.mrb[0].mxu0
        %1391 = vmatprep.mubr.bf16.mxu0 0
        %1392 = vmatmul.mubr.bf16.gmra.mrb[0].mxu0 %v644
        %v1393 = vpop.f32.mrb[0].mxu0
        %v1394 = vadd.f32 0.0, %v1393
        %v1395 = vpop.f32.mrb[0].mxu0
        %v1396 = vpop.f32.mrb[0].mxu0
        %v1397 = vadd.f32 0.0, %v1396
        %v1398 = vpop.f32.mrb[0].mxu0
        %1399 = vmatprep.mubr.bf16.mxu0 0
        %1400 = vmatmul.mubr.bf16.gmra.mrb[0].mxu0 %v647
        %v1401 = vpop.f32.mrb[0].mxu0
        %v1402 = vadd.f32 0.0, %v1401
        %v1403 = vpop.f32.mrb[0].mxu0
        %v1404 = vpop.f32.mrb[0].mxu0
        %v1405 = vadd.f32 0.0, %v1404
        %v1406 = vpop.f32.mrb[0].mxu0
        %1407 = vmatprep.mubr.bf16.mxu0 0
        %1408 = vmatmul.mubr.bf16.gmra.mrb[0].mxu0 %v650
        %v1409 = vpop.f32.mrb[0].mxu0
        %v1410 = vadd.f32 0.0, %v1409
        %v1411 = vpop.f32.mrb[0].mxu0
        %v1412 = vpop.f32.mrb[0].mxu0
        %v1413 = vadd.f32 0.0, %v1412
        %v1414 = vpop.f32.mrb[0].mxu0
        %1415 = vmatprep.mubr.bf16.mxu0 0
        %1416 = vmatmul.mubr.bf16.gmra.mrb[0].mxu0 %v653
        %v1417 = vpop.f32.mrb[0].mxu0
        %v1418 = vadd.f32 0.0, %v1417
        %v1419 = vpop.f32.mrb[0].mxu0
        %v1420 = vpop.f32.mrb[0].mxu0
        %v1421 = vadd.f32 0.0, %v1420
        %v1422 = vpop.f32.mrb[0].mxu0
        %1423 = vmatprep.mubr.bf16.mxu0 0
        %1424 = vmatmul.mubr.bf16.gmra.mrb[0].mxu0 %v656
        %v1425 = vpop.f32.mrb[0].mxu0
        %v1426 = vadd.f32 0.0, %v1425
        %v1427 = vpop.f32.mrb[0].mxu0
        %v1428 = vpop.f32.mrb[0].mxu0
        %v1429 = vadd.f32 0.0, %v1428
        %v1430 = vpop.f32.mrb[0].mxu0
        %1431 = vmatprep.mubr.bf16.mxu0 0
        %1432 = vmatmul.mubr.bf16.gmra.mrb[0].mxu0 %v1341
        %v1433 = vpop.f32.mrb[0].mxu0
        %v1434 = vadd.f32 0.0, %v1433
        %v1435 = vpop.f32.mrb[0].mxu0
        %v1436 = vpop.f32.mrb[0].mxu0
        %v1437 = vadd.f32 0.0, %v1436
        %v1438 = vpop.f32.mrb[0].mxu0
        %1439 = vdwg.mxu0
        %v1440 = vadd.f32 %v1285, %v1378
        %v1441 = vadd.f32 %v1286, %v1381
        %v1442 = vadd.f32 %v1287, %v1386
        %v1443 = vadd.f32 %v1288, %v1389
        %v1444 = vadd.f32 %v1289, %v1394
        %v1445 = vadd.f32 %v1290, %v1397
        %v1446 = vadd.f32 %v1291, %v1402
        %v1447 = vadd.f32 %v1292, %v1405
        %v1448 = vadd.f32 %v1293, %v1410
        %v1449 = vadd.f32 %v1294, %v1413
        %v1450 = vadd.f32 %v1295, %v1418
        %v1451 = vadd.f32 %v1296, %v1421
        %v1452 = vadd.f32 %v1297, %v1426
        %v1453 = vadd.f32 %v1298, %v1429
        %v1454 = vadd.f32 %v1299, %v1434
        %v1455 = vadd.f32 %v1300, %v1437
        %v1457 = vrot.slane %v360, 5
        %v1458 = vrot.slane %v1457, 4
        %v1459 = vrot.slane %v361, 5
        %v1460 = vsel %vm938, %v1458, %v1459
        %v1461 = vrot.slane %v1459, 4
        %v1462 = vrot.slane %v362, 5
        %v1463 = vsel %vm938, %v1461, %v1462
        %v1464 = vunpack.c.l.b16 %v1460
        %v1465 = vunpack.c.l.b16 %v1463
        %v1466 = vpack.c.b16 %v1465, %v1464
        %v1471 = vunpack.c.l.b16 %v386
        %v1472 = vunpack.c.l.b16 %v387
        %v1473 = vunpack.c.l.b16 %v388
        %v1474 = vunpack.c.l.b16 %v389
        %v1475 = vpack.c.b16 %v1472, %v1471
        %v1476 = vpack.c.b16 %v1474, %v1473
        %v1480 = vsel %vm633, %v1466, 0
        %1482 = vmatprep.subr.bf16.mxu0 0
        %1483 = vmatpush1.bf16.msra.mxu0 %v1475
        %1484 = vmatprep.subr.bf16.mxu0 0
        %1485 = vmatpush1.bf16.msra.mxu0 %v1476
        %1486 = vmatprep.subr.bf16.mxu0 0
        %1487 = vmatpush1.bf16.msra.mxu0 0
        %1488 = vmatprep.subr.bf16.mxu0 0
        %1489 = vmatpush1.bf16.msra.mxu0 0
        %1490 = vmatprep.subr.bf16.mxu0 0
        %1491 = vmatpush1.bf16.msra.mxu0 0
        %1492 = vmatprep.subr.bf16.mxu0 0
        %1493 = vmatpush1.bf16.msra.mxu0 0
        %1494 = vmatprep.subr.bf16.mxu0 0
        %1495 = vmatpush1.bf16.msra.mxu0 0
        %1496 = vmatprep.subr.bf16.mxu0 0
        %1497 = vmatpush1.bf16.msra.mxu0 0
        %1498 = vmatprep.subr.bf16.mxu0 0
        %1499 = vmatpush1.bf16.msra.mxu0 0
        %1500 = vmatprep.subr.bf16.mxu0 0
        %1501 = vmatpush1.bf16.msra.mxu0 0
        %1502 = vmatprep.subr.bf16.mxu0 0
        %1503 = vmatpush1.bf16.msra.mxu0 0
        %1504 = vmatprep.subr.bf16.mxu0 0
        %1505 = vmatpush1.bf16.msra.mxu0 0
        %1506 = vmatprep.subr.bf16.mxu0 0
        %1507 = vmatpush1.bf16.msra.mxu0 0
        %1508 = vmatprep.subr.bf16.mxu0 0
        %1509 = vmatpush1.bf16.msra.mxu0 0
        %1510 = vmatprep.subr.bf16.mxu0 0
        %1511 = vmatpush1.bf16.msra.mxu0 0
        %1512 = vmatprep.subr.bf16.mxu0 0
        %1513 = vmatpush1.bf16.msra.mxu0 0
        %1514 = vmatprep.mubr.bf16.mxu0 0
        %1515 = vmatmul.mubr.bf16.gmra.mrb[0].mxu0 %v1035
        %v1516 = vpop.f32.mrb[0].mxu0
        %v1517 = vadd.f32 0.0, %v1516
        %v1518 = vpop.f32.mrb[0].mxu0
        %v1519 = vpop.f32.mrb[0].mxu0
        %v1520 = vadd.f32 0.0, %v1519
        %v1521 = vpop.f32.mrb[0].mxu0
        %1522 = vmatprep.mubr.bf16.mxu0 0
        %1523 = vmatmul.mubr.bf16.gmra.mrb[0].mxu0 %v1038
        %v1524 = vpop.f32.mrb[0].mxu0
        %v1525 = vadd.f32 0.0, %v1524
        %v1526 = vpop.f32.mrb[0].mxu0
        %v1527 = vpop.f32.mrb[0].mxu0
        %v1528 = vadd.f32 0.0, %v1527
        %v1529 = vpop.f32.mrb[0].mxu0
        %1530 = vmatprep.mubr.bf16.mxu0 0
        %1531 = vmatmul.mubr.bf16.gmra.mrb[0].mxu0 %v1041
        %v1532 = vpop.f32.mrb[0].mxu0
        %v1533 = vadd.f32 0.0, %v1532
        %v1534 = vpop.f32.mrb[0].mxu0
        %v1535 = vpop.f32.mrb[0].mxu0
        %v1536 = vadd.f32 0.0, %v1535
        %v1537 = vpop.f32.mrb[0].mxu0
        %1538 = vmatprep.mubr.bf16.mxu0 0
        %1539 = vmatmul.mubr.bf16.gmra.mrb[0].mxu0 %v1044
        %v1540 = vpop.f32.mrb[0].mxu0
        %v1541 = vadd.f32 0.0, %v1540
        %v1542 = vpop.f32.mrb[0].mxu0
        %v1543 = vpop.f32.mrb[0].mxu0
        %v1544 = vadd.f32 0.0, %v1543
        %v1545 = vpop.f32.mrb[0].mxu0
        %1546 = vmatprep.mubr.bf16.mxu0 0
        %1547 = vmatmul.mubr.bf16.gmra.mrb[0].mxu0 %v1047
        %v1548 = vpop.f32.mrb[0].mxu0
        %v1549 = vadd.f32 0.0, %v1548
        %v1550 = vpop.f32.mrb[0].mxu0
        %v1551 = vpop.f32.mrb[0].mxu0
        %v1552 = vadd.f32 0.0, %v1551
        %v1553 = vpop.f32.mrb[0].mxu0
        %1554 = vmatprep.mubr.bf16.mxu0 0
        %1555 = vmatmul.mubr.bf16.gmra.mrb[0].mxu0 %v1050
        %v1556 = vpop.f32.mrb[0].mxu0
        %v1557 = vadd.f32 0.0, %v1556
        %v1558 = vpop.f32.mrb[0].mxu0
        %v1559 = vpop.f32.mrb[0].mxu0
        %v1560 = vadd.f32 0.0, %v1559
        %v1561 = vpop.f32.mrb[0].mxu0
        %1562 = vmatprep.mubr.bf16.mxu0 0
        %1563 = vmatmul.mubr.bf16.gmra.mrb[0].mxu0 %v1053
        %v1564 = vpop.f32.mrb[0].mxu0
        %v1565 = vadd.f32 0.0, %v1564
        %v1566 = vpop.f32.mrb[0].mxu0
        %v1567 = vpop.f32.mrb[0].mxu0
        %v1568 = vadd.f32 0.0, %v1567
        %v1569 = vpop.f32.mrb[0].mxu0
        %1570 = vmatprep.mubr.bf16.mxu0 0
        %1571 = vmatmul.mubr.bf16.gmra.mrb[0].mxu0 %v1480
        %v1572 = vpop.f32.mrb[0].mxu0
        %v1573 = vadd.f32 0.0, %v1572
        %v1574 = vpop.f32.mrb[0].mxu0
        %v1575 = vpop.f32.mrb[0].mxu0
        %v1576 = vadd.f32 0.0, %v1575
        %v1577 = vpop.f32.mrb[0].mxu0
        %1578 = vdwg.mxu0
        %v1579 = vadd.f32 %v1440, %v1517
        %v1580 = vadd.f32 %v1441, %v1520
        %v1581 = vadd.f32 %v1442, %v1525
        %v1582 = vadd.f32 %v1443, %v1528
        %v1583 = vadd.f32 %v1444, %v1533
        %v1584 = vadd.f32 %v1445, %v1536
        %v1585 = vadd.f32 %v1446, %v1541
        %v1586 = vadd.f32 %v1447, %v1544
        %v1587 = vadd.f32 %v1448, %v1549
        %v1588 = vadd.f32 %v1449, %v1552
        %v1589 = vadd.f32 %v1450, %v1557
        %v1590 = vadd.f32 %v1451, %v1560
        %v1591 = vadd.f32 %v1452, %v1565
        %v1592 = vadd.f32 %v1453, %v1568
        %v1593 = vadd.f32 %v1454, %v1573
        %v1594 = vadd.f32 %v1455, %v1576
        %v1597 = vunpack.c.l.b16 %v363
        %v1598 = vunpack.c.l.b16 %v364
        %v1599 = vpack.c.b16 %v1598, %v1597
        %v1604 = vunpack.c.l.b16 %v390
        %v1605 = vunpack.c.l.b16 %v391
        %v1606 = vunpack.c.l.b16 %v392
        %v1607 = vunpack.c.l.b16 %v393
        %v1608 = vpack.c.b16 %v1605, %v1604
        %v1609 = vpack.c.b16 %v1607, %v1606
        %v1613 = vsel %vm633, %v1599, 0
        %1615 = vmatprep.subr.bf16.mxu0 0
        %1616 = vmatpush1.bf16.msra.mxu0 %v1608
        %1617 = vmatprep.subr.bf16.mxu0 0
        %1618 = vmatpush1.bf16.msra.mxu0 %v1609
        %1619 = vmatprep.subr.bf16.mxu0 0
        %1620 = vmatpush1.bf16.msra.mxu0 0
        %1621 = vmatprep.subr.bf16.mxu0 0
        %1622 = vmatpush1.bf16.msra.mxu0 0
        %1623 = vmatprep.subr.bf16.mxu0 0
        %1624 = vmatpush1.bf16.msra.mxu0 0
        %1625 = vmatprep.subr.bf16.mxu0 0
        %1626 = vmatpush1.bf16.msra.mxu0 0
        %1627 = vmatprep.subr.bf16.mxu0 0
        %1628 = vmatpush1.bf16.msra.mxu0 0
        %1629 = vmatprep.subr.bf16.mxu0 0
        %1630 = vmatpush1.bf16.msra.mxu0 0
        %1631 = vmatprep.subr.bf16.mxu0 0
        %1632 = vmatpush1.bf16.msra.mxu0 0
        %1633 = vmatprep.subr.bf16.mxu0 0
        %1634 = vmatpush1.bf16.msra.mxu0 0
        %1635 = vmatprep.subr.bf16.mxu0 0
        %1636 = vmatpush1.bf16.msra.mxu0 0
        %1637 = vmatprep.subr.bf16.mxu0 0
        %1638 = vmatpush1.bf16.msra.mxu0 0
        %1639 = vmatprep.subr.bf16.mxu0 0
        %1640 = vmatpush1.bf16.msra.mxu0 0
        %1641 = vmatprep.subr.bf16.mxu0 0
        %1642 = vmatpush1.bf16.msra.mxu0 0
        %1643 = vmatprep.subr.bf16.mxu0 0
        %1644 = vmatpush1.bf16.msra.mxu0 0
        %1645 = vmatprep.subr.bf16.mxu0 0
        %1646 = vmatpush1.bf16.msra.mxu0 0
        %1647 = vmatprep.mubr.bf16.mxu0 0
        %1648 = vmatmul.mubr.bf16.gmra.mrb[0].mxu0 %v814
        %v1649 = vpop.f32.mrb[0].mxu0
        %v1650 = vadd.f32 0.0, %v1649
        %v1651 = vpop.f32.mrb[0].mxu0
        %v1652 = vpop.f32.mrb[0].mxu0
        %v1653 = vadd.f32 0.0, %v1652
        %v1654 = vpop.f32.mrb[0].mxu0
        %1655 = vmatprep.mubr.bf16.mxu0 0
        %1656 = vmatmul.mubr.bf16.gmra.mrb[0].mxu0 %v817
        %v1657 = vpop.f32.mrb[0].mxu0
        %v1658 = vadd.f32 0.0, %v1657
        %v1659 = vpop.f32.mrb[0].mxu0
        %v1660 = vpop.f32.mrb[0].mxu0
        %v1661 = vadd.f32 0.0, %v1660
        %v1662 = vpop.f32.mrb[0].mxu0
        %1663 = vmatprep.mubr.bf16.mxu0 0
        %1664 = vmatmul.mubr.bf16.gmra.mrb[0].mxu0 %v820
        %v1665 = vpop.f32.mrb[0].mxu0
        %v1666 = vadd.f32 0.0, %v1665
        %v1667 = vpop.f32.mrb[0].mxu0
        %v1668 = vpop.f32.mrb[0].mxu0
        %v1669 = vadd.f32 0.0, %v1668
        %v1670 = vpop.f32.mrb[0].mxu0
        %1671 = vmatprep.mubr.bf16.mxu0 0
        %1672 = vmatmul.mubr.bf16.gmra.mrb[0].mxu0 %v823
        %v1673 = vpop.f32.mrb[0].mxu0
        %v1674 = vadd.f32 0.0, %v1673
        %v1675 = vpop.f32.mrb[0].mxu0
        %v1676 = vpop.f32.mrb[0].mxu0
        %v1677 = vadd.f32 0.0, %v1676
        %v1678 = vpop.f32.mrb[0].mxu0
        %1679 = vmatprep.mubr.bf16.mxu0 0
        %1680 = vmatmul.mubr.bf16.gmra.mrb[0].mxu0 %v826
        %v1681 = vpop.f32.mrb[0].mxu0
        %v1682 = vadd.f32 0.0, %v1681
        %v1683 = vpop.f32.mrb[0].mxu0
        %v1684 = vpop.f32.mrb[0].mxu0
        %v1685 = vadd.f32 0.0, %v1684
        %v1686 = vpop.f32.mrb[0].mxu0
        %1687 = vmatprep.mubr.bf16.mxu0 0
        %1688 = vmatmul.mubr.bf16.gmra.mrb[0].mxu0 %v829
        %v1689 = vpop.f32.mrb[0].mxu0
        %v1690 = vadd.f32 0.0, %v1689
        %v1691 = vpop.f32.mrb[0].mxu0
        %v1692 = vpop.f32.mrb[0].mxu0
        %v1693 = vadd.f32 0.0, %v1692
        %v1694 = vpop.f32.mrb[0].mxu0
        %1695 = vmatprep.mubr.bf16.mxu0 0
        %1696 = vmatmul.mubr.bf16.gmra.mrb[0].mxu0 %v1186
        %v1697 = vpop.f32.mrb[0].mxu0
        %v1698 = vadd.f32 0.0, %v1697
        %v1699 = vpop.f32.mrb[0].mxu0
        %v1700 = vpop.f32.mrb[0].mxu0
        %v1701 = vadd.f32 0.0, %v1700
        %v1702 = vpop.f32.mrb[0].mxu0
        %1703 = vmatprep.mubr.bf16.mxu0 0
        %1704 = vmatmul.mubr.bf16.gmra.mrb[0].mxu0 %v1613
        %v1705 = vpop.f32.mrb[0].mxu0
        %v1706 = vadd.f32 0.0, %v1705
        %v1707 = vpop.f32.mrb[0].mxu0
        %v1708 = vpop.f32.mrb[0].mxu0
        %v1709 = vadd.f32 0.0, %v1708
        %v1710 = vpop.f32.mrb[0].mxu0
        %1711 = vdwg.mxu0
        %v1712 = vadd.f32 %v1579, %v1650
        %v1713 = vadd.f32 %v1580, %v1653
        %v1714 = vadd.f32 %v1581, %v1658
        %v1715 = vadd.f32 %v1582, %v1661
        %v1716 = vadd.f32 %v1583, %v1666
        %v1717 = vadd.f32 %v1584, %v1669
        %v1718 = vadd.f32 %v1585, %v1674
        %v1719 = vadd.f32 %v1586, %v1677
        %v1720 = vadd.f32 %v1587, %v1682
        %v1721 = vadd.f32 %v1588, %v1685
        %v1722 = vadd.f32 %v1589, %v1690
        %v1723 = vadd.f32 %v1590, %v1693
        %v1724 = vadd.f32 %v1591, %v1698
        %v1725 = vadd.f32 %v1592, %v1701
        %v1726 = vadd.f32 %v1593, %v1706
        %v1727 = vadd.f32 %v1594, %v1709
        %v1729 = vshrl.u32 %v363, 16
        %v1731 = vrot.slane %v1729, 4
        %v1732 = vshll.u32 %v363, 16
        %v1734 = vrot.slane %v1732, 5
        %v1735 = vor.u32 %v1731, %v1734
        %v1736 = vrot.slane %v1735, 4
        %v1738 = vshll.u32 %v364, 16
        %v1740 = vrot.slane %v1738, 5
        %v1741 = vsel %vm404, %v1736, %v1740
        %v1742 = vshrl.u32 %v364, 16
        %v1744 = vrot.slane %v1742, 4
        %v1745 = vor.u32 %v1744, %v1740
        %v1746 = vrot.slane %v1745, 4
        %v1748 = vshll.u32 %v365, 16
        %v1750 = vrot.slane %v1748, 5
        %v1751 = vsel %vm404, %v1746, %v1750
        %v1752 = vunpack.c.l.b16 %v1741
        %v1753 = vunpack.c.l.b16 %v1751
        %v1754 = vpack.c.b16 %v1753, %v1752
        %v1759 = vunpack.c.l.b16 %v394
        %v1760 = vunpack.c.l.b16 %v395
        %v1761 = vunpack.c.l.b16 %v396
        %v1762 = vunpack.c.l.b16 %v397
        %v1763 = vpack.c.b16 %v1760, %v1759
        %v1764 = vpack.c.b16 %v1762, %v1761
        %v1768 = vsel %vm633, %v1754, 0
        %1770 = vmatprep.subr.bf16.mxu0 0
        %1771 = vmatpush1.bf16.msra.mxu0 %v1763
        %1772 = vmatprep.subr.bf16.mxu0 0
        %1773 = vmatpush1.bf16.msra.mxu0 %v1764
        %1774 = vmatprep.subr.bf16.mxu0 0
        %1775 = vmatpush1.bf16.msra.mxu0 0
        %1776 = vmatprep.subr.bf16.mxu0 0
        %1777 = vmatpush1.bf16.msra.mxu0 0
        %1778 = vmatprep.subr.bf16.mxu0 0
        %1779 = vmatpush1.bf16.msra.mxu0 0
        %1780 = vmatprep.subr.bf16.mxu0 0
        %1781 = vmatpush1.bf16.msra.mxu0 0
        %1782 = vmatprep.subr.bf16.mxu0 0
        %1783 = vmatpush1.bf16.msra.mxu0 0
        %1784 = vmatprep.subr.bf16.mxu0 0
        %1785 = vmatpush1.bf16.msra.mxu0 0
        %1786 = vmatprep.subr.bf16.mxu0 0
        %1787 = vmatpush1.bf16.msra.mxu0 0
        %1788 = vmatprep.subr.bf16.mxu0 0
        %1789 = vmatpush1.bf16.msra.mxu0 0
        %1790 = vmatprep.subr.bf16.mxu0 0
        %1791 = vmatpush1.bf16.msra.mxu0 0
        %1792 = vmatprep.subr.bf16.mxu0 0
        %1793 = vmatpush1.bf16.msra.mxu0 0
        %1794 = vmatprep.subr.bf16.mxu0 0
        %1795 = vmatpush1.bf16.msra.mxu0 0
        %1796 = vmatprep.subr.bf16.mxu0 0
        %1797 = vmatpush1.bf16.msra.mxu0 0
        %1798 = vmatprep.subr.bf16.mxu0 0
        %1799 = vmatpush1.bf16.msra.mxu0 0
        %1800 = vmatprep.subr.bf16.mxu0 0
        %1801 = vmatpush1.bf16.msra.mxu0 0
        %1802 = vmatprep.mubr.bf16.mxu0 0
        %1803 = vmatmul.mubr.bf16.gmra.mrb[0].mxu0 %v641
        %v1804 = vpop.f32.mrb[0].mxu0
        %v1805 = vadd.f32 0.0, %v1804
        %v1806 = vpop.f32.mrb[0].mxu0
        %v1807 = vpop.f32.mrb[0].mxu0
        %v1808 = vadd.f32 0.0, %v1807
        %v1809 = vpop.f32.mrb[0].mxu0
        %1810 = vmatprep.mubr.bf16.mxu0 0
        %1811 = vmatmul.mubr.bf16.gmra.mrb[0].mxu0 %v644
        %v1812 = vpop.f32.mrb[0].mxu0
        %v1813 = vadd.f32 0.0, %v1812
        %v1814 = vpop.f32.mrb[0].mxu0
        %v1815 = vpop.f32.mrb[0].mxu0
        %v1816 = vadd.f32 0.0, %v1815
        %v1817 = vpop.f32.mrb[0].mxu0
        %1818 = vmatprep.mubr.bf16.mxu0 0
        %1819 = vmatmul.mubr.bf16.gmra.mrb[0].mxu0 %v647
        %v1820 = vpop.f32.mrb[0].mxu0
        %v1821 = vadd.f32 0.0, %v1820
        %v1822 = vpop.f32.mrb[0].mxu0
        %v1823 = vpop.f32.mrb[0].mxu0
        %v1824 = vadd.f32 0.0, %v1823
        %v1825 = vpop.f32.mrb[0].mxu0
        %1826 = vmatprep.mubr.bf16.mxu0 0
        %1827 = vmatmul.mubr.bf16.gmra.mrb[0].mxu0 %v650
        %v1828 = vpop.f32.mrb[0].mxu0
        %v1829 = vadd.f32 0.0, %v1828
        %v1830 = vpop.f32.mrb[0].mxu0
        %v1831 = vpop.f32.mrb[0].mxu0
        %v1832 = vadd.f32 0.0, %v1831
        %v1833 = vpop.f32.mrb[0].mxu0
        %1834 = vmatprep.mubr.bf16.mxu0 0
        %1835 = vmatmul.mubr.bf16.gmra.mrb[0].mxu0 %v653
        %v1836 = vpop.f32.mrb[0].mxu0
        %v1837 = vadd.f32 0.0, %v1836
        %v1838 = vpop.f32.mrb[0].mxu0
        %v1839 = vpop.f32.mrb[0].mxu0
        %v1840 = vadd.f32 0.0, %v1839
        %v1841 = vpop.f32.mrb[0].mxu0
        %1842 = vmatprep.mubr.bf16.mxu0 0
        %1843 = vmatmul.mubr.bf16.gmra.mrb[0].mxu0 %v656
        %v1844 = vpop.f32.mrb[0].mxu0
        %v1845 = vadd.f32 0.0, %v1844
        %v1846 = vpop.f32.mrb[0].mxu0
        %v1847 = vpop.f32.mrb[0].mxu0
        %v1848 = vadd.f32 0.0, %v1847
        %v1849 = vpop.f32.mrb[0].mxu0
        %1850 = vmatprep.mubr.bf16.mxu0 0
        %1851 = vmatmul.mubr.bf16.gmra.mrb[0].mxu0 %v1341
        %v1852 = vpop.f32.mrb[0].mxu0
        %v1853 = vadd.f32 0.0, %v1852
        %v1854 = vpop.f32.mrb[0].mxu0
        %v1855 = vpop.f32.mrb[0].mxu0
        %v1856 = vadd.f32 0.0, %v1855
        %v1857 = vpop.f32.mrb[0].mxu0
        %1858 = vmatprep.mubr.bf16.mxu0 0
        %1859 = vmatmul.mubr.bf16.gmra.mrb[0].mxu0 %v1768
        %v1860 = vpop.f32.mrb[0].mxu0
        %v1861 = vadd.f32 0.0, %v1860
        %v1862 = vpop.f32.mrb[0].mxu0
        %v1863 = vpop.f32.mrb[0].mxu0
        %v1864 = vadd.f32 0.0, %v1863
        %v1865 = vpop.f32.mrb[0].mxu0
        %1866 = vdwg.mxu0
        %v1867 = vadd.f32 %v1712, %v1805
        %v1868 = vadd.f32 %v1713, %v1808
        %v1869 = vadd.f32 %v1714, %v1813
        %v1870 = vadd.f32 %v1715, %v1816
        %v1871 = vadd.f32 %v1716, %v1821
        %v1872 = vadd.f32 %v1717, %v1824
        %v1873 = vadd.f32 %v1718, %v1829
        %v1874 = vadd.f32 %v1719, %v1832
        %v1875 = vadd.f32 %v1720, %v1837
        %v1876 = vadd.f32 %v1721, %v1840
        %v1877 = vadd.f32 %v1722, %v1845
        %v1878 = vadd.f32 %v1723, %v1848
        %v1879 = vadd.f32 %v1724, %v1853
        %v1880 = vadd.f32 %v1725, %v1856
        %v1881 = vadd.f32 %v1726, %v1861
        %v1882 = vadd.f32 %v1727, %v1864
        %v1884 = vrot.slane %v363, 5
        %v1885 = vrot.slane %v1884, 4
        %v1886 = vrot.slane %v364, 5
        %v1887 = vsel %vm938, %v1885, %v1886
        %v1888 = vrot.slane %v1886, 4
        %v1889 = vrot.slane %v365, 5
        %v1890 = vsel %vm938, %v1888, %v1889
        %v1891 = vunpack.c.l.b16 %v1887
        %v1892 = vunpack.c.l.b16 %v1890
        %v1893 = vpack.c.b16 %v1892, %v1891
        %v1898 = vunpack.c.l.b16 %v398
        %v1899 = vunpack.c.l.b16 %v399
        %v1900 = vunpack.c.l.b16 %v400
        %v1901 = vunpack.c.l.b16 %v401
        %v1902 = vpack.c.b16 %v1899, %v1898
        %v1903 = vpack.c.b16 %v1901, %v1900
        %v1907 = vsel %vm633, %v1893, 0
        %1909 = vmatprep.subr.bf16.mxu0 0
        %1910 = vmatpush1.bf16.msra.mxu0 %v1902
        %1911 = vmatprep.subr.bf16.mxu0 0
        %1912 = vmatpush1.bf16.msra.mxu0 %v1903
        %1913 = vmatprep.subr.bf16.mxu0 0
        %1914 = vmatpush1.bf16.msra.mxu0 0
        %1915 = vmatprep.subr.bf16.mxu0 0
        %1916 = vmatpush1.bf16.msra.mxu0 0
        %1917 = vmatprep.subr.bf16.mxu0 0
        %1918 = vmatpush1.bf16.msra.mxu0 0
        %1919 = vmatprep.subr.bf16.mxu0 0
        %1920 = vmatpush1.bf16.msra.mxu0 0
        %1921 = vmatprep.subr.bf16.mxu0 0
        %1922 = vmatpush1.bf16.msra.mxu0 0
        %1923 = vmatprep.subr.bf16.mxu0 0
        %1924 = vmatpush1.bf16.msra.mxu0 0
        %1925 = vmatprep.subr.bf16.mxu0 0
        %1926 = vmatpush1.bf16.msra.mxu0 0
        %1927 = vmatprep.subr.bf16.mxu0 0
        %1928 = vmatpush1.bf16.msra.mxu0 0
        %1929 = vmatprep.subr.bf16.mxu0 0
        %1930 = vmatpush1.bf16.msra.mxu0 0
        %1931 = vmatprep.subr.bf16.mxu0 0
        %1932 = vmatpush1.bf16.msra.mxu0 0
        %1933 = vmatprep.subr.bf16.mxu0 0
        %1934 = vmatpush1.bf16.msra.mxu0 0
        %1935 = vmatprep.subr.bf16.mxu0 0
        %1936 = vmatpush1.bf16.msra.mxu0 0
        %1937 = vmatprep.subr.bf16.mxu0 0
        %1938 = vmatpush1.bf16.msra.mxu0 0
        %1939 = vmatprep.subr.bf16.mxu0 0
        %1940 = vmatpush1.bf16.msra.mxu0 0
        %1941 = vmatprep.mubr.bf16.mxu0 0
        %1942 = vmatmul.mubr.bf16.gmra.mrb[0].mxu0 %v1038
        %v1943 = vpop.f32.mrb[0].mxu0
        %v1944 = vadd.f32 0.0, %v1943
        %v1945 = vpop.f32.mrb[0].mxu0
        %v1946 = vpop.f32.mrb[0].mxu0
        %v1947 = vadd.f32 0.0, %v1946
        %v1948 = vpop.f32.mrb[0].mxu0
        %1949 = vmatprep.mubr.bf16.mxu0 0
        %1950 = vmatmul.mubr.bf16.gmra.mrb[0].mxu0 %v1041
        %v1951 = vpop.f32.mrb[0].mxu0
        %v1952 = vadd.f32 0.0, %v1951
        %v1953 = vpop.f32.mrb[0].mxu0
        %v1954 = vpop.f32.mrb[0].mxu0
        %v1955 = vadd.f32 0.0, %v1954
        %v1956 = vpop.f32.mrb[0].mxu0
        %1957 = vmatprep.mubr.bf16.mxu0 0
        %1958 = vmatmul.mubr.bf16.gmra.mrb[0].mxu0 %v1044
        %v1959 = vpop.f32.mrb[0].mxu0
        %v1960 = vadd.f32 0.0, %v1959
        %v1961 = vpop.f32.mrb[0].mxu0
        %v1962 = vpop.f32.mrb[0].mxu0
        %v1963 = vadd.f32 0.0, %v1962
        %v1964 = vpop.f32.mrb[0].mxu0
        %1965 = vmatprep.mubr.bf16.mxu0 0
        %1966 = vmatmul.mubr.bf16.gmra.mrb[0].mxu0 %v1047
        %v1967 = vpop.f32.mrb[0].mxu0
        %v1968 = vadd.f32 0.0, %v1967
        %v1969 = vpop.f32.mrb[0].mxu0
        %v1970 = vpop.f32.mrb[0].mxu0
        %v1971 = vadd.f32 0.0, %v1970
        %v1972 = vpop.f32.mrb[0].mxu0
        %1973 = vmatprep.mubr.bf16.mxu0 0
        %1974 = vmatmul.mubr.bf16.gmra.mrb[0].mxu0 %v1050
        %v1975 = vpop.f32.mrb[0].mxu0
        %v1976 = vadd.f32 0.0, %v1975
        %v1977 = vpop.f32.mrb[0].mxu0
        %v1978 = vpop.f32.mrb[0].mxu0
        %v1979 = vadd.f32 0.0, %v1978
        %v1980 = vpop.f32.mrb[0].mxu0
        %1981 = vmatprep.mubr.bf16.mxu0 0
        %1982 = vmatmul.mubr.bf16.gmra.mrb[0].mxu0 %v1053
        %v1983 = vpop.f32.mrb[0].mxu0
        %v1984 = vadd.f32 0.0, %v1983
        %v1985 = vpop.f32.mrb[0].mxu0
        %v1986 = vpop.f32.mrb[0].mxu0
        %v1987 = vadd.f32 0.0, %v1986
        %v1988 = vpop.f32.mrb[0].mxu0
        %1989 = vmatprep.mubr.bf16.mxu0 0
        %1990 = vmatmul.mubr.bf16.gmra.mrb[0].mxu0 %v1480
        %v1991 = vpop.f32.mrb[0].mxu0
        %v1992 = vadd.f32 0.0, %v1991
        %v1993 = vpop.f32.mrb[0].mxu0
        %v1994 = vpop.f32.mrb[0].mxu0
        %v1995 = vadd.f32 0.0, %v1994
        %v1996 = vpop.f32.mrb[0].mxu0
        %1997 = vmatprep.mubr.bf16.mxu0 0
        %1998 = vmatmul.mubr.bf16.gmra.mrb[0].mxu0 %v1907
        %v1999 = vpop.f32.mrb[0].mxu0
        %v2000 = vadd.f32 0.0, %v1999
        %v2001 = vpop.f32.mrb[0].mxu0
        %v2002 = vpop.f32.mrb[0].mxu0
        %v2003 = vadd.f32 0.0, %v2002
        %v2004 = vpop.f32.mrb[0].mxu0
        %2005 = vdwg.mxu0
        %v2006 = vadd.f32 %v1867, %v1944
        %v2007 = vadd.f32 %v1868, %v1947
        %v2008 = vadd.f32 %v1869, %v1952
        %v2009 = vadd.f32 %v1870, %v1955
        %v2010 = vadd.f32 %v1871, %v1960
        %v2011 = vadd.f32 %v1872, %v1963
        %v2012 = vadd.f32 %v1873, %v1968
        %v2013 = vadd.f32 %v1874, %v1971
        %v2014 = vadd.f32 %v1875, %v1976
        %v2015 = vadd.f32 %v1876, %v1979
        %v2016 = vadd.f32 %v1877, %v1984
        %v2017 = vadd.f32 %v1878, %v1987
        %v2018 = vadd.f32 %v1879, %v1992
        %v2019 = vadd.f32 %v1880, %v1995
        %v2020 = vadd.f32 %v1881, %v2000
        %v2021 = vadd.f32 %v1882, %v2003
        %v2022 = vld [vmem:[%s3] sm:$0x1]
        %v2024 = vlaneseq
        %v2025 = vshrl.u32 %v2024, 7
        %v2026 = vsub.s32 0, %v2025
        %v2027 = vrot.slane %v2022, %v2026
        %v2029 = vmul.f32 %v2006, %v2027
        %v2030 = vmul.f32 %v2007, %v2027
        %v2031 = vmul.f32 %v2008, %v2027
        %v2032 = vmul.f32 %v2009, %v2027
        %v2033 = vmul.f32 %v2010, %v2027
        %v2034 = vmul.f32 %v2011, %v2027
        %v2035 = vmul.f32 %v2012, %v2027
        %v2036 = vmul.f32 %v2013, %v2027
        %v2037 = vmul.f32 %v2014, %v2027
        %v2038 = vmul.f32 %v2015, %v2027
        %v2039 = vmul.f32 %v2016, %v2027
        %v2040 = vmul.f32 %v2017, %v2027
        %v2041 = vmul.f32 %v2018, %v2027
        %v2042 = vmul.f32 %v2019, %v2027
        %v2043 = vmul.f32 %v2020, %v2027
        %v2044 = vmul.f32 %v2021, %v2027
        %v2045 = vld [vmem:[%s4] sm:$0x1]
        %v2047 = vlaneseq
        %v2048 = vshrl.u32 %v2047, 7
        %v2049 = vsub.s32 0, %v2048
        %v2050 = vrot.slane %v2045, %v2049
        %v2052 = vadd.f32 %v2029, %v2050
        %v2053 = vadd.f32 %v2030, %v2050
        %v2054 = vadd.f32 %v2031, %v2050
        %v2055 = vadd.f32 %v2032, %v2050
        %v2056 = vadd.f32 %v2033, %v2050
        %v2057 = vadd.f32 %v2034, %v2050
        %v2058 = vadd.f32 %v2035, %v2050
        %v2059 = vadd.f32 %v2036, %v2050
        %v2060 = vadd.f32 %v2037, %v2050
        %v2061 = vadd.f32 %v2038, %v2050
        %v2062 = vadd.f32 %v2039, %v2050
        %v2063 = vadd.f32 %v2040, %v2050
        %v2064 = vadd.f32 %v2041, %v2050
        %v2065 = vadd.f32 %v2042, %v2050
        %v2066 = vadd.f32 %v2043, %v2050
        %v2067 = vadd.f32 %v2044, %v2050
        %vm2068 = vcmp.ge.f32.partialorder %v2052, 0.0
        %vm2069 = vcmp.ge.f32.partialorder %v2053, 0.0
        %vm2070 = vcmp.ge.f32.partialorder %v2054, 0.0
        %vm2071 = vcmp.ge.f32.partialorder %v2055, 0.0
        %vm2072 = vcmp.ge.f32.partialorder %v2056, 0.0
        %vm2073 = vcmp.ge.f32.partialorder %v2057, 0.0
        %vm2074 = vcmp.ge.f32.partialorder %v2058, 0.0
        %vm2075 = vcmp.ge.f32.partialorder %v2059, 0.0
        %vm2076 = vcmp.ge.f32.partialorder %v2060, 0.0
        %vm2077 = vcmp.ge.f32.partialorder %v2061, 0.0
        %vm2078 = vcmp.ge.f32.partialorder %v2062, 0.0
        %vm2079 = vcmp.ge.f32.partialorder %v2063, 0.0
        %vm2080 = vcmp.ge.f32.partialorder %v2064, 0.0
        %vm2081 = vcmp.ge.f32.partialorder %v2065, 0.0
        %vm2082 = vcmp.ge.f32.partialorder %v2066, 0.0
        %vm2083 = vcmp.ge.f32.partialorder %v2067, 0.0
        %v2084 = vmul.f32 %v2052, 0.01
        %v2085 = vmul.f32 %v2053, 0.01
        %v2086 = vmul.f32 %v2054, 0.01
        %v2087 = vmul.f32 %v2055, 0.01
        %v2088 = vmul.f32 %v2056, 0.01
        %v2089 = vmul.f32 %v2057, 0.01
        %v2090 = vmul.f32 %v2058, 0.01
        %v2091 = vmul.f32 %v2059, 0.01
        %v2092 = vmul.f32 %v2060, 0.01
        %v2093 = vmul.f32 %v2061, 0.01
        %v2094 = vmul.f32 %v2062, 0.01
        %v2095 = vmul.f32 %v2063, 0.01
        %v2096 = vmul.f32 %v2064, 0.01
        %v2097 = vmul.f32 %v2065, 0.01
        %v2098 = vmul.f32 %v2066, 0.01
        %v2099 = vmul.f32 %v2067, 0.01
        %v2100 = vsel %vm2068, %v2052, %v2084
        %v2101 = vsel %vm2069, %v2053, %v2085
        %v2102 = vsel %vm2070, %v2054, %v2086
        %v2103 = vsel %vm2071, %v2055, %v2087
        %v2104 = vsel %vm2072, %v2056, %v2088
        %v2105 = vsel %vm2073, %v2057, %v2089
        %v2106 = vsel %vm2074, %v2058, %v2090
        %v2107 = vsel %vm2075, %v2059, %v2091
        %v2108 = vsel %vm2076, %v2060, %v2092
        %v2109 = vsel %vm2077, %v2061, %v2093
        %v2110 = vsel %vm2078, %v2062, %v2094
        %v2111 = vsel %vm2079, %v2063, %v2095
        %v2112 = vsel %vm2080, %v2064, %v2096
        %v2113 = vsel %vm2081, %v2065, %v2097
        %v2114 = vsel %vm2082, %v2066, %v2098
        %v2115 = vsel %vm2083, %v2067, %v2099
        %2116 = vst.msk [vmem:[%s297] sm:$0xff] %vm633, %v2100
        %2117 = vst.msk [vmem:[%s297 + $0x8] sm:$0xff] %vm633, %v2101
        %2118 = vst.msk [vmem:[%s297 + $0x10] sm:$0xff] %vm633, %v2102
        %2119 = vst.msk [vmem:[%s297 + $0x18] sm:$0xff] %vm633, %v2103
        %2120 = vst.msk [vmem:[%s297 + $0x20] sm:$0xff] %vm633, %v2104
        %2121 = vst.msk [vmem:[%s297 + $0x28] sm:$0xff] %vm633, %v2105
        %2122 = vst.msk [vmem:[%s297 + $0x30] sm:$0xff] %vm633, %v2106
        %2123 = vst.msk [vmem:[%s297 + $0x38] sm:$0xff] %vm633, %v2107
        %2124 = vst.msk [vmem:[%s297 + $0x40] sm:$0xff] %vm633, %v2108
        %2125 = vst.msk [vmem:[%s297 + $0x48] sm:$0xff] %vm633, %v2109
        %2126 = vst.msk [vmem:[%s297 + $0x50] sm:$0xff] %vm633, %v2110
        %2127 = vst.msk [vmem:[%s297 + $0x58] sm:$0xff] %vm633, %v2111
        %2128 = vst.msk [vmem:[%s297 + $0x60] sm:$0xff] %vm633, %v2112
        %2129 = vst.msk [vmem:[%s297 + $0x68] sm:$0xff] %vm633, %v2113
        %2130 = vst.msk [vmem:[%s297 + $0x70] sm:$0xff] %vm633, %v2114
        %2131 = vst.msk [vmem:[%s297 + $0x78] sm:$0xff] %vm633, %v2115
        %s2132 = sand.u32 %s164, 1
        %s2133 = scalar_lea.sflag [#allocation3], %s2132
        %s2134 = sand.u32 %s164, 1
        %s2135 = smul.addr %s2134, 128
        %s2136 = scalar_lea.vmem [#allocation2], %s2135
        // Predicated region
        $region41: #{upsample_bn_forward.3} parent=39 // pred_check
          %p2137 = pneg %p174
        $region42: #{upsample_bn_forward.3} parent=39 // pred_check_branch
          %2139 = sbr.rel (%p2137) target = $region44
        $region43: #{upsample_bn_forward.3} parent=39 // pred_region
          %s2140 = smul.u32 16, %s24
          %s2142 = ssub.s32 2048, 2048
          %2143 = vsyncadd %s2133, %s2142
          %s2144 = smul.addr %s23, 32
          %s2145 = sadd.s32 %s2140, %s2144
          %s2146 = smul.addr %s2145, 128
          %s2147 = scalar_lea.hbm %s5, %s2146
          %s2148 = sshll.u32 %s2136, 4
          %s2149 = int_to_ptr.vmem [resolvable:$true] %s2148
          %2154 = dma.vmem_to_hbm [thread:$0]  %s2149, 2048, %s2147, %s2133, 128, 128, 8
        $region44: #{upsample_bn_forward.3} parent=39 // pred_fallthru
          _
      $region40: #{upsample_bn_forward.3} parent=5 // pred_fallthru
        _
      %p2155 = scmp.le.s32.totalorder 2, %s14
      // Predicated region
      $region45: #{upsample_bn_forward.3} parent=5 // pred_check
        %p2156 = pneg %p2155
      $region46: #{upsample_bn_forward.3} parent=5 // pred_check_branch
        %2158 = sbr.rel (%p2156) target = $region48
      $region47: #{upsample_bn_forward.3} parent=5 // pred_region
        %s2159 = ssub.s32 %s14, 2
        // Predicated region
        $region49: #{upsample_bn_forward.3} parent=47 // pred_check
          %p2160 = pneg %p180
        $region50: #{upsample_bn_forward.3} parent=47 // pred_check_branch
          %2162 = sbr.rel (%p2160) target = $region52
        $region51: #{upsample_bn_forward.3} parent=47 // pred_region
          %s2163 = sand.u32 %s165, 1
          %s2164 = scalar_lea.sflag [#allocation3], %s2163
          %s2165 = sand.u32 %s165, 1
          %s2166 = smul.addr %s2165, 128
          %s2167 = scalar_lea.vmem [#allocation2], %s2166
          %2168 = dma.done %s2164, 2048
        $region52: #{upsample_bn_forward.3} parent=47 // pred_fallthru
          _
      $region48: #{upsample_bn_forward.3} parent=5 // pred_fallthru
        _
    $region6: #{upsample_bn_forward.3} parent=1 // loop_footer
      %s18 = sadd.s32 1, %s14
    $region7: #{upsample_bn_forward.3} parent=1 // loop_footer_branch
      %13 = sbr.rel target = $region3
    $region8: #{upsample_bn_forward.3} parent=1 // loop_exit
      _
    %2169 = vsyncpa [#allocation3], 1
    %s2170 = scalar_lea.sflag [#allocation3], 1
    %2171 = vsyncpa %s2170, 1

// kernel: upsample_bn_forward.2
$region0: #{upsample_bn_forward.2}
  #allocation0 [shape = 'u32[]', space=smem, size = 0x4, offset = 0x4, fixed_abs, tag = 'smem constant byte address 0x4 - core index']
  #allocation1 [shape = 'u32[144,128]{1,0:T(1,128)}', space=vmem, size = 0x12000, scoped, tag = 'internal scratch']
  %s0 = inlined_call_operand.vmem [shape: bf16[2,18,18,16], index: 0, kind: input, shape index: {}, may-alias: {0,1}]
  %s1 = inlined_call_operand.vmem [shape: bf16[2,18,18,16], index: 1, kind: input, shape index: {}, may-alias: {0,1}]
  %s2 = inlined_call_operand.vmem [shape: bf16[2,18,18,16], index: 2, kind: input, shape index: {}, may-alias: {2,3}]
  %s3 = inlined_call_operand.vmem [shape: bf16[2,18,18,16], index: 3, kind: input, shape index: {}, may-alias: {2,3}]
  %s4 = inlined_call_operand.vmem [shape: bf16[3,3,16,32], index: 4, kind: input, shape index: {}]
  %s5 = inlined_call_operand.vmem [shape: bf16[3,3,16,32], index: 5, kind: input, shape index: {}]
  %s6 = inlined_call_operand.vmem [shape: f32[1,32], index: 6, kind: input, shape index: {}]
  %s7 = inlined_call_operand.vmem [shape: f32[1,32], index: 7, kind: input, shape index: {}]
  %s8 = inlined_call_operand.vmem [shape: bf16[2,256,32], index: 8, kind: output, shape index: {}]
  %s9 = sld [smem:[#allocation0]]
  $region65: #{upsample_bn_forward.2} parent=0
    _
  %s11 = ssub.s32 1, %s9
  %s12 = scalar_select 0, %s11, %s9
  loop: start=0, step=1, limit=6
  $region2: #{upsample_bn_forward.2} parent=0 // loop_pre_header
    _
  $region3: #{upsample_bn_forward.2} parent=0 // loop_header
    %s14 = sphi 0, %s18
    %p15 = scmp.ge.s32.totalorder %s14, 6
    %s21 = sphi 0, %s33
    %s22 = sphi 0, %s29
    %s23 = sphi 0, %s21
    %s24 = sphi 0, %s22
    %s25 = sphi 0, %s23
    %s26 = sphi 0, %s24
    %s38 = sphi 0, %s40
    %s41 = sphi 0, %s38
    %s42 = sphi 0, %s41
    %s58 = sphi 0, %s42
    %s70 = sphi 0, %s72
    %s73 = sphi 0, %s70
    %s74 = sphi 0, %s73
    %s90 = sphi 0, %s74
    %s98 = sphi 0, %s100
    %s101 = sphi 0, %s98
    %s102 = sphi 0, %s101
    %s118 = sphi 0, %s102
    %s130 = sphi 0, %s132
    %s133 = sphi 0, %s130
    %s134 = sphi 0, %s133
    %s150 = sphi 0, %s134
    %s154 = sphi 0, %s154
    %s156 = sphi 0, %s154
    %s157 = sphi 0, %s156
    %s171 = sphi 0, %s157
    %s175 = sphi 0, %s175
    %s177 = sphi 0, %s175
    %s178 = sphi 0, %s177
    %s192 = sphi 0, %s178
    %s196 = sphi 0, %s196
    %s198 = sphi 0, %s196
    %s199 = sphi 0, %s198
    %s213 = sphi 0, %s199
    %s217 = sphi 0, %s217
    %s219 = sphi 0, %s217
    %s220 = sphi 0, %s219
    %s234 = sphi 0, %s220
    %s242 = sphi 0, %s244
    %s245 = sphi 0, %s242
    %s246 = sphi 0, %s245
    %s262 = sphi 0, %s246
  $region4: #{upsample_bn_forward.2} parent=0 // loop_header_branch
    %17 = sbr.rel (%p15) target = $region8
  $region5: #{upsample_bn_forward.2} parent=0 // loop_body
    %s19 = ssub.s32 %s14, 1
    %s20 = ssub.s32 %s14, 2
    %s27 = sadd.s32 1, %s22
    %p28 = scmp.ge.s32.totalorder %s27, 2
    %s29 = scalar_select %p28, 0, %s27
    %s30 = sadd.s32 1, %s21
    %s31 = scalar_select %p28, %s30, %s21
    %p32 = scmp.ge.s32.totalorder %s31, 2
    %s33 = scalar_select %p32, 0, %s31
    %s34 = ssub.s32 %s21, %s33
    %s35 = ssub.s32 %s22, %s29
    %s36 = sor.u32 %s34, %s35
    %p37 = scmp.eq.s32.totalorder %s36, 0
    %s39 = sadd.s32 %s38, 1
    %s40 = scalar_select %p37, %s38, %s39
    %p43 = pneg %p37
    %p44 = scmp.eq.s32.totalorder %s14, 3
    %p45 = por %p43, %p44
    %p46 = scmp.ne.s32.totalorder %s38, %s41
    %p47 = scmp.eq.s32.totalorder %s14, 0
    %p48 = por %p46, %p47
    %p49 = scmp.ne.s32.totalorder %s38, %s41
    %p50 = scmp.eq.s32.totalorder %s19, 3
    %p51 = por %p49, %p50
    %p52 = scmp.ne.s32.totalorder %s41, %s42
    %p53 = scmp.eq.s32.totalorder %s19, 0
    %p54 = por %p52, %p53
    %p55 = scmp.ne.s32.totalorder %s41, %s42
    %p56 = scmp.eq.s32.totalorder %s20, 3
    %p57 = por %p55, %p56
    %p59 = scmp.ne.s32.totalorder %s42, %s58
    %p60 = scmp.eq.s32.totalorder %s20, 0
    %p61 = por %p59, %p60
    %s62 = sadd.s32 %s22, 1
    %s63 = smul.u32 %s62, 4
    %s64 = sadd.s32 %s29, 1
    %s65 = smul.u32 %s64, 4
    %s66 = ssub.s32 %s21, %s33
    %s67 = ssub.s32 %s63, %s65
    %s68 = sor.u32 %s66, %s67
    %p69 = scmp.eq.s32.totalorder %s68, 0
    %s71 = sadd.s32 %s70, 1
    %s72 = scalar_select %p69, %s70, %s71
    %p75 = pneg %p69
    %p76 = scmp.eq.s32.totalorder %s14, 3
    %p77 = por %p75, %p76
    %p78 = scmp.ne.s32.totalorder %s70, %s73
    %p79 = scmp.eq.s32.totalorder %s14, 0
    %p80 = por %p78, %p79
    %p81 = scmp.ne.s32.totalorder %s70, %s73
    %p82 = scmp.eq.s32.totalorder %s19, 3
    %p83 = por %p81, %p82
    %p84 = scmp.ne.s32.totalorder %s73, %s74
    %p85 = scmp.eq.s32.totalorder %s19, 0
    %p86 = por %p84, %p85
    %p87 = scmp.ne.s32.totalorder %s73, %s74
    %p88 = scmp.eq.s32.totalorder %s20, 3
    %p89 = por %p87, %p88
    %p91 = scmp.ne.s32.totalorder %s74, %s90
    %p92 = scmp.eq.s32.totalorder %s20, 0
    %p93 = por %p91, %p92
    %s94 = ssub.s32 %s21, %s33
    %s95 = ssub.s32 %s22, %s29
    %s96 = sor.u32 %s94, %s95
    %p97 = scmp.eq.s32.totalorder %s96, 0
    %s99 = sadd.s32 %s98, 1
    %s100 = scalar_select %p97, %s98, %s99
    %p103 = pneg %p97
    %p104 = scmp.eq.s32.totalorder %s14, 3
    %p105 = por %p103, %p104
    %p106 = scmp.ne.s32.totalorder %s98, %s101
    %p107 = scmp.eq.s32.totalorder %s14, 0
    %p108 = por %p106, %p107
    %p109 = scmp.ne.s32.totalorder %s98, %s101
    %p110 = scmp.eq.s32.totalorder %s19, 3
    %p111 = por %p109, %p110
    %p112 = scmp.ne.s32.totalorder %s101, %s102
    %p113 = scmp.eq.s32.totalorder %s19, 0
    %p114 = por %p112, %p113
    %p115 = scmp.ne.s32.totalorder %s101, %s102
    %p116 = scmp.eq.s32.totalorder %s20, 3
    %p117 = por %p115, %p116
    %p119 = scmp.ne.s32.totalorder %s102, %s118
    %p120 = scmp.eq.s32.totalorder %s20, 0
    %p121 = por %p119, %p120
    %s122 = sadd.s32 %s22, 1
    %s123 = smul.u32 %s122, 4
    %s124 = sadd.s32 %s29, 1
    %s125 = smul.u32 %s124, 4
    %s126 = ssub.s32 %s21, %s33
    %s127 = ssub.s32 %s123, %s125
    %s128 = sor.u32 %s126, %s127
    %p129 = scmp.eq.s32.totalorder %s128, 0
    %s131 = sadd.s32 %s130, 1
    %s132 = scalar_select %p129, %s130, %s131
    %p135 = pneg %p129
    %p136 = scmp.eq.s32.totalorder %s14, 3
    %p137 = por %p135, %p136
    %p138 = scmp.ne.s32.totalorder %s130, %s133
    %p139 = scmp.eq.s32.totalorder %s14, 0
    %p140 = por %p138, %p139
    %p141 = scmp.ne.s32.totalorder %s130, %s133
    %p142 = scmp.eq.s32.totalorder %s19, 3
    %p143 = por %p141, %p142
    %p144 = scmp.ne.s32.totalorder %s133, %s134
    %p145 = scmp.eq.s32.totalorder %s19, 0
    %p146 = por %p144, %p145
    %p147 = scmp.ne.s32.totalorder %s133, %s134
    %p148 = scmp.eq.s32.totalorder %s20, 3
    %p149 = por %p147, %p148
    %p151 = scmp.ne.s32.totalorder %s134, %s150
    %p152 = scmp.eq.s32.totalorder %s20, 0
    %p153 = por %p151, %p152
    %s155 = sadd.s32 %s154, 1
    %p158 = scmp.eq.s32.totalorder %s14, 3
    %p159 = scmp.ne.s32.totalorder %s154, %s156
    %p160 = scmp.eq.s32.totalorder %s14, 0
    %p161 = por %p159, %p160
    %p162 = scmp.ne.s32.totalorder %s154, %s156
    %p163 = scmp.eq.s32.totalorder %s19, 3
    %p164 = por %p162, %p163
    %p165 = scmp.ne.s32.totalorder %s156, %s157
    %p166 = scmp.eq.s32.totalorder %s19, 0
    %p167 = por %p165, %p166
    %p168 = scmp.ne.s32.totalorder %s156, %s157
    %p169 = scmp.eq.s32.totalorder %s20, 3
    %p170 = por %p168, %p169
    %p172 = scmp.ne.s32.totalorder %s157, %s171
    %p173 = scmp.eq.s32.totalorder %s20, 0
    %p174 = por %p172, %p173
    %s176 = sadd.s32 %s175, 1
    %p179 = scmp.eq.s32.totalorder %s14, 3
    %p180 = scmp.ne.s32.totalorder %s175, %s177
    %p181 = scmp.eq.s32.totalorder %s14, 0
    %p182 = por %p180, %p181
    %p183 = scmp.ne.s32.totalorder %s175, %s177
    %p184 = scmp.eq.s32.totalorder %s19, 3
    %p185 = por %p183, %p184
    %p186 = scmp.ne.s32.totalorder %s177, %s178
    %p187 = scmp.eq.s32.totalorder %s19, 0
    %p188 = por %p186, %p187
    %p189 = scmp.ne.s32.totalorder %s177, %s178
    %p190 = scmp.eq.s32.totalorder %s20, 3
    %p191 = por %p189, %p190
    %p193 = scmp.ne.s32.totalorder %s178, %s192
    %p194 = scmp.eq.s32.totalorder %s20, 0
    %p195 = por %p193, %p194
    %s197 = sadd.s32 %s196, 1
    %p200 = scmp.eq.s32.totalorder %s14, 3
    %p201 = scmp.ne.s32.totalorder %s196, %s198
    %p202 = scmp.eq.s32.totalorder %s14, 0
    %p203 = por %p201, %p202
    %p204 = scmp.ne.s32.totalorder %s196, %s198
    %p205 = scmp.eq.s32.totalorder %s19, 3
    %p206 = por %p204, %p205
    %p207 = scmp.ne.s32.totalorder %s198, %s199
    %p208 = scmp.eq.s32.totalorder %s19, 0
    %p209 = por %p207, %p208
    %p210 = scmp.ne.s32.totalorder %s198, %s199
    %p211 = scmp.eq.s32.totalorder %s20, 3
    %p212 = por %p210, %p211
    %p214 = scmp.ne.s32.totalorder %s199, %s213
    %p215 = scmp.eq.s32.totalorder %s20, 0
    %p216 = por %p214, %p215
    %s218 = sadd.s32 %s217, 1
    %p221 = scmp.eq.s32.totalorder %s14, 3
    %p222 = scmp.ne.s32.totalorder %s217, %s219
    %p223 = scmp.eq.s32.totalorder %s14, 0
    %p224 = por %p222, %p223
    %p225 = scmp.ne.s32.totalorder %s217, %s219
    %p226 = scmp.eq.s32.totalorder %s19, 3
    %p227 = por %p225, %p226
    %p228 = scmp.ne.s32.totalorder %s219, %s220
    %p229 = scmp.eq.s32.totalorder %s19, 0
    %p230 = por %p228, %p229
    %p231 = scmp.ne.s32.totalorder %s219, %s220
    %p232 = scmp.eq.s32.totalorder %s20, 3
    %p233 = por %p231, %p232
    %p235 = scmp.ne.s32.totalorder %s220, %s234
    %p236 = scmp.eq.s32.totalorder %s20, 0
    %p237 = por %p235, %p236
    %s238 = ssub.s32 %s21, %s33
    %s239 = ssub.s32 %s22, %s29
    %s240 = sor.u32 %s238, %s239
    %p241 = scmp.eq.s32.totalorder %s240, 0
    %s243 = sadd.s32 %s242, 1
    %s244 = scalar_select %p241, %s242, %s243
    %p247 = pneg %p241
    %p248 = scmp.eq.s32.totalorder %s14, 3
    %p249 = por %p247, %p248
    %p250 = scmp.ne.s32.totalorder %s242, %s245
    %p251 = scmp.eq.s32.totalorder %s14, 0
    %p252 = por %p250, %p251
    %p253 = scmp.ne.s32.totalorder %s242, %s245
    %p254 = scmp.eq.s32.totalorder %s19, 3
    %p255 = por %p253, %p254
    %p256 = scmp.ne.s32.totalorder %s245, %s246
    %p257 = scmp.eq.s32.totalorder %s19, 0
    %p258 = por %p256, %p257
    %p259 = scmp.ne.s32.totalorder %s245, %s246
    %p260 = scmp.eq.s32.totalorder %s20, 3
    %p261 = por %p259, %p260
    %p263 = scmp.ne.s32.totalorder %s246, %s262
    %p264 = scmp.eq.s32.totalorder %s20, 0
    %p265 = por %p263, %p264
    %p266 = scmp.le.s32.totalorder 1, %s14
    %p267 = scmp.lt.s32.totalorder %s14, 5
    %p268 = pnand %p266, %p267
    %p269 = pneg %p268
    // Predicated region
    $region9: #{upsample_bn_forward.2} parent=5 // pred_check
      _
    $region10: #{upsample_bn_forward.2} parent=5 // pred_check_branch
      %271 = sbr.rel (%p268) target = $region12
    $region11: #{upsample_bn_forward.2} parent=5 // pred_region
      %s272 = ssub.s32 %s14, 1
      // Predicated region
      $region13: #{upsample_bn_forward.2} parent=11 // pred_check
        %p273 = pneg %p167
      $region14: #{upsample_bn_forward.2} parent=11 // pred_check_branch
        %275 = sbr.rel (%p273) target = $region16
      $region15: #{upsample_bn_forward.2} parent=11 // pred_region
        _
      $region16: #{upsample_bn_forward.2} parent=11 // pred_fallthru
        _
      // Predicated region
      $region17: #{upsample_bn_forward.2} parent=11 // pred_check
        %p276 = pneg %p188
      $region18: #{upsample_bn_forward.2} parent=11 // pred_check_branch
        %278 = sbr.rel (%p276) target = $region20
      $region19: #{upsample_bn_forward.2} parent=11 // pred_region
        _
      $region20: #{upsample_bn_forward.2} parent=11 // pred_fallthru
        _
      // Predicated region
      $region21: #{upsample_bn_forward.2} parent=11 // pred_check
        %p279 = pneg %p209
      $region22: #{upsample_bn_forward.2} parent=11 // pred_check_branch
        %281 = sbr.rel (%p279) target = $region24
      $region23: #{upsample_bn_forward.2} parent=11 // pred_region
        _
      $region24: #{upsample_bn_forward.2} parent=11 // pred_fallthru
        _
      // Predicated region
      $region25: #{upsample_bn_forward.2} parent=11 // pred_check
        %p282 = pneg %p230
      $region26: #{upsample_bn_forward.2} parent=11 // pred_check_branch
        %284 = sbr.rel (%p282) target = $region28
      $region27: #{upsample_bn_forward.2} parent=11 // pred_region
        _
      $region28: #{upsample_bn_forward.2} parent=11 // pred_fallthru
        _
    $region12: #{upsample_bn_forward.2} parent=5 // pred_fallthru
      _
    %p285 = scmp.lt.s32.totalorder %s14, 4
    // Predicated region
    $region29: #{upsample_bn_forward.2} parent=5 // pred_check
      %p286 = pneg %p285
    $region30: #{upsample_bn_forward.2} parent=5 // pred_check_branch
      %288 = sbr.rel (%p286) target = $region32
    $region31: #{upsample_bn_forward.2} parent=5 // pred_region
      // Predicated region
      $region33: #{upsample_bn_forward.2} parent=31 // pred_check
        %p289 = pneg %p48
      $region34: #{upsample_bn_forward.2} parent=31 // pred_check_branch
        %291 = sbr.rel (%p289) target = $region36
      $region35: #{upsample_bn_forward.2} parent=31 // pred_region
        %s292 = smul.u32 8, %s22
        %s293 = ssub.s32 18, %s292
        %p294 = scmp.lt.s32.totalorder %s293, 8
        %s295 = scalar_select %p294, %s293, 8
        %s296 = smul.u32 64, %s295
        %s297 = smul.u32 %s296, 3
        %p298 = scmp.lt.s32.totalorder %s21, 1
        %s299 = scalar_select %p298, %s21, 1
        %p300 = scmp.lt.s32.totalorder %s292, 17
        %s301 = scalar_select %p300, %s292, 17
        %s302 = smul.addr %s301, 3
        %s303 = smul.addr %s299, 54
        %s304 = sadd.s32 %s302, %s303
        %s305 = smul.addr %s304, 4
        %s306 = scalar_lea.vmem %s0, %s305
        %s307 = smul.u32 8, %s22
        %s308 = ssub.s32 18, %s307
        %p309 = scmp.lt.s32.totalorder %s308, 8
        %s310 = scalar_select %p309, %s308, 8
        %s311 = smul.u32 64, %s310
        %s312 = smul.u32 %s311, 3
      $region36: #{upsample_bn_forward.2} parent=31 // pred_fallthru
        _
      // Predicated region
      $region37: #{upsample_bn_forward.2} parent=31 // pred_check
        %p313 = pneg %p80
      $region38: #{upsample_bn_forward.2} parent=31 // pred_check_branch
        %315 = sbr.rel (%p313) target = $region40
      $region39: #{upsample_bn_forward.2} parent=31 // pred_region
        %s316 = sadd.s32 %s22, 1
        %s317 = smul.u32 %s316, 4
        %s318 = smul.u32 2, %s317
        %p319 = scmp.lt.s32.totalorder %s21, 1
        %s320 = scalar_select %p319, %s21, 1
        %p321 = scmp.lt.s32.totalorder %s318, 17
        %s322 = scalar_select %p321, %s318, 17
        %s323 = smul.addr %s322, 3
        %s324 = smul.addr %s320, 54
        %s325 = sadd.s32 %s323, %s324
        %s326 = smul.addr %s325, 4
        %s327 = scalar_lea.vmem %s1, %s326
        %s328 = sadd.s32 %s22, 1
        %s329 = smul.u32 %s328, 4
        %s330 = smul.u32 2, %s329
      $region40: #{upsample_bn_forward.2} parent=31 // pred_fallthru
        _
      // Predicated region
      $region41: #{upsample_bn_forward.2} parent=31 // pred_check
        %p331 = pneg %p108
      $region42: #{upsample_bn_forward.2} parent=31 // pred_check_branch
        %333 = sbr.rel (%p331) target = $region44
      $region43: #{upsample_bn_forward.2} parent=31 // pred_region
        %s334 = smul.u32 8, %s22
        %s335 = ssub.s32 18, %s334
        %p336 = scmp.lt.s32.totalorder %s335, 8
        %s337 = scalar_select %p336, %s335, 8
        %s338 = smul.u32 64, %s337
        %s339 = smul.u32 %s338, 3
        %p340 = scmp.lt.s32.totalorder %s21, 1
        %s341 = scalar_select %p340, %s21, 1
        %p342 = scmp.lt.s32.totalorder %s334, 17
        %s343 = scalar_select %p342, %s334, 17
        %s344 = smul.addr %s343, 3
        %s345 = smul.addr %s341, 54
        %s346 = sadd.s32 %s344, %s345
        %s347 = smul.addr %s346, 4
        %s348 = scalar_lea.vmem %s2, %s347
        %s349 = smul.u32 8, %s22
        %s350 = ssub.s32 18, %s349
        %p351 = scmp.lt.s32.totalorder %s350, 8
        %s352 = scalar_select %p351, %s350, 8
        %s353 = smul.u32 64, %s352
        %s354 = smul.u32 %s353, 3
      $region44: #{upsample_bn_forward.2} parent=31 // pred_fallthru
        _
      // Predicated region
      $region45: #{upsample_bn_forward.2} parent=31 // pred_check
        %p355 = pneg %p140
      $region46: #{upsample_bn_forward.2} parent=31 // pred_check_branch
        %357 = sbr.rel (%p355) target = $region48
      $region47: #{upsample_bn_forward.2} parent=31 // pred_region
        %s358 = sadd.s32 %s22, 1
        %s359 = smul.u32 %s358, 4
        %s360 = smul.u32 2, %s359
        %p361 = scmp.lt.s32.totalorder %s21, 1
        %s362 = scalar_select %p361, %s21, 1
        %p363 = scmp.lt.s32.totalorder %s360, 17
        %s364 = scalar_select %p363, %s360, 17
        %s365 = smul.addr %s364, 3
        %s366 = smul.addr %s362, 54
        %s367 = sadd.s32 %s365, %s366
        %s368 = smul.addr %s367, 4
        %s369 = scalar_lea.vmem %s3, %s368
        %s370 = sadd.s32 %s22, 1
        %s371 = smul.u32 %s370, 4
        %s372 = smul.u32 2, %s371
      $region48: #{upsample_bn_forward.2} parent=31 // pred_fallthru
        _
    $region32: #{upsample_bn_forward.2} parent=5 // pred_fallthru
      _
    %p373 = scmp.le.s32.totalorder 1, %s14
    %p374 = scmp.lt.s32.totalorder %s14, 5
    %p375 = pnand %p373, %p374
    %p376 = pneg %p375
    // Predicated region
    $region49: #{upsample_bn_forward.2} parent=5 // pred_check
      _
    $region50: #{upsample_bn_forward.2} parent=5 // pred_check_branch
      %378 = sbr.rel (%p375) target = $region52
    $region51: #{upsample_bn_forward.2} parent=5 // pred_region
      %s379 = ssub.s32 %s14, 1
      %s380 = smul.u32 8, %s24
      %s381 = ssub.s32 18, %s380
      %p382 = scmp.lt.s32.totalorder %s381, 8
      %s383 = scalar_select %p382, %s381, 8
      %s384 = smul.u32 64, %s383
      %s385 = smul.u32 %s384, 3
      %p386 = scmp.lt.s32.totalorder %s23, 1
      %s387 = scalar_select %p386, %s23, 1
      %p388 = scmp.lt.s32.totalorder %s380, 17
      %s389 = scalar_select %p388, %s380, 17
      %s390 = smul.addr %s389, 3
      %s391 = smul.addr %s387, 54
      %s392 = sadd.s32 %s390, %s391
      %s393 = smul.addr %s392, 4
      %s394 = scalar_lea.vmem %s0, %s393
      %p395 = pneg %p54
      %p396 = pneg %p51
      %s397 = sadd.s32 %s24, 1
      %s398 = smul.u32 %s397, 4
      %s399 = smul.u32 2, %s398
      %p400 = scmp.lt.s32.totalorder %s23, 1
      %s401 = scalar_select %p400, %s23, 1
      %p402 = scmp.lt.s32.totalorder %s399, 17
      %s403 = scalar_select %p402, %s399, 17
      %s404 = smul.addr %s403, 3
      %s405 = smul.addr %s401, 54
      %s406 = sadd.s32 %s404, %s405
      %s407 = smul.addr %s406, 4
      %s408 = scalar_lea.vmem %s1, %s407
      %p409 = pneg %p86
      %p410 = pneg %p83
      %s411 = smul.u32 8, %s24
      %s412 = ssub.s32 18, %s411
      %p413 = scmp.lt.s32.totalorder %s412, 8
      %s414 = scalar_select %p413, %s412, 8
      %s415 = smul.u32 64, %s414
      %s416 = smul.u32 %s415, 3
      %p417 = scmp.lt.s32.totalorder %s23, 1
      %s418 = scalar_select %p417, %s23, 1
      %p419 = scmp.lt.s32.totalorder %s411, 17
      %s420 = scalar_select %p419, %s411, 17
      %s421 = smul.addr %s420, 3
      %s422 = smul.addr %s418, 54
      %s423 = sadd.s32 %s421, %s422
      %s424 = smul.addr %s423, 4
      %s425 = scalar_lea.vmem %s2, %s424
      %p426 = pneg %p114
      %p427 = pneg %p111
      %s428 = sadd.s32 %s24, 1
      %s429 = smul.u32 %s428, 4
      %s430 = smul.u32 2, %s429
      %p431 = scmp.lt.s32.totalorder %s23, 1
      %s432 = scalar_select %p431, %s23, 1
      %p433 = scmp.lt.s32.totalorder %s430, 17
      %s434 = scalar_select %p433, %s430, 17
      %s435 = smul.addr %s434, 3
      %s436 = smul.addr %s432, 54
      %s437 = sadd.s32 %s435, %s436
      %s438 = smul.addr %s437, 4
      %s439 = scalar_lea.vmem %s3, %s438
      %p440 = pneg %p146
      %p441 = pneg %p143
      %p442 = pneg %p167
      %p443 = pneg %p164
      %p444 = pneg %p188
      %p445 = pneg %p185
      %p446 = pneg %p209
      %p447 = pneg %p206
      %p448 = pneg %p230
      %p449 = pneg %p227
      %p450 = pneg %p258
      %p451 = pneg %p255
      %s452 = smul.u32 16, %s24
      %p453 = scmp.lt.s32.totalorder %s23, 1
      %s454 = scalar_select %p453, %s23, 1
      %p455 = scmp.lt.s32.totalorder %s452, 31
      %s456 = scalar_select %p455, %s452, 31
      %s457 = smul.addr %s454, 32
      %s458 = sadd.s32 %s456, %s457
      %s459 = smul.addr %s458, 4
      %s460 = scalar_lea.vmem %s8, %s459
      %s461 = smul.u32 8, %s24
      %s462 = ssub.s32 18, %s461
      %p463 = scmp.lt.s32.totalorder %s462, 8
      %s464 = scalar_select %p463, %s462, 8
      %s465 = smul.u32 64, %s464
      %s466 = smul.u32 %s465, 3
      %p467 = scmp.lt.s32.totalorder %s23, 1
      %s468 = scalar_select %p467, %s23, 1
      %p469 = scmp.lt.s32.totalorder %s461, 17
      %s470 = scalar_select %p469, %s461, 17
      %s471 = smul.addr %s470, 3
      %s472 = smul.addr %s468, 54
      %s473 = sadd.s32 %s471, %s472
      %s474 = smul.addr %s473, 4
      %s475 = scalar_lea.vmem %s0, %s474
      %s476 = smul.u32 8, %s24
      %s477 = ssub.s32 18, %s476
      %p478 = scmp.lt.s32.totalorder %s477, 8
      %s479 = scalar_select %p478, %s477, 8
      %s480 = smul.u32 64, %s479
      %s481 = smul.u32 %s480, 3
      %s482 = sadd.s32 %s24, 1
      %s483 = smul.u32 %s482, 4
      %s484 = smul.u32 2, %s483
      %p485 = scmp.lt.s32.totalorder %s23, 1
      %s486 = scalar_select %p485, %s23, 1
      %p487 = scmp.lt.s32.totalorder %s484, 17
      %s488 = scalar_select %p487, %s484, 17
      %s489 = smul.addr %s488, 3
      %s490 = smul.addr %s486, 54
      %s491 = sadd.s32 %s489, %s490
      %s492 = smul.addr %s491, 4
      %s493 = scalar_lea.vmem %s1, %s492
      %s494 = sadd.s32 %s24, 1
      %s495 = smul.u32 %s494, 4
      %s496 = smul.u32 2, %s495
      %s497 = smul.u32 8, %s24
      %s498 = ssub.s32 18, %s497
      %p499 = scmp.lt.s32.totalorder %s498, 8
      %s500 = scalar_select %p499, %s498, 8
      %s501 = smul.u32 64, %s500
      %s502 = smul.u32 %s501, 3
      %p503 = scmp.lt.s32.totalorder %s23, 1
      %s504 = scalar_select %p503, %s23, 1
      %p505 = scmp.lt.s32.totalorder %s497, 17
      %s506 = scalar_select %p505, %s497, 17
      %s507 = smul.addr %s506, 3
      %s508 = smul.addr %s504, 54
      %s509 = sadd.s32 %s507, %s508
      %s510 = smul.addr %s509, 4
      %s511 = scalar_lea.vmem %s2, %s510
      %s512 = smul.u32 8, %s24
      %s513 = ssub.s32 18, %s512
      %p514 = scmp.lt.s32.totalorder %s513, 8
      %s515 = scalar_select %p514, %s513, 8
      %s516 = smul.u32 64, %s515
      %s517 = smul.u32 %s516, 3
      %s518 = sadd.s32 %s24, 1
      %s519 = smul.u32 %s518, 4
      %s520 = smul.u32 2, %s519
      %p521 = scmp.lt.s32.totalorder %s23, 1
      %s522 = scalar_select %p521, %s23, 1
      %p523 = scmp.lt.s32.totalorder %s520, 17
      %s524 = scalar_select %p523, %s520, 17
      %s525 = smul.addr %s524, 3
      %s526 = smul.addr %s522, 54
      %s527 = sadd.s32 %s525, %s526
      %s528 = smul.addr %s527, 4
      %s529 = scalar_lea.vmem %s3, %s528
      %s530 = sadd.s32 %s24, 1
      %s531 = smul.u32 %s530, 4
      %s532 = smul.u32 2, %s531
      %s533 = smul.u32 16, %s24
      %p534 = scmp.lt.s32.totalorder %s23, 1
      %s535 = scalar_select %p534, %s23, 1
      %p536 = scmp.lt.s32.totalorder %s533, 31
      %s537 = scalar_select %p536, %s533, 31
      %s538 = smul.addr %s535, 32
      %s539 = sadd.s32 %s537, %s538
      %s540 = smul.addr %s539, 4
      %s541 = scalar_lea.vmem %s8, %s540
      %s542 = smul.u32 16, %s24
      %v544 = vld [vmem:[%s475] sm:$0xf]
      %v545 = vld [vmem:[%s475 + $0x4] sm:$0xf]
      %v546 = vld [vmem:[%s475 + $0x8] sm:$0x1]
      %v547 = vld [vmem:[%s475 + $0xc] sm:$0xf]
      %v548 = vld [vmem:[%s475 + $0x10] sm:$0xf]
      %v549 = vld [vmem:[%s475 + $0x14] sm:$0x1]
      %v550 = vld [vmem:[%s475 + $0x18] sm:$0xf]
      %v551 = vld [vmem:[%s475 + $0x1c] sm:$0xf]
      %v552 = vld [vmem:[%s475 + $0x20] sm:$0x1]
      %v553 = vld [vmem:[%s475 + $0x24] sm:$0xf]
      %v554 = vld [vmem:[%s475 + $0x28] sm:$0xf]
      %v555 = vld [vmem:[%s475 + $0x2c] sm:$0x1]
      %v556 = vld [vmem:[%s475 + $0x30] sm:$0xf]
      %v557 = vld [vmem:[%s475 + $0x34] sm:$0xf]
      %v558 = vld [vmem:[%s475 + $0x38] sm:$0x1]
      %v559 = vld [vmem:[%s475 + $0x3c] sm:$0xf]
      %v560 = vld [vmem:[%s475 + $0x40] sm:$0xf]
      %v561 = vld [vmem:[%s475 + $0x44] sm:$0x1]
      %v562 = vld [vmem:[%s475 + $0x48] sm:$0xf]
      %v563 = vld [vmem:[%s475 + $0x4c] sm:$0xf]
      %v564 = vld [vmem:[%s475 + $0x50] sm:$0x1]
      %v565 = vld [vmem:[%s475 + $0x54] sm:$0xf]
      %v566 = vld [vmem:[%s475 + $0x58] sm:$0xf]
      %v567 = vld [vmem:[%s475 + $0x5c] sm:$0x1]
      %v568 = vld [vmem:[%s493] sm:$0xf]
      %v569 = vld [vmem:[%s493 + $0x4] sm:$0xf]
      %v570 = vld [vmem:[%s493 + $0x8] sm:$0x1]
      %v571 = vld [vmem:[%s493 + $0xc] sm:$0xf]
      %v572 = vld [vmem:[%s493 + $0x10] sm:$0xf]
      %v573 = vld [vmem:[%s493 + $0x14] sm:$0x1]
      %v574 = vld [vmem:[%s4] sm:$0xf]
      %v575 = vld [vmem:[%s4 + $0x4] sm:$0xf]
      %v576 = vld [vmem:[%s4 + $0x8] sm:$0xf]
      %v577 = vld [vmem:[%s4 + $0xc] sm:$0xf]
      %v578 = vld [vmem:[%s4 + $0x10] sm:$0xf]
      %v579 = vld [vmem:[%s4 + $0x14] sm:$0xf]
      %v580 = vld [vmem:[%s4 + $0x18] sm:$0xf]
      %v581 = vld [vmem:[%s4 + $0x1c] sm:$0xf]
      %v582 = vld [vmem:[%s4 + $0x20] sm:$0xf]
      %v583 = vld [vmem:[%s4 + $0x24] sm:$0xf]
      %v584 = vld [vmem:[%s4 + $0x28] sm:$0xf]
      %v585 = vld [vmem:[%s4 + $0x2c] sm:$0xf]
      %v586 = vld [vmem:[%s4 + $0x30] sm:$0xf]
      %v587 = vld [vmem:[%s4 + $0x34] sm:$0xf]
      %v588 = vld [vmem:[%s4 + $0x38] sm:$0xf]
      %v589 = vld [vmem:[%s4 + $0x3c] sm:$0xf]
      %v590 = vld [vmem:[%s4 + $0x40] sm:$0xf]
      %v591 = vld [vmem:[%s4 + $0x44] sm:$0xf]
      %vm592 = vsmask.f32 3328
      %vm593 = vsmask.f32 7440
      %vm594 = vmor %vm592, %vm593
      %v596 = vshrl.u32 %v544, 16
      %v598 = vrot.slane %v596, 4
      %v599 = vshll.u32 %v544, 16
      %v601 = vrot.slane %v599, 5
      %v602 = vor.u32 %v598, %v601
      %v603 = vrot.slane %v602, 4
      %v605 = vshll.u32 %v545, 16
      %v607 = vrot.slane %v605, 5
      %v608 = vsel %vm594, %v603, %v607
      %v609 = vshrl.u32 %v545, 16
      %v611 = vrot.slane %v609, 4
      %v612 = vor.u32 %v611, %v607
      %v613 = vrot.slane %v612, 4
      %v615 = vshll.u32 %v546, 16
      %v617 = vrot.slane %v615, 5
      %v618 = vsel %vm594, %v613, %v617
      %v620 = vshrl.u32 %v547, 16
      %v622 = vrot.slane %v620, 4
      %v623 = vshll.u32 %v547, 16
      %v625 = vrot.slane %v623, 5
      %v626 = vor.u32 %v622, %v625
      %v627 = vrot.slane %v626, 4
      %v629 = vshll.u32 %v548, 16
      %v631 = vrot.slane %v629, 5
      %v632 = vsel %vm594, %v627, %v631
      %v633 = vshrl.u32 %v548, 16
      %v635 = vrot.slane %v633, 4
      %v636 = vor.u32 %v635, %v631
      %v637 = vrot.slane %v636, 4
      %v639 = vshll.u32 %v549, 16
      %v641 = vrot.slane %v639, 5
      %v642 = vsel %vm594, %v637, %v641
      %v644 = vshrl.u32 %v550, 16
      %v646 = vrot.slane %v644, 4
      %v647 = vshll.u32 %v550, 16
      %v649 = vrot.slane %v647, 5
      %v650 = vor.u32 %v646, %v649
      %v651 = vrot.slane %v650, 4
      %v653 = vshll.u32 %v551, 16
      %v655 = vrot.slane %v653, 5
      %v656 = vsel %vm594, %v651, %v655
      %v657 = vshrl.u32 %v551, 16
      %v659 = vrot.slane %v657, 4
      %v660 = vor.u32 %v659, %v655
      %v661 = vrot.slane %v660, 4
      %v663 = vshll.u32 %v552, 16
      %v665 = vrot.slane %v663, 5
      %v666 = vsel %vm594, %v661, %v665
      %v668 = vshrl.u32 %v553, 16
      %v670 = vrot.slane %v668, 4
      %v671 = vshll.u32 %v553, 16
      %v673 = vrot.slane %v671, 5
      %v674 = vor.u32 %v670, %v673
      %v675 = vrot.slane %v674, 4
      %v677 = vshll.u32 %v554, 16
      %v679 = vrot.slane %v677, 5
      %v680 = vsel %vm594, %v675, %v679
      %v681 = vshrl.u32 %v554, 16
      %v683 = vrot.slane %v681, 4
      %v684 = vor.u32 %v683, %v679
      %v685 = vrot.slane %v684, 4
      %v687 = vshll.u32 %v555, 16
      %v689 = vrot.slane %v687, 5
      %v690 = vsel %vm594, %v685, %v689
      %v692 = vshrl.u32 %v556, 16
      %v694 = vrot.slane %v692, 4
      %v695 = vshll.u32 %v556, 16
      %v697 = vrot.slane %v695, 5
      %v698 = vor.u32 %v694, %v697
      %v699 = vrot.slane %v698, 4
      %v701 = vshll.u32 %v557, 16
      %v703 = vrot.slane %v701, 5
      %v704 = vsel %vm594, %v699, %v703
      %v705 = vshrl.u32 %v557, 16
      %v707 = vrot.slane %v705, 4
      %v708 = vor.u32 %v707, %v703
      %v709 = vrot.slane %v708, 4
      %v711 = vshll.u32 %v558, 16
      %v713 = vrot.slane %v711, 5
      %v714 = vsel %vm594, %v709, %v713
      %v716 = vshrl.u32 %v559, 16
      %v718 = vrot.slane %v716, 4
      %v719 = vshll.u32 %v559, 16
      %v721 = vrot.slane %v719, 5
      %v722 = vor.u32 %v718, %v721
      %v723 = vrot.slane %v722, 4
      %v725 = vshll.u32 %v560, 16
      %v727 = vrot.slane %v725, 5
      %v728 = vsel %vm594, %v723, %v727
      %v729 = vshrl.u32 %v560, 16
      %v731 = vrot.slane %v729, 4
      %v732 = vor.u32 %v731, %v727
      %v733 = vrot.slane %v732, 4
      %v735 = vshll.u32 %v561, 16
      %v737 = vrot.slane %v735, 5
      %v738 = vsel %vm594, %v733, %v737
      %v740 = vshrl.u32 %v562, 16
      %v742 = vrot.slane %v740, 4
      %v743 = vshll.u32 %v562, 16
      %v745 = vrot.slane %v743, 5
      %v746 = vor.u32 %v742, %v745
      %v747 = vrot.slane %v746, 4
      %v749 = vshll.u32 %v563, 16
      %v751 = vrot.slane %v749, 5
      %v752 = vsel %vm594, %v747, %v751
      %v753 = vshrl.u32 %v563, 16
      %v755 = vrot.slane %v753, 4
      %v756 = vor.u32 %v755, %v751
      %v757 = vrot.slane %v756, 4
      %v759 = vshll.u32 %v564, 16
      %v761 = vrot.slane %v759, 5
      %v762 = vsel %vm594, %v757, %v761
      %v764 = vshrl.u32 %v565, 16
      %v766 = vrot.slane %v764, 4
      %v767 = vshll.u32 %v565, 16
      %v769 = vrot.slane %v767, 5
      %v770 = vor.u32 %v766, %v769
      %v771 = vrot.slane %v770, 4
      %v773 = vshll.u32 %v566, 16
      %v775 = vrot.slane %v773, 5
      %v776 = vsel %vm594, %v771, %v775
      %v777 = vshrl.u32 %v566, 16
      %v779 = vrot.slane %v777, 4
      %v780 = vor.u32 %v779, %v775
      %v781 = vrot.slane %v780, 4
      %v783 = vshll.u32 %v567, 16
      %v785 = vrot.slane %v783, 5
      %v786 = vsel %vm594, %v781, %v785
      %v787 = vunpack.c.l.b16 %v608
      %v788 = vunpack.c.l.b16 %v618
      %v789 = vunpack.c.l.b16 %v632
      %v790 = vunpack.c.l.b16 %v642
      %v791 = vunpack.c.l.b16 %v656
      %v792 = vunpack.c.l.b16 %v666
      %v793 = vunpack.c.l.b16 %v680
      %v794 = vunpack.c.l.b16 %v690
      %v795 = vunpack.c.l.b16 %v704
      %v796 = vunpack.c.l.b16 %v714
      %v797 = vunpack.c.l.b16 %v728
      %v798 = vunpack.c.l.b16 %v738
      %v799 = vunpack.c.l.b16 %v752
      %v800 = vunpack.c.l.b16 %v762
      %v801 = vunpack.c.l.b16 %v776
      %v802 = vunpack.c.l.b16 %v786
      %v803 = vpack.c.b16 %v788, %v787
      %v804 = vpack.c.b16 %v790, %v789
      %v805 = vpack.c.b16 %v792, %v791
      %v806 = vpack.c.b16 %v794, %v793
      %v807 = vpack.c.b16 %v796, %v795
      %v808 = vpack.c.b16 %v798, %v797
      %v809 = vpack.c.b16 %v800, %v799
      %v810 = vpack.c.b16 %v802, %v801
      %v813 = vunpack.c.l.b16 %v576
      %v814 = vunpack.c.l.b16 %v577
      %v815 = vpack.c.b16 %v814, %v813
      %vm817 = vcmask 130048
      %v819 = vsel %vm817, %v803, 0
      %v822 = vsel %vm817, %v804, 0
      %v825 = vsel %vm817, %v805, 0
      %v828 = vsel %vm817, %v806, 0
      %v831 = vsel %vm817, %v807, 0
      %v834 = vsel %vm817, %v808, 0
      %v837 = vsel %vm817, %v809, 0
      %v840 = vsel %vm817, %v810, 0
      %842 = vmatprep.subr.bf16.mxu0 0
      %843 = vmatpush1.bf16.msra.mxu0 %v815
      %844 = vmatprep.subr.bf16.mxu0 0
      %845 = vmatpush1.bf16.msra.mxu0 0
      %846 = vmatprep.subr.bf16.mxu0 0
      %847 = vmatpush1.bf16.msra.mxu0 0
      %848 = vmatprep.subr.bf16.mxu0 0
      %849 = vmatpush1.bf16.msra.mxu0 0
      %850 = vmatprep.subr.bf16.mxu0 0
      %851 = vmatpush1.bf16.msra.mxu0 0
      %852 = vmatprep.subr.bf16.mxu0 0
      %853 = vmatpush1.bf16.msra.mxu0 0
      %854 = vmatprep.subr.bf16.mxu0 0
      %855 = vmatpush1.bf16.msra.mxu0 0
      %856 = vmatprep.subr.bf16.mxu0 0
      %857 = vmatpush1.bf16.msra.mxu0 0
      %858 = vmatprep.subr.bf16.mxu0 0
      %859 = vmatpush1.bf16.msra.mxu0 0
      %860 = vmatprep.subr.bf16.mxu0 0
      %861 = vmatpush1.bf16.msra.mxu0 0
      %862 = vmatprep.subr.bf16.mxu0 0
      %863 = vmatpush1.bf16.msra.mxu0 0
      %864 = vmatprep.subr.bf16.mxu0 0
      %865 = vmatpush1.bf16.msra.mxu0 0
      %866 = vmatprep.subr.bf16.mxu0 0
      %867 = vmatpush1.bf16.msra.mxu0 0
      %868 = vmatprep.subr.bf16.mxu0 0
      %869 = vmatpush1.bf16.msra.mxu0 0
      %870 = vmatprep.subr.bf16.mxu0 0
      %871 = vmatpush1.bf16.msra.mxu0 0
      %872 = vmatprep.subr.bf16.mxu0 0
      %873 = vmatpush1.bf16.msra.mxu0 0
      %874 = vmatprep.mubr.bf16.mxu0 0
      %875 = vmatmul.mubr.bf16.gmra.mrb[0].mxu0 %v819
      %v876 = vpop.f32.mrb[0].mxu0
      %v877 = vadd.f32 0.0, %v876
      %v878 = vpop.f32.mrb[0].mxu0
      %v879 = vpop.f32.mrb[0].mxu0
      %v880 = vadd.f32 0.0, %v879
      %v881 = vpop.f32.mrb[0].mxu0
      %882 = vmatprep.mubr.bf16.mxu0 0
      %883 = vmatmul.mubr.bf16.gmra.mrb[0].mxu0 %v822
      %v884 = vpop.f32.mrb[0].mxu0
      %v885 = vadd.f32 0.0, %v884
      %v886 = vpop.f32.mrb[0].mxu0
      %v887 = vpop.f32.mrb[0].mxu0
      %v888 = vadd.f32 0.0, %v887
      %v889 = vpop.f32.mrb[0].mxu0
      %890 = vmatprep.mubr.bf16.mxu0 0
      %891 = vmatmul.mubr.bf16.gmra.mrb[0].mxu0 %v825
      %v892 = vpop.f32.mrb[0].mxu0
      %v893 = vadd.f32 0.0, %v892
      %v894 = vpop.f32.mrb[0].mxu0
      %v895 = vpop.f32.mrb[0].mxu0
      %v896 = vadd.f32 0.0, %v895
      %v897 = vpop.f32.mrb[0].mxu0
      %898 = vmatprep.mubr.bf16.mxu0 0
      %899 = vmatmul.mubr.bf16.gmra.mrb[0].mxu0 %v828
      %v900 = vpop.f32.mrb[0].mxu0
      %v901 = vadd.f32 0.0, %v900
      %v902 = vpop.f32.mrb[0].mxu0
      %v903 = vpop.f32.mrb[0].mxu0
      %v904 = vadd.f32 0.0, %v903
      %v905 = vpop.f32.mrb[0].mxu0
      %906 = vmatprep.mubr.bf16.mxu0 0
      %907 = vmatmul.mubr.bf16.gmra.mrb[0].mxu0 %v831
      %v908 = vpop.f32.mrb[0].mxu0
      %v909 = vadd.f32 0.0, %v908
      %v910 = vpop.f32.mrb[0].mxu0
      %v911 = vpop.f32.mrb[0].mxu0
      %v912 = vadd.f32 0.0, %v911
      %v913 = vpop.f32.mrb[0].mxu0
      %914 = vmatprep.mubr.bf16.mxu0 0
      %915 = vmatmul.mubr.bf16.gmra.mrb[0].mxu0 %v834
      %v916 = vpop.f32.mrb[0].mxu0
      %v917 = vadd.f32 0.0, %v916
      %v918 = vpop.f32.mrb[0].mxu0
      %v919 = vpop.f32.mrb[0].mxu0
      %v920 = vadd.f32 0.0, %v919
      %v921 = vpop.f32.mrb[0].mxu0
      %922 = vmatprep.mubr.bf16.mxu0 0
      %923 = vmatmul.mubr.bf16.gmra.mrb[0].mxu0 %v837
      %v924 = vpop.f32.mrb[0].mxu0
      %v925 = vadd.f32 0.0, %v924
      %v926 = vpop.f32.mrb[0].mxu0
      %v927 = vpop.f32.mrb[0].mxu0
      %v928 = vadd.f32 0.0, %v927
      %v929 = vpop.f32.mrb[0].mxu0
      %930 = vmatprep.mubr.bf16.mxu0 0
      %931 = vmatmul.mubr.bf16.gmra.mrb[0].mxu0 %v840
      %v932 = vpop.f32.mrb[0].mxu0
      %v933 = vadd.f32 0.0, %v932
      %v934 = vpop.f32.mrb[0].mxu0
      %v935 = vpop.f32.mrb[0].mxu0
      %v936 = vadd.f32 0.0, %v935
      %v937 = vpop.f32.mrb[0].mxu0
      %938 = vdwg.mxu0
      %v955 = vunpack.c.l.b16 %v544
      %v956 = vunpack.c.l.b16 %v545
      %v957 = vunpack.c.l.b16 %v547
      %v958 = vunpack.c.l.b16 %v548
      %v959 = vunpack.c.l.b16 %v550
      %v960 = vunpack.c.l.b16 %v551
      %v961 = vunpack.c.l.b16 %v553
      %v962 = vunpack.c.l.b16 %v554
      %v963 = vunpack.c.l.b16 %v556
      %v964 = vunpack.c.l.b16 %v557
      %v965 = vunpack.c.l.b16 %v559
      %v966 = vunpack.c.l.b16 %v560
      %v967 = vunpack.c.l.b16 %v562
      %v968 = vunpack.c.l.b16 %v563
      %v969 = vunpack.c.l.b16 %v565
      %v970 = vunpack.c.l.b16 %v566
      %v971 = vpack.c.b16 %v956, %v955
      %v972 = vpack.c.b16 %v958, %v957
      %v973 = vpack.c.b16 %v960, %v959
      %v974 = vpack.c.b16 %v962, %v961
      %v975 = vpack.c.b16 %v964, %v963
      %v976 = vpack.c.b16 %v966, %v965
      %v977 = vpack.c.b16 %v968, %v967
      %v978 = vpack.c.b16 %v970, %v969
      %v981 = vunpack.c.l.b16 %v574
      %v982 = vunpack.c.l.b16 %v575
      %v983 = vpack.c.b16 %v982, %v981
      %v986 = vsel %vm817, %v971, 0
      %v989 = vsel %vm817, %v972, 0
      %v992 = vsel %vm817, %v973, 0
      %v995 = vsel %vm817, %v974, 0
      %v998 = vsel %vm817, %v975, 0
      %v1001 = vsel %vm817, %v976, 0
      %v1004 = vsel %vm817, %v977, 0
      %v1007 = vsel %vm817, %v978, 0
      %1009 = vmatprep.subr.bf16.mxu0 0
      %1010 = vmatpush1.bf16.msra.mxu0 %v983
      %1011 = vmatprep.subr.bf16.mxu0 0
      %1012 = vmatpush1.bf16.msra.mxu0 0
      %1013 = vmatprep.subr.bf16.mxu0 0
      %1014 = vmatpush1.bf16.msra.mxu0 0
      %1015 = vmatprep.subr.bf16.mxu0 0
      %1016 = vmatpush1.bf16.msra.mxu0 0
      %1017 = vmatprep.subr.bf16.mxu0 0
      %1018 = vmatpush1.bf16.msra.mxu0 0
      %1019 = vmatprep.subr.bf16.mxu0 0
      %1020 = vmatpush1.bf16.msra.mxu0 0
      %1021 = vmatprep.subr.bf16.mxu0 0
      %1022 = vmatpush1.bf16.msra.mxu0 0
      %1023 = vmatprep.subr.bf16.mxu0 0
      %1024 = vmatpush1.bf16.msra.mxu0 0
      %1025 = vmatprep.subr.bf16.mxu0 0
      %1026 = vmatpush1.bf16.msra.mxu0 0
      %1027 = vmatprep.subr.bf16.mxu0 0
      %1028 = vmatpush1.bf16.msra.mxu0 0
      %1029 = vmatprep.subr.bf16.mxu0 0
      %1030 = vmatpush1.bf16.msra.mxu0 0
      %1031 = vmatprep.subr.bf16.mxu0 0
      %1032 = vmatpush1.bf16.msra.mxu0 0
      %1033 = vmatprep.subr.bf16.mxu0 0
      %1034 = vmatpush1.bf16.msra.mxu0 0
      %1035 = vmatprep.subr.bf16.mxu0 0
      %1036 = vmatpush1.bf16.msra.mxu0 0
      %1037 = vmatprep.subr.bf16.mxu0 0
      %1038 = vmatpush1.bf16.msra.mxu0 0
      %1039 = vmatprep.subr.bf16.mxu0 0
      %1040 = vmatpush1.bf16.msra.mxu0 0
      %1041 = vmatprep.mubr.bf16.mxu0 0
      %1042 = vmatmul.mubr.bf16.gmra.mrb[0].mxu0 %v986
      %v1043 = vpop.f32.mrb[0].mxu0
      %v1044 = vadd.f32 %v877, %v1043
      %v1045 = vpop.f32.mrb[0].mxu0
      %v1046 = vpop.f32.mrb[0].mxu0
      %v1047 = vadd.f32 %v880, %v1046
      %v1048 = vpop.f32.mrb[0].mxu0
      %1049 = vmatprep.mubr.bf16.mxu0 0
      %1050 = vmatmul.mubr.bf16.gmra.mrb[0].mxu0 %v989
      %v1051 = vpop.f32.mrb[0].mxu0
      %v1052 = vadd.f32 %v885, %v1051
      %v1053 = vpop.f32.mrb[0].mxu0
      %v1054 = vpop.f32.mrb[0].mxu0
      %v1055 = vadd.f32 %v888, %v1054
      %v1056 = vpop.f32.mrb[0].mxu0
      %1057 = vmatprep.mubr.bf16.mxu0 0
      %1058 = vmatmul.mubr.bf16.gmra.mrb[0].mxu0 %v992
      %v1059 = vpop.f32.mrb[0].mxu0
      %v1060 = vadd.f32 %v893, %v1059
      %v1061 = vpop.f32.mrb[0].mxu0
      %v1062 = vpop.f32.mrb[0].mxu0
      %v1063 = vadd.f32 %v896, %v1062
      %v1064 = vpop.f32.mrb[0].mxu0
      %1065 = vmatprep.mubr.bf16.mxu0 0
      %1066 = vmatmul.mubr.bf16.gmra.mrb[0].mxu0 %v995
      %v1067 = vpop.f32.mrb[0].mxu0
      %v1068 = vadd.f32 %v901, %v1067
      %v1069 = vpop.f32.mrb[0].mxu0
      %v1070 = vpop.f32.mrb[0].mxu0
      %v1071 = vadd.f32 %v904, %v1070
      %v1072 = vpop.f32.mrb[0].mxu0
      %1073 = vmatprep.mubr.bf16.mxu0 0
      %1074 = vmatmul.mubr.bf16.gmra.mrb[0].mxu0 %v998
      %v1075 = vpop.f32.mrb[0].mxu0
      %v1076 = vadd.f32 %v909, %v1075
      %v1077 = vpop.f32.mrb[0].mxu0
      %v1078 = vpop.f32.mrb[0].mxu0
      %v1079 = vadd.f32 %v912, %v1078
      %v1080 = vpop.f32.mrb[0].mxu0
      %1081 = vmatprep.mubr.bf16.mxu0 0
      %1082 = vmatmul.mubr.bf16.gmra.mrb[0].mxu0 %v1001
      %v1083 = vpop.f32.mrb[0].mxu0
      %v1084 = vadd.f32 %v917, %v1083
      %v1085 = vpop.f32.mrb[0].mxu0
      %v1086 = vpop.f32.mrb[0].mxu0
      %v1087 = vadd.f32 %v920, %v1086
      %v1088 = vpop.f32.mrb[0].mxu0
      %1089 = vmatprep.mubr.bf16.mxu0 0
      %1090 = vmatmul.mubr.bf16.gmra.mrb[0].mxu0 %v1004
      %v1091 = vpop.f32.mrb[0].mxu0
      %v1092 = vadd.f32 %v925, %v1091
      %v1093 = vpop.f32.mrb[0].mxu0
      %v1094 = vpop.f32.mrb[0].mxu0
      %v1095 = vadd.f32 %v928, %v1094
      %v1096 = vpop.f32.mrb[0].mxu0
      %1097 = vmatprep.mubr.bf16.mxu0 0
      %1098 = vmatmul.mubr.bf16.gmra.mrb[0].mxu0 %v1007
      %v1099 = vpop.f32.mrb[0].mxu0
      %v1100 = vadd.f32 %v933, %v1099
      %v1101 = vpop.f32.mrb[0].mxu0
      %v1102 = vpop.f32.mrb[0].mxu0
      %v1103 = vadd.f32 %v936, %v1102
      %v1104 = vpop.f32.mrb[0].mxu0
      %1105 = vdwg.mxu0
      %vm1114 = vcmask 1042432
      %vm1115 = vcmask 1046532
      %vm1116 = vmor %vm1114, %vm1115
      %v1117 = vrot.slane %v544, 5
      %v1118 = vrot.slane %v1117, 4
      %v1119 = vrot.slane %v545, 5
      %v1120 = vsel %vm1116, %v1118, %v1119
      %v1121 = vrot.slane %v1119, 4
      %v1122 = vrot.slane %v546, 5
      %v1123 = vsel %vm1116, %v1121, %v1122
      %v1124 = vrot.slane %v547, 5
      %v1125 = vrot.slane %v1124, 4
      %v1126 = vrot.slane %v548, 5
      %v1127 = vsel %vm1116, %v1125, %v1126
      %v1128 = vrot.slane %v1126, 4
      %v1129 = vrot.slane %v549, 5
      %v1130 = vsel %vm1116, %v1128, %v1129
      %v1131 = vrot.slane %v550, 5
      %v1132 = vrot.slane %v1131, 4
      %v1133 = vrot.slane %v551, 5
      %v1134 = vsel %vm1116, %v1132, %v1133
      %v1135 = vrot.slane %v1133, 4
      %v1136 = vrot.slane %v552, 5
      %v1137 = vsel %vm1116, %v1135, %v1136
      %v1138 = vrot.slane %v553, 5
      %v1139 = vrot.slane %v1138, 4
      %v1140 = vrot.slane %v554, 5
      %v1141 = vsel %vm1116, %v1139, %v1140
      %v1142 = vrot.slane %v1140, 4
      %v1143 = vrot.slane %v555, 5
      %v1144 = vsel %vm1116, %v1142, %v1143
      %v1145 = vrot.slane %v556, 5
      %v1146 = vrot.slane %v1145, 4
      %v1147 = vrot.slane %v557, 5
      %v1148 = vsel %vm1116, %v1146, %v1147
      %v1149 = vrot.slane %v1147, 4
      %v1150 = vrot.slane %v558, 5
      %v1151 = vsel %vm1116, %v1149, %v1150
      %v1152 = vrot.slane %v559, 5
      %v1153 = vrot.slane %v1152, 4
      %v1154 = vrot.slane %v560, 5
      %v1155 = vsel %vm1116, %v1153, %v1154
      %v1156 = vrot.slane %v1154, 4
      %v1157 = vrot.slane %v561, 5
      %v1158 = vsel %vm1116, %v1156, %v1157
      %v1159 = vrot.slane %v562, 5
      %v1160 = vrot.slane %v1159, 4
      %v1161 = vrot.slane %v563, 5
      %v1162 = vsel %vm1116, %v1160, %v1161
      %v1163 = vrot.slane %v1161, 4
      %v1164 = vrot.slane %v564, 5
      %v1165 = vsel %vm1116, %v1163, %v1164
      %v1166 = vrot.slane %v565, 5
      %v1167 = vrot.slane %v1166, 4
      %v1168 = vrot.slane %v566, 5
      %v1169 = vsel %vm1116, %v1167, %v1168
      %v1170 = vrot.slane %v1168, 4
      %v1171 = vrot.slane %v567, 5
      %v1172 = vsel %vm1116, %v1170, %v1171
      %v1173 = vunpack.c.l.b16 %v1120
      %v1174 = vunpack.c.l.b16 %v1123
      %v1175 = vunpack.c.l.b16 %v1127
      %v1176 = vunpack.c.l.b16 %v1130
      %v1177 = vunpack.c.l.b16 %v1134
      %v1178 = vunpack.c.l.b16 %v1137
      %v1179 = vunpack.c.l.b16 %v1141
      %v1180 = vunpack.c.l.b16 %v1144
      %v1181 = vunpack.c.l.b16 %v1148
      %v1182 = vunpack.c.l.b16 %v1151
      %v1183 = vunpack.c.l.b16 %v1155
      %v1184 = vunpack.c.l.b16 %v1158
      %v1185 = vunpack.c.l.b16 %v1162
      %v1186 = vunpack.c.l.b16 %v1165
      %v1187 = vunpack.c.l.b16 %v1169
      %v1188 = vunpack.c.l.b16 %v1172
      %v1189 = vpack.c.b16 %v1174, %v1173
      %v1190 = vpack.c.b16 %v1176, %v1175
      %v1191 = vpack.c.b16 %v1178, %v1177
      %v1192 = vpack.c.b16 %v1180, %v1179
      %v1193 = vpack.c.b16 %v1182, %v1181
      %v1194 = vpack.c.b16 %v1184, %v1183
      %v1195 = vpack.c.b16 %v1186, %v1185
      %v1196 = vpack.c.b16 %v1188, %v1187
      %v1199 = vunpack.c.l.b16 %v578
      %v1200 = vunpack.c.l.b16 %v579
      %v1201 = vpack.c.b16 %v1200, %v1199
      %v1204 = vsel %vm817, %v1189, 0
      %v1207 = vsel %vm817, %v1190, 0
      %v1210 = vsel %vm817, %v1191, 0
      %v1213 = vsel %vm817, %v1192, 0
      %v1216 = vsel %vm817, %v1193, 0
      %v1219 = vsel %vm817, %v1194, 0
      %v1222 = vsel %vm817, %v1195, 0
      %v1225 = vsel %vm817, %v1196, 0
      %1227 = vmatprep.subr.bf16.mxu0 0
      %1228 = vmatpush1.bf16.msra.mxu0 %v1201
      %1229 = vmatprep.subr.bf16.mxu0 0
      %1230 = vmatpush1.bf16.msra.mxu0 0
      %1231 = vmatprep.subr.bf16.mxu0 0
      %1232 = vmatpush1.bf16.msra.mxu0 0
      %1233 = vmatprep.subr.bf16.mxu0 0
      %1234 = vmatpush1.bf16.msra.mxu0 0
      %1235 = vmatprep.subr.bf16.mxu0 0
      %1236 = vmatpush1.bf16.msra.mxu0 0
      %1237 = vmatprep.subr.bf16.mxu0 0
      %1238 = vmatpush1.bf16.msra.mxu0 0
      %1239 = vmatprep.subr.bf16.mxu0 0
      %1240 = vmatpush1.bf16.msra.mxu0 0
      %1241 = vmatprep.subr.bf16.mxu0 0
      %1242 = vmatpush1.bf16.msra.mxu0 0
      %1243 = vmatprep.subr.bf16.mxu0 0
      %1244 = vmatpush1.bf16.msra.mxu0 0
      %1245 = vmatprep.subr.bf16.mxu0 0
      %1246 = vmatpush1.bf16.msra.mxu0 0
      %1247 = vmatprep.subr.bf16.mxu0 0
      %1248 = vmatpush1.bf16.msra.mxu0 0
      %1249 = vmatprep.subr.bf16.mxu0 0
      %1250 = vmatpush1.bf16.msra.mxu0 0
      %1251 = vmatprep.subr.bf16.mxu0 0
      %1252 = vmatpush1.bf16.msra.mxu0 0
      %1253 = vmatprep.subr.bf16.mxu0 0
      %1254 = vmatpush1.bf16.msra.mxu0 0
      %1255 = vmatprep.subr.bf16.mxu0 0
      %1256 = vmatpush1.bf16.msra.mxu0 0
      %1257 = vmatprep.subr.bf16.mxu0 0
      %1258 = vmatpush1.bf16.msra.mxu0 0
      %1259 = vmatprep.mubr.bf16.mxu0 0
      %1260 = vmatmul.mubr.bf16.gmra.mrb[0].mxu0 %v1204
      %v1261 = vpop.f32.mrb[0].mxu0
      %v1262 = vadd.f32 0.0, %v1261
      %v1263 = vpop.f32.mrb[0].mxu0
      %v1264 = vpop.f32.mrb[0].mxu0
      %v1265 = vadd.f32 0.0, %v1264
      %v1266 = vpop.f32.mrb[0].mxu0
      %1267 = vmatprep.mubr.bf16.mxu0 0
      %1268 = vmatmul.mubr.bf16.gmra.mrb[0].mxu0 %v1207
      %v1269 = vpop.f32.mrb[0].mxu0
      %v1270 = vadd.f32 0.0, %v1269
      %v1271 = vpop.f32.mrb[0].mxu0
      %v1272 = vpop.f32.mrb[0].mxu0
      %v1273 = vadd.f32 0.0, %v1272
      %v1274 = vpop.f32.mrb[0].mxu0
      %1275 = vmatprep.mubr.bf16.mxu0 0
      %1276 = vmatmul.mubr.bf16.gmra.mrb[0].mxu0 %v1210
      %v1277 = vpop.f32.mrb[0].mxu0
      %v1278 = vadd.f32 0.0, %v1277
      %v1279 = vpop.f32.mrb[0].mxu0
      %v1280 = vpop.f32.mrb[0].mxu0
      %v1281 = vadd.f32 0.0, %v1280
      %v1282 = vpop.f32.mrb[0].mxu0
      %1283 = vmatprep.mubr.bf16.mxu0 0
      %1284 = vmatmul.mubr.bf16.gmra.mrb[0].mxu0 %v1213
      %v1285 = vpop.f32.mrb[0].mxu0
      %v1286 = vadd.f32 0.0, %v1285
      %v1287 = vpop.f32.mrb[0].mxu0
      %v1288 = vpop.f32.mrb[0].mxu0
      %v1289 = vadd.f32 0.0, %v1288
      %v1290 = vpop.f32.mrb[0].mxu0
      %1291 = vmatprep.mubr.bf16.mxu0 0
      %1292 = vmatmul.mubr.bf16.gmra.mrb[0].mxu0 %v1216
      %v1293 = vpop.f32.mrb[0].mxu0
      %v1294 = vadd.f32 0.0, %v1293
      %v1295 = vpop.f32.mrb[0].mxu0
      %v1296 = vpop.f32.mrb[0].mxu0
      %v1297 = vadd.f32 0.0, %v1296
      %v1298 = vpop.f32.mrb[0].mxu0
      %1299 = vmatprep.mubr.bf16.mxu0 0
      %1300 = vmatmul.mubr.bf16.gmra.mrb[0].mxu0 %v1219
      %v1301 = vpop.f32.mrb[0].mxu0
      %v1302 = vadd.f32 0.0, %v1301
      %v1303 = vpop.f32.mrb[0].mxu0
      %v1304 = vpop.f32.mrb[0].mxu0
      %v1305 = vadd.f32 0.0, %v1304
      %v1306 = vpop.f32.mrb[0].mxu0
      %1307 = vmatprep.mubr.bf16.mxu0 0
      %1308 = vmatmul.mubr.bf16.gmra.mrb[0].mxu0 %v1222
      %v1309 = vpop.f32.mrb[0].mxu0
      %v1310 = vadd.f32 0.0, %v1309
      %v1311 = vpop.f32.mrb[0].mxu0
      %v1312 = vpop.f32.mrb[0].mxu0
      %v1313 = vadd.f32 0.0, %v1312
      %v1314 = vpop.f32.mrb[0].mxu0
      %1315 = vmatprep.mubr.bf16.mxu0 0
      %1316 = vmatmul.mubr.bf16.gmra.mrb[0].mxu0 %v1225
      %v1317 = vpop.f32.mrb[0].mxu0
      %v1318 = vadd.f32 0.0, %v1317
      %v1319 = vpop.f32.mrb[0].mxu0
      %v1320 = vpop.f32.mrb[0].mxu0
      %v1321 = vadd.f32 0.0, %v1320
      %v1322 = vpop.f32.mrb[0].mxu0
      %1323 = vdwg.mxu0
      %v1324 = vadd.f32 %v1044, %v1262
      %v1325 = vadd.f32 %v1047, %v1265
      %v1326 = vadd.f32 %v1052, %v1270
      %v1327 = vadd.f32 %v1055, %v1273
      %v1328 = vadd.f32 %v1060, %v1278
      %v1329 = vadd.f32 %v1063, %v1281
      %v1330 = vadd.f32 %v1068, %v1286
      %v1331 = vadd.f32 %v1071, %v1289
      %v1332 = vadd.f32 %v1076, %v1294
      %v1333 = vadd.f32 %v1079, %v1297
      %v1334 = vadd.f32 %v1084, %v1302
      %v1335 = vadd.f32 %v1087, %v1305
      %v1336 = vadd.f32 %v1092, %v1310
      %v1337 = vadd.f32 %v1095, %v1313
      %v1338 = vadd.f32 %v1100, %v1318
      %v1339 = vadd.f32 %v1103, %v1321
      %v1342 = vunpack.c.l.b16 %v568
      %v1343 = vunpack.c.l.b16 %v569
      %v1344 = vpack.c.b16 %v1343, %v1342
      %v1347 = vunpack.c.l.b16 %v580
      %v1348 = vunpack.c.l.b16 %v581
      %v1349 = vpack.c.b16 %v1348, %v1347
      %v1352 = vsel %vm817, %v1344, 0
      %1354 = vmatprep.subr.bf16.mxu0 0
      %1355 = vmatpush1.bf16.msra.mxu0 %v1349
      %1356 = vmatprep.subr.bf16.mxu0 0
      %1357 = vmatpush1.bf16.msra.mxu0 0
      %1358 = vmatprep.subr.bf16.mxu0 0
      %1359 = vmatpush1.bf16.msra.mxu0 0
      %1360 = vmatprep.subr.bf16.mxu0 0
      %1361 = vmatpush1.bf16.msra.mxu0 0
      %1362 = vmatprep.subr.bf16.mxu0 0
      %1363 = vmatpush1.bf16.msra.mxu0 0
      %1364 = vmatprep.subr.bf16.mxu0 0
      %1365 = vmatpush1.bf16.msra.mxu0 0
      %1366 = vmatprep.subr.bf16.mxu0 0
      %1367 = vmatpush1.bf16.msra.mxu0 0
      %1368 = vmatprep.subr.bf16.mxu0 0
      %1369 = vmatpush1.bf16.msra.mxu0 0
      %1370 = vmatprep.subr.bf16.mxu0 0
      %1371 = vmatpush1.bf16.msra.mxu0 0
      %1372 = vmatprep.subr.bf16.mxu0 0
      %1373 = vmatpush1.bf16.msra.mxu0 0
      %1374 = vmatprep.subr.bf16.mxu0 0
      %1375 = vmatpush1.bf16.msra.mxu0 0
      %1376 = vmatprep.subr.bf16.mxu0 0
      %1377 = vmatpush1.bf16.msra.mxu0 0
      %1378 = vmatprep.subr.bf16.mxu0 0
      %1379 = vmatpush1.bf16.msra.mxu0 0
      %1380 = vmatprep.subr.bf16.mxu0 0
      %1381 = vmatpush1.bf16.msra.mxu0 0
      %1382 = vmatprep.subr.bf16.mxu0 0
      %1383 = vmatpush1.bf16.msra.mxu0 0
      %1384 = vmatprep.subr.bf16.mxu0 0
      %1385 = vmatpush1.bf16.msra.mxu0 0
      %1386 = vmatprep.mubr.bf16.mxu0 0
      %1387 = vmatmul.mubr.bf16.gmra.mrb[0].mxu0 %v989
      %v1388 = vpop.f32.mrb[0].mxu0
      %v1389 = vadd.f32 0.0, %v1388
      %v1390 = vpop.f32.mrb[0].mxu0
      %v1391 = vpop.f32.mrb[0].mxu0
      %v1392 = vadd.f32 0.0, %v1391
      %v1393 = vpop.f32.mrb[0].mxu0
      %1394 = vmatprep.mubr.bf16.mxu0 0
      %1395 = vmatmul.mubr.bf16.gmra.mrb[0].mxu0 %v992
      %v1396 = vpop.f32.mrb[0].mxu0
      %v1397 = vadd.f32 0.0, %v1396
      %v1398 = vpop.f32.mrb[0].mxu0
      %v1399 = vpop.f32.mrb[0].mxu0
      %v1400 = vadd.f32 0.0, %v1399
      %v1401 = vpop.f32.mrb[0].mxu0
      %1402 = vmatprep.mubr.bf16.mxu0 0
      %1403 = vmatmul.mubr.bf16.gmra.mrb[0].mxu0 %v995
      %v1404 = vpop.f32.mrb[0].mxu0
      %v1405 = vadd.f32 0.0, %v1404
      %v1406 = vpop.f32.mrb[0].mxu0
      %v1407 = vpop.f32.mrb[0].mxu0
      %v1408 = vadd.f32 0.0, %v1407
      %v1409 = vpop.f32.mrb[0].mxu0
      %1410 = vmatprep.mubr.bf16.mxu0 0
      %1411 = vmatmul.mubr.bf16.gmra.mrb[0].mxu0 %v998
      %v1412 = vpop.f32.mrb[0].mxu0
      %v1413 = vadd.f32 0.0, %v1412
      %v1414 = vpop.f32.mrb[0].mxu0
      %v1415 = vpop.f32.mrb[0].mxu0
      %v1416 = vadd.f32 0.0, %v1415
      %v1417 = vpop.f32.mrb[0].mxu0
      %1418 = vmatprep.mubr.bf16.mxu0 0
      %1419 = vmatmul.mubr.bf16.gmra.mrb[0].mxu0 %v1001
      %v1420 = vpop.f32.mrb[0].mxu0
      %v1421 = vadd.f32 0.0, %v1420
      %v1422 = vpop.f32.mrb[0].mxu0
      %v1423 = vpop.f32.mrb[0].mxu0
      %v1424 = vadd.f32 0.0, %v1423
      %v1425 = vpop.f32.mrb[0].mxu0
      %1426 = vmatprep.mubr.bf16.mxu0 0
      %1427 = vmatmul.mubr.bf16.gmra.mrb[0].mxu0 %v1004
      %v1428 = vpop.f32.mrb[0].mxu0
      %v1429 = vadd.f32 0.0, %v1428
      %v1430 = vpop.f32.mrb[0].mxu0
      %v1431 = vpop.f32.mrb[0].mxu0
      %v1432 = vadd.f32 0.0, %v1431
      %v1433 = vpop.f32.mrb[0].mxu0
      %1434 = vmatprep.mubr.bf16.mxu0 0
      %1435 = vmatmul.mubr.bf16.gmra.mrb[0].mxu0 %v1007
      %v1436 = vpop.f32.mrb[0].mxu0
      %v1437 = vadd.f32 0.0, %v1436
      %v1438 = vpop.f32.mrb[0].mxu0
      %v1439 = vpop.f32.mrb[0].mxu0
      %v1440 = vadd.f32 0.0, %v1439
      %v1441 = vpop.f32.mrb[0].mxu0
      %1442 = vmatprep.mubr.bf16.mxu0 0
      %1443 = vmatmul.mubr.bf16.gmra.mrb[0].mxu0 %v1352
      %v1444 = vpop.f32.mrb[0].mxu0
      %v1445 = vadd.f32 0.0, %v1444
      %v1446 = vpop.f32.mrb[0].mxu0
      %v1447 = vpop.f32.mrb[0].mxu0
      %v1448 = vadd.f32 0.0, %v1447
      %v1449 = vpop.f32.mrb[0].mxu0
      %1450 = vdwg.mxu0
      %v1451 = vadd.f32 %v1324, %v1389
      %v1452 = vadd.f32 %v1325, %v1392
      %v1453 = vadd.f32 %v1326, %v1397
      %v1454 = vadd.f32 %v1327, %v1400
      %v1455 = vadd.f32 %v1328, %v1405
      %v1456 = vadd.f32 %v1329, %v1408
      %v1457 = vadd.f32 %v1330, %v1413
      %v1458 = vadd.f32 %v1331, %v1416
      %v1459 = vadd.f32 %v1332, %v1421
      %v1460 = vadd.f32 %v1333, %v1424
      %v1461 = vadd.f32 %v1334, %v1429
      %v1462 = vadd.f32 %v1335, %v1432
      %v1463 = vadd.f32 %v1336, %v1437
      %v1464 = vadd.f32 %v1337, %v1440
      %v1465 = vadd.f32 %v1338, %v1445
      %v1466 = vadd.f32 %v1339, %v1448
      %v1468 = vshrl.u32 %v568, 16
      %v1470 = vrot.slane %v1468, 4
      %v1471 = vshll.u32 %v568, 16
      %v1473 = vrot.slane %v1471, 5
      %v1474 = vor.u32 %v1470, %v1473
      %v1475 = vrot.slane %v1474, 4
      %v1477 = vshll.u32 %v569, 16
      %v1479 = vrot.slane %v1477, 5
      %v1480 = vsel %vm594, %v1475, %v1479
      %v1481 = vshrl.u32 %v569, 16
      %v1483 = vrot.slane %v1481, 4
      %v1484 = vor.u32 %v1483, %v1479
      %v1485 = vrot.slane %v1484, 4
      %v1487 = vshll.u32 %v570, 16
      %v1489 = vrot.slane %v1487, 5
      %v1490 = vsel %vm594, %v1485, %v1489
      %v1491 = vunpack.c.l.b16 %v1480
      %v1492 = vunpack.c.l.b16 %v1490
      %v1493 = vpack.c.b16 %v1492, %v1491
      %v1496 = vunpack.c.l.b16 %v582
      %v1497 = vunpack.c.l.b16 %v583
      %v1498 = vpack.c.b16 %v1497, %v1496
      %v1501 = vsel %vm817, %v1493, 0
      %1503 = vmatprep.subr.bf16.mxu0 0
      %1504 = vmatpush1.bf16.msra.mxu0 %v1498
      %1505 = vmatprep.subr.bf16.mxu0 0
      %1506 = vmatpush1.bf16.msra.mxu0 0
      %1507 = vmatprep.subr.bf16.mxu0 0
      %1508 = vmatpush1.bf16.msra.mxu0 0
      %1509 = vmatprep.subr.bf16.mxu0 0
      %1510 = vmatpush1.bf16.msra.mxu0 0
      %1511 = vmatprep.subr.bf16.mxu0 0
      %1512 = vmatpush1.bf16.msra.mxu0 0
      %1513 = vmatprep.subr.bf16.mxu0 0
      %1514 = vmatpush1.bf16.msra.mxu0 0
      %1515 = vmatprep.subr.bf16.mxu0 0
      %1516 = vmatpush1.bf16.msra.mxu0 0
      %1517 = vmatprep.subr.bf16.mxu0 0
      %1518 = vmatpush1.bf16.msra.mxu0 0
      %1519 = vmatprep.subr.bf16.mxu0 0
      %1520 = vmatpush1.bf16.msra.mxu0 0
      %1521 = vmatprep.subr.bf16.mxu0 0
      %1522 = vmatpush1.bf16.msra.mxu0 0
      %1523 = vmatprep.subr.bf16.mxu0 0
      %1524 = vmatpush1.bf16.msra.mxu0 0
      %1525 = vmatprep.subr.bf16.mxu0 0
      %1526 = vmatpush1.bf16.msra.mxu0 0
      %1527 = vmatprep.subr.bf16.mxu0 0
      %1528 = vmatpush1.bf16.msra.mxu0 0
      %1529 = vmatprep.subr.bf16.mxu0 0
      %1530 = vmatpush1.bf16.msra.mxu0 0
      %1531 = vmatprep.subr.bf16.mxu0 0
      %1532 = vmatpush1.bf16.msra.mxu0 0
      %1533 = vmatprep.subr.bf16.mxu0 0
      %1534 = vmatpush1.bf16.msra.mxu0 0
      %1535 = vmatprep.mubr.bf16.mxu0 0
      %1536 = vmatmul.mubr.bf16.gmra.mrb[0].mxu0 %v822
      %v1537 = vpop.f32.mrb[0].mxu0
      %v1538 = vadd.f32 0.0, %v1537
      %v1539 = vpop.f32.mrb[0].mxu0
      %v1540 = vpop.f32.mrb[0].mxu0
      %v1541 = vadd.f32 0.0, %v1540
      %v1542 = vpop.f32.mrb[0].mxu0
      %1543 = vmatprep.mubr.bf16.mxu0 0
      %1544 = vmatmul.mubr.bf16.gmra.mrb[0].mxu0 %v825
      %v1545 = vpop.f32.mrb[0].mxu0
      %v1546 = vadd.f32 0.0, %v1545
      %v1547 = vpop.f32.mrb[0].mxu0
      %v1548 = vpop.f32.mrb[0].mxu0
      %v1549 = vadd.f32 0.0, %v1548
      %v1550 = vpop.f32.mrb[0].mxu0
      %1551 = vmatprep.mubr.bf16.mxu0 0
      %1552 = vmatmul.mubr.bf16.gmra.mrb[0].mxu0 %v828
      %v1553 = vpop.f32.mrb[0].mxu0
      %v1554 = vadd.f32 0.0, %v1553
      %v1555 = vpop.f32.mrb[0].mxu0
      %v1556 = vpop.f32.mrb[0].mxu0
      %v1557 = vadd.f32 0.0, %v1556
      %v1558 = vpop.f32.mrb[0].mxu0
      %1559 = vmatprep.mubr.bf16.mxu0 0
      %1560 = vmatmul.mubr.bf16.gmra.mrb[0].mxu0 %v831
      %v1561 = vpop.f32.mrb[0].mxu0
      %v1562 = vadd.f32 0.0, %v1561
      %v1563 = vpop.f32.mrb[0].mxu0
      %v1564 = vpop.f32.mrb[0].mxu0
      %v1565 = vadd.f32 0.0, %v1564
      %v1566 = vpop.f32.mrb[0].mxu0
      %1567 = vmatprep.mubr.bf16.mxu0 0
      %1568 = vmatmul.mubr.bf16.gmra.mrb[0].mxu0 %v834
      %v1569 = vpop.f32.mrb[0].mxu0
      %v1570 = vadd.f32 0.0, %v1569
      %v1571 = vpop.f32.mrb[0].mxu0
      %v1572 = vpop.f32.mrb[0].mxu0
      %v1573 = vadd.f32 0.0, %v1572
      %v1574 = vpop.f32.mrb[0].mxu0
      %1575 = vmatprep.mubr.bf16.mxu0 0
      %1576 = vmatmul.mubr.bf16.gmra.mrb[0].mxu0 %v837
      %v1577 = vpop.f32.mrb[0].mxu0
      %v1578 = vadd.f32 0.0, %v1577
      %v1579 = vpop.f32.mrb[0].mxu0
      %v1580 = vpop.f32.mrb[0].mxu0
      %v1581 = vadd.f32 0.0, %v1580
      %v1582 = vpop.f32.mrb[0].mxu0
      %1583 = vmatprep.mubr.bf16.mxu0 0
      %1584 = vmatmul.mubr.bf16.gmra.mrb[0].mxu0 %v840
      %v1585 = vpop.f32.mrb[0].mxu0
      %v1586 = vadd.f32 0.0, %v1585
      %v1587 = vpop.f32.mrb[0].mxu0
      %v1588 = vpop.f32.mrb[0].mxu0
      %v1589 = vadd.f32 0.0, %v1588
      %v1590 = vpop.f32.mrb[0].mxu0
      %1591 = vmatprep.mubr.bf16.mxu0 0
      %1592 = vmatmul.mubr.bf16.gmra.mrb[0].mxu0 %v1501
      %v1593 = vpop.f32.mrb[0].mxu0
      %v1594 = vadd.f32 0.0, %v1593
      %v1595 = vpop.f32.mrb[0].mxu0
      %v1596 = vpop.f32.mrb[0].mxu0
      %v1597 = vadd.f32 0.0, %v1596
      %v1598 = vpop.f32.mrb[0].mxu0
      %1599 = vdwg.mxu0
      %v1600 = vadd.f32 %v1451, %v1538
      %v1601 = vadd.f32 %v1452, %v1541
      %v1602 = vadd.f32 %v1453, %v1546
      %v1603 = vadd.f32 %v1454, %v1549
      %v1604 = vadd.f32 %v1455, %v1554
      %v1605 = vadd.f32 %v1456, %v1557
      %v1606 = vadd.f32 %v1457, %v1562
      %v1607 = vadd.f32 %v1458, %v1565
      %v1608 = vadd.f32 %v1459, %v1570
      %v1609 = vadd.f32 %v1460, %v1573
      %v1610 = vadd.f32 %v1461, %v1578
      %v1611 = vadd.f32 %v1462, %v1581
      %v1612 = vadd.f32 %v1463, %v1586
      %v1613 = vadd.f32 %v1464, %v1589
      %v1614 = vadd.f32 %v1465, %v1594
      %v1615 = vadd.f32 %v1466, %v1597
      %v1617 = vrot.slane %v568, 5
      %v1618 = vrot.slane %v1617, 4
      %v1619 = vrot.slane %v569, 5
      %v1620 = vsel %vm1116, %v1618, %v1619
      %v1621 = vrot.slane %v1619, 4
      %v1622 = vrot.slane %v570, 5
      %v1623 = vsel %vm1116, %v1621, %v1622
      %v1624 = vunpack.c.l.b16 %v1620
      %v1625 = vunpack.c.l.b16 %v1623
      %v1626 = vpack.c.b16 %v1625, %v1624
      %v1629 = vunpack.c.l.b16 %v584
      %v1630 = vunpack.c.l.b16 %v585
      %v1631 = vpack.c.b16 %v1630, %v1629
      %v1634 = vsel %vm817, %v1626, 0
      %1636 = vmatprep.subr.bf16.mxu0 0
      %1637 = vmatpush1.bf16.msra.mxu0 %v1631
      %1638 = vmatprep.subr.bf16.mxu0 0
      %1639 = vmatpush1.bf16.msra.mxu0 0
      %1640 = vmatprep.subr.bf16.mxu0 0
      %1641 = vmatpush1.bf16.msra.mxu0 0
      %1642 = vmatprep.subr.bf16.mxu0 0
      %1643 = vmatpush1.bf16.msra.mxu0 0
      %1644 = vmatprep.subr.bf16.mxu0 0
      %1645 = vmatpush1.bf16.msra.mxu0 0
      %1646 = vmatprep.subr.bf16.mxu0 0
      %1647 = vmatpush1.bf16.msra.mxu0 0
      %1648 = vmatprep.subr.bf16.mxu0 0
      %1649 = vmatpush1.bf16.msra.mxu0 0
      %1650 = vmatprep.subr.bf16.mxu0 0
      %1651 = vmatpush1.bf16.msra.mxu0 0
      %1652 = vmatprep.subr.bf16.mxu0 0
      %1653 = vmatpush1.bf16.msra.mxu0 0
      %1654 = vmatprep.subr.bf16.mxu0 0
      %1655 = vmatpush1.bf16.msra.mxu0 0
      %1656 = vmatprep.subr.bf16.mxu0 0
      %1657 = vmatpush1.bf16.msra.mxu0 0
      %1658 = vmatprep.subr.bf16.mxu0 0
      %1659 = vmatpush1.bf16.msra.mxu0 0
      %1660 = vmatprep.subr.bf16.mxu0 0
      %1661 = vmatpush1.bf16.msra.mxu0 0
      %1662 = vmatprep.subr.bf16.mxu0 0
      %1663 = vmatpush1.bf16.msra.mxu0 0
      %1664 = vmatprep.subr.bf16.mxu0 0
      %1665 = vmatpush1.bf16.msra.mxu0 0
      %1666 = vmatprep.subr.bf16.mxu0 0
      %1667 = vmatpush1.bf16.msra.mxu0 0
      %1668 = vmatprep.mubr.bf16.mxu0 0
      %1669 = vmatmul.mubr.bf16.gmra.mrb[0].mxu0 %v1207
      %v1670 = vpop.f32.mrb[0].mxu0
      %v1671 = vadd.f32 0.0, %v1670
      %v1672 = vpop.f32.mrb[0].mxu0
      %v1673 = vpop.f32.mrb[0].mxu0
      %v1674 = vadd.f32 0.0, %v1673
      %v1675 = vpop.f32.mrb[0].mxu0
      %1676 = vmatprep.mubr.bf16.mxu0 0
      %1677 = vmatmul.mubr.bf16.gmra.mrb[0].mxu0 %v1210
      %v1678 = vpop.f32.mrb[0].mxu0
      %v1679 = vadd.f32 0.0, %v1678
      %v1680 = vpop.f32.mrb[0].mxu0
      %v1681 = vpop.f32.mrb[0].mxu0
      %v1682 = vadd.f32 0.0, %v1681
      %v1683 = vpop.f32.mrb[0].mxu0
      %1684 = vmatprep.mubr.bf16.mxu0 0
      %1685 = vmatmul.mubr.bf16.gmra.mrb[0].mxu0 %v1213
      %v1686 = vpop.f32.mrb[0].mxu0
      %v1687 = vadd.f32 0.0, %v1686
      %v1688 = vpop.f32.mrb[0].mxu0
      %v1689 = vpop.f32.mrb[0].mxu0
      %v1690 = vadd.f32 0.0, %v1689
      %v1691 = vpop.f32.mrb[0].mxu0
      %1692 = vmatprep.mubr.bf16.mxu0 0
      %1693 = vmatmul.mubr.bf16.gmra.mrb[0].mxu0 %v1216
      %v1694 = vpop.f32.mrb[0].mxu0
      %v1695 = vadd.f32 0.0, %v1694
      %v1696 = vpop.f32.mrb[0].mxu0
      %v1697 = vpop.f32.mrb[0].mxu0
      %v1698 = vadd.f32 0.0, %v1697
      %v1699 = vpop.f32.mrb[0].mxu0
      %1700 = vmatprep.mubr.bf16.mxu0 0
      %1701 = vmatmul.mubr.bf16.gmra.mrb[0].mxu0 %v1219
      %v1702 = vpop.f32.mrb[0].mxu0
      %v1703 = vadd.f32 0.0, %v1702
      %v1704 = vpop.f32.mrb[0].mxu0
      %v1705 = vpop.f32.mrb[0].mxu0
      %v1706 = vadd.f32 0.0, %v1705
      %v1707 = vpop.f32.mrb[0].mxu0
      %1708 = vmatprep.mubr.bf16.mxu0 0
      %1709 = vmatmul.mubr.bf16.gmra.mrb[0].mxu0 %v1222
      %v1710 = vpop.f32.mrb[0].mxu0
      %v1711 = vadd.f32 0.0, %v1710
      %v1712 = vpop.f32.mrb[0].mxu0
      %v1713 = vpop.f32.mrb[0].mxu0
      %v1714 = vadd.f32 0.0, %v1713
      %v1715 = vpop.f32.mrb[0].mxu0
      %1716 = vmatprep.mubr.bf16.mxu0 0
      %1717 = vmatmul.mubr.bf16.gmra.mrb[0].mxu0 %v1225
      %v1718 = vpop.f32.mrb[0].mxu0
      %v1719 = vadd.f32 0.0, %v1718
      %v1720 = vpop.f32.mrb[0].mxu0
      %v1721 = vpop.f32.mrb[0].mxu0
      %v1722 = vadd.f32 0.0, %v1721
      %v1723 = vpop.f32.mrb[0].mxu0
      %1724 = vmatprep.mubr.bf16.mxu0 0
      %1725 = vmatmul.mubr.bf16.gmra.mrb[0].mxu0 %v1634
      %v1726 = vpop.f32.mrb[0].mxu0
      %v1727 = vadd.f32 0.0, %v1726
      %v1728 = vpop.f32.mrb[0].mxu0
      %v1729 = vpop.f32.mrb[0].mxu0
      %v1730 = vadd.f32 0.0, %v1729
      %v1731 = vpop.f32.mrb[0].mxu0
      %1732 = vdwg.mxu0
      %v1733 = vadd.f32 %v1600, %v1671
      %v1734 = vadd.f32 %v1601, %v1674
      %v1735 = vadd.f32 %v1602, %v1679
      %v1736 = vadd.f32 %v1603, %v1682
      %v1737 = vadd.f32 %v1604, %v1687
      %v1738 = vadd.f32 %v1605, %v1690
      %v1739 = vadd.f32 %v1606, %v1695
      %v1740 = vadd.f32 %v1607, %v1698
      %v1741 = vadd.f32 %v1608, %v1703
      %v1742 = vadd.f32 %v1609, %v1706
      %v1743 = vadd.f32 %v1610, %v1711
      %v1744 = vadd.f32 %v1611, %v1714
      %v1745 = vadd.f32 %v1612, %v1719
      %v1746 = vadd.f32 %v1613, %v1722
      %v1747 = vadd.f32 %v1614, %v1727
      %v1748 = vadd.f32 %v1615, %v1730
      %v1751 = vunpack.c.l.b16 %v571
      %v1752 = vunpack.c.l.b16 %v572
      %v1753 = vpack.c.b16 %v1752, %v1751
      %v1756 = vunpack.c.l.b16 %v586
      %v1757 = vunpack.c.l.b16 %v587
      %v1758 = vpack.c.b16 %v1757, %v1756
      %v1761 = vsel %vm817, %v1753, 0
      %1763 = vmatprep.subr.bf16.mxu0 0
      %1764 = vmatpush1.bf16.msra.mxu0 %v1758
      %1765 = vmatprep.subr.bf16.mxu0 0
      %1766 = vmatpush1.bf16.msra.mxu0 0
      %1767 = vmatprep.subr.bf16.mxu0 0
      %1768 = vmatpush1.bf16.msra.mxu0 0
      %1769 = vmatprep.subr.bf16.mxu0 0
      %1770 = vmatpush1.bf16.msra.mxu0 0
      %1771 = vmatprep.subr.bf16.mxu0 0
      %1772 = vmatpush1.bf16.msra.mxu0 0
      %1773 = vmatprep.subr.bf16.mxu0 0
      %1774 = vmatpush1.bf16.msra.mxu0 0
      %1775 = vmatprep.subr.bf16.mxu0 0
      %1776 = vmatpush1.bf16.msra.mxu0 0
      %1777 = vmatprep.subr.bf16.mxu0 0
      %1778 = vmatpush1.bf16.msra.mxu0 0
      %1779 = vmatprep.subr.bf16.mxu0 0
      %1780 = vmatpush1.bf16.msra.mxu0 0
      %1781 = vmatprep.subr.bf16.mxu0 0
      %1782 = vmatpush1.bf16.msra.mxu0 0
      %1783 = vmatprep.subr.bf16.mxu0 0
      %1784 = vmatpush1.bf16.msra.mxu0 0
      %1785 = vmatprep.subr.bf16.mxu0 0
      %1786 = vmatpush1.bf16.msra.mxu0 0
      %1787 = vmatprep.subr.bf16.mxu0 0
      %1788 = vmatpush1.bf16.msra.mxu0 0
      %1789 = vmatprep.subr.bf16.mxu0 0
      %1790 = vmatpush1.bf16.msra.mxu0 0
      %1791 = vmatprep.subr.bf16.mxu0 0
      %1792 = vmatpush1.bf16.msra.mxu0 0
      %1793 = vmatprep.subr.bf16.mxu0 0
      %1794 = vmatpush1.bf16.msra.mxu0 0
      %1795 = vmatprep.mubr.bf16.mxu0 0
      %1796 = vmatmul.mubr.bf16.gmra.mrb[0].mxu0 %v992
      %v1797 = vpop.f32.mrb[0].mxu0
      %v1798 = vadd.f32 0.0, %v1797
      %v1799 = vpop.f32.mrb[0].mxu0
      %v1800 = vpop.f32.mrb[0].mxu0
      %v1801 = vadd.f32 0.0, %v1800
      %v1802 = vpop.f32.mrb[0].mxu0
      %1803 = vmatprep.mubr.bf16.mxu0 0
      %1804 = vmatmul.mubr.bf16.gmra.mrb[0].mxu0 %v995
      %v1805 = vpop.f32.mrb[0].mxu0
      %v1806 = vadd.f32 0.0, %v1805
      %v1807 = vpop.f32.mrb[0].mxu0
      %v1808 = vpop.f32.mrb[0].mxu0
      %v1809 = vadd.f32 0.0, %v1808
      %v1810 = vpop.f32.mrb[0].mxu0
      %1811 = vmatprep.mubr.bf16.mxu0 0
      %1812 = vmatmul.mubr.bf16.gmra.mrb[0].mxu0 %v998
      %v1813 = vpop.f32.mrb[0].mxu0
      %v1814 = vadd.f32 0.0, %v1813
      %v1815 = vpop.f32.mrb[0].mxu0
      %v1816 = vpop.f32.mrb[0].mxu0
      %v1817 = vadd.f32 0.0, %v1816
      %v1818 = vpop.f32.mrb[0].mxu0
      %1819 = vmatprep.mubr.bf16.mxu0 0
      %1820 = vmatmul.mubr.bf16.gmra.mrb[0].mxu0 %v1001
      %v1821 = vpop.f32.mrb[0].mxu0
      %v1822 = vadd.f32 0.0, %v1821
      %v1823 = vpop.f32.mrb[0].mxu0
      %v1824 = vpop.f32.mrb[0].mxu0
      %v1825 = vadd.f32 0.0, %v1824
      %v1826 = vpop.f32.mrb[0].mxu0
      %1827 = vmatprep.mubr.bf16.mxu0 0
      %1828 = vmatmul.mubr.bf16.gmra.mrb[0].mxu0 %v1004
      %v1829 = vpop.f32.mrb[0].mxu0
      %v1830 = vadd.f32 0.0, %v1829
      %v1831 = vpop.f32.mrb[0].mxu0
      %v1832 = vpop.f32.mrb[0].mxu0
      %v1833 = vadd.f32 0.0, %v1832
      %v1834 = vpop.f32.mrb[0].mxu0
      %1835 = vmatprep.mubr.bf16.mxu0 0
      %1836 = vmatmul.mubr.bf16.gmra.mrb[0].mxu0 %v1007
      %v1837 = vpop.f32.mrb[0].mxu0
      %v1838 = vadd.f32 0.0, %v1837
      %v1839 = vpop.f32.mrb[0].mxu0
      %v1840 = vpop.f32.mrb[0].mxu0
      %v1841 = vadd.f32 0.0, %v1840
      %v1842 = vpop.f32.mrb[0].mxu0
      %1843 = vmatprep.mubr.bf16.mxu0 0
      %1844 = vmatmul.mubr.bf16.gmra.mrb[0].mxu0 %v1352
      %v1845 = vpop.f32.mrb[0].mxu0
      %v1846 = vadd.f32 0.0, %v1845
      %v1847 = vpop.f32.mrb[0].mxu0
      %v1848 = vpop.f32.mrb[0].mxu0
      %v1849 = vadd.f32 0.0, %v1848
      %v1850 = vpop.f32.mrb[0].mxu0
      %1851 = vmatprep.mubr.bf16.mxu0 0
      %1852 = vmatmul.mubr.bf16.gmra.mrb[0].mxu0 %v1761
      %v1853 = vpop.f32.mrb[0].mxu0
      %v1854 = vadd.f32 0.0, %v1853
      %v1855 = vpop.f32.mrb[0].mxu0
      %v1856 = vpop.f32.mrb[0].mxu0
      %v1857 = vadd.f32 0.0, %v1856
      %v1858 = vpop.f32.mrb[0].mxu0
      %1859 = vdwg.mxu0
      %v1860 = vadd.f32 %v1733, %v1798
      %v1861 = vadd.f32 %v1734, %v1801
      %v1862 = vadd.f32 %v1735, %v1806
      %v1863 = vadd.f32 %v1736, %v1809
      %v1864 = vadd.f32 %v1737, %v1814
      %v1865 = vadd.f32 %v1738, %v1817
      %v1866 = vadd.f32 %v1739, %v1822
      %v1867 = vadd.f32 %v1740, %v1825
      %v1868 = vadd.f32 %v1741, %v1830
      %v1869 = vadd.f32 %v1742, %v1833
      %v1870 = vadd.f32 %v1743, %v1838
      %v1871 = vadd.f32 %v1744, %v1841
      %v1872 = vadd.f32 %v1745, %v1846
      %v1873 = vadd.f32 %v1746, %v1849
      %v1874 = vadd.f32 %v1747, %v1854
      %v1875 = vadd.f32 %v1748, %v1857
      %v1877 = vshrl.u32 %v571, 16
      %v1879 = vrot.slane %v1877, 4
      %v1880 = vshll.u32 %v571, 16
      %v1882 = vrot.slane %v1880, 5
      %v1883 = vor.u32 %v1879, %v1882
      %v1884 = vrot.slane %v1883, 4
      %v1886 = vshll.u32 %v572, 16
      %v1888 = vrot.slane %v1886, 5
      %v1889 = vsel %vm594, %v1884, %v1888
      %v1890 = vshrl.u32 %v572, 16
      %v1892 = vrot.slane %v1890, 4
      %v1893 = vor.u32 %v1892, %v1888
      %v1894 = vrot.slane %v1893, 4
      %v1896 = vshll.u32 %v573, 16
      %v1898 = vrot.slane %v1896, 5
      %v1899 = vsel %vm594, %v1894, %v1898
      %v1900 = vunpack.c.l.b16 %v1889
      %v1901 = vunpack.c.l.b16 %v1899
      %v1902 = vpack.c.b16 %v1901, %v1900
      %v1905 = vunpack.c.l.b16 %v588
      %v1906 = vunpack.c.l.b16 %v589
      %v1907 = vpack.c.b16 %v1906, %v1905
      %v1910 = vsel %vm817, %v1902, 0
      %1912 = vmatprep.subr.bf16.mxu0 0
      %1913 = vmatpush1.bf16.msra.mxu0 %v1907
      %1914 = vmatprep.subr.bf16.mxu0 0
      %1915 = vmatpush1.bf16.msra.mxu0 0
      %1916 = vmatprep.subr.bf16.mxu0 0
      %1917 = vmatpush1.bf16.msra.mxu0 0
      %1918 = vmatprep.subr.bf16.mxu0 0
      %1919 = vmatpush1.bf16.msra.mxu0 0
      %1920 = vmatprep.subr.bf16.mxu0 0
      %1921 = vmatpush1.bf16.msra.mxu0 0
      %1922 = vmatprep.subr.bf16.mxu0 0
      %1923 = vmatpush1.bf16.msra.mxu0 0
      %1924 = vmatprep.subr.bf16.mxu0 0
      %1925 = vmatpush1.bf16.msra.mxu0 0
      %1926 = vmatprep.subr.bf16.mxu0 0
      %1927 = vmatpush1.bf16.msra.mxu0 0
      %1928 = vmatprep.subr.bf16.mxu0 0
      %1929 = vmatpush1.bf16.msra.mxu0 0
      %1930 = vmatprep.subr.bf16.mxu0 0
      %1931 = vmatpush1.bf16.msra.mxu0 0
      %1932 = vmatprep.subr.bf16.mxu0 0
      %1933 = vmatpush1.bf16.msra.mxu0 0
      %1934 = vmatprep.subr.bf16.mxu0 0
      %1935 = vmatpush1.bf16.msra.mxu0 0
      %1936 = vmatprep.subr.bf16.mxu0 0
      %1937 = vmatpush1.bf16.msra.mxu0 0
      %1938 = vmatprep.subr.bf16.mxu0 0
      %1939 = vmatpush1.bf16.msra.mxu0 0
      %1940 = vmatprep.subr.bf16.mxu0 0
      %1941 = vmatpush1.bf16.msra.mxu0 0
      %1942 = vmatprep.subr.bf16.mxu0 0
      %1943 = vmatpush1.bf16.msra.mxu0 0
      %1944 = vmatprep.mubr.bf16.mxu0 0
      %1945 = vmatmul.mubr.bf16.gmra.mrb[0].mxu0 %v825
      %v1946 = vpop.f32.mrb[0].mxu0
      %v1947 = vadd.f32 0.0, %v1946
      %v1948 = vpop.f32.mrb[0].mxu0
      %v1949 = vpop.f32.mrb[0].mxu0
      %v1950 = vadd.f32 0.0, %v1949
      %v1951 = vpop.f32.mrb[0].mxu0
      %1952 = vmatprep.mubr.bf16.mxu0 0
      %1953 = vmatmul.mubr.bf16.gmra.mrb[0].mxu0 %v828
      %v1954 = vpop.f32.mrb[0].mxu0
      %v1955 = vadd.f32 0.0, %v1954
      %v1956 = vpop.f32.mrb[0].mxu0
      %v1957 = vpop.f32.mrb[0].mxu0
      %v1958 = vadd.f32 0.0, %v1957
      %v1959 = vpop.f32.mrb[0].mxu0
      %1960 = vmatprep.mubr.bf16.mxu0 0
      %1961 = vmatmul.mubr.bf16.gmra.mrb[0].mxu0 %v831
      %v1962 = vpop.f32.mrb[0].mxu0
      %v1963 = vadd.f32 0.0, %v1962
      %v1964 = vpop.f32.mrb[0].mxu0
      %v1965 = vpop.f32.mrb[0].mxu0
      %v1966 = vadd.f32 0.0, %v1965
      %v1967 = vpop.f32.mrb[0].mxu0
      %1968 = vmatprep.mubr.bf16.mxu0 0
      %1969 = vmatmul.mubr.bf16.gmra.mrb[0].mxu0 %v834
      %v1970 = vpop.f32.mrb[0].mxu0
      %v1971 = vadd.f32 0.0, %v1970
      %v1972 = vpop.f32.mrb[0].mxu0
      %v1973 = vpop.f32.mrb[0].mxu0
      %v1974 = vadd.f32 0.0, %v1973
      %v1975 = vpop.f32.mrb[0].mxu0
      %1976 = vmatprep.mubr.bf16.mxu0 0
      %1977 = vmatmul.mubr.bf16.gmra.mrb[0].mxu0 %v837
      %v1978 = vpop.f32.mrb[0].mxu0
      %v1979 = vadd.f32 0.0, %v1978
      %v1980 = vpop.f32.mrb[0].mxu0
      %v1981 = vpop.f32.mrb[0].mxu0
      %v1982 = vadd.f32 0.0, %v1981
      %v1983 = vpop.f32.mrb[0].mxu0
      %1984 = vmatprep.mubr.bf16.mxu0 0
      %1985 = vmatmul.mubr.bf16.gmra.mrb[0].mxu0 %v840
      %v1986 = vpop.f32.mrb[0].mxu0
      %v1987 = vadd.f32 0.0, %v1986
      %v1988 = vpop.f32.mrb[0].mxu0
      %v1989 = vpop.f32.mrb[0].mxu0
      %v1990 = vadd.f32 0.0, %v1989
      %v1991 = vpop.f32.mrb[0].mxu0
      %1992 = vmatprep.mubr.bf16.mxu0 0
      %1993 = vmatmul.mubr.bf16.gmra.mrb[0].mxu0 %v1501
      %v1994 = vpop.f32.mrb[0].mxu0
      %v1995 = vadd.f32 0.0, %v1994
      %v1996 = vpop.f32.mrb[0].mxu0
      %v1997 = vpop.f32.mrb[0].mxu0
      %v1998 = vadd.f32 0.0, %v1997
      %v1999 = vpop.f32.mrb[0].mxu0
      %2000 = vmatprep.mubr.bf16.mxu0 0
      %2001 = vmatmul.mubr.bf16.gmra.mrb[0].mxu0 %v1910
      %v2002 = vpop.f32.mrb[0].mxu0
      %v2003 = vadd.f32 0.0, %v2002
      %v2004 = vpop.f32.mrb[0].mxu0
      %v2005 = vpop.f32.mrb[0].mxu0
      %v2006 = vadd.f32 0.0, %v2005
      %v2007 = vpop.f32.mrb[0].mxu0
      %2008 = vdwg.mxu0
      %v2009 = vadd.f32 %v1860, %v1947
      %v2010 = vadd.f32 %v1861, %v1950
      %v2011 = vadd.f32 %v1862, %v1955
      %v2012 = vadd.f32 %v1863, %v1958
      %v2013 = vadd.f32 %v1864, %v1963
      %v2014 = vadd.f32 %v1865, %v1966
      %v2015 = vadd.f32 %v1866, %v1971
      %v2016 = vadd.f32 %v1867, %v1974
      %v2017 = vadd.f32 %v1868, %v1979
      %v2018 = vadd.f32 %v1869, %v1982
      %v2019 = vadd.f32 %v1870, %v1987
      %v2020 = vadd.f32 %v1871, %v1990
      %v2021 = vadd.f32 %v1872, %v1995
      %v2022 = vadd.f32 %v1873, %v1998
      %v2023 = vadd.f32 %v1874, %v2003
      %v2024 = vadd.f32 %v1875, %v2006
      %v2026 = vrot.slane %v571, 5
      %v2027 = vrot.slane %v2026, 4
      %v2028 = vrot.slane %v572, 5
      %v2029 = vsel %vm1116, %v2027, %v2028
      %v2030 = vrot.slane %v2028, 4
      %v2031 = vrot.slane %v573, 5
      %v2032 = vsel %vm1116, %v2030, %v2031
      %v2033 = vunpack.c.l.b16 %v2029
      %v2034 = vunpack.c.l.b16 %v2032
      %v2035 = vpack.c.b16 %v2034, %v2033
      %v2038 = vunpack.c.l.b16 %v590
      %v2039 = vunpack.c.l.b16 %v591
      %v2040 = vpack.c.b16 %v2039, %v2038
      %v2043 = vsel %vm817, %v2035, 0
      %2045 = vmatprep.subr.bf16.mxu0 0
      %2046 = vmatpush1.bf16.msra.mxu0 %v2040
      %2047 = vmatprep.subr.bf16.mxu0 0
      %2048 = vmatpush1.bf16.msra.mxu0 0
      %2049 = vmatprep.subr.bf16.mxu0 0
      %2050 = vmatpush1.bf16.msra.mxu0 0
      %2051 = vmatprep.subr.bf16.mxu0 0
      %2052 = vmatpush1.bf16.msra.mxu0 0
      %2053 = vmatprep.subr.bf16.mxu0 0
      %2054 = vmatpush1.bf16.msra.mxu0 0
      %2055 = vmatprep.subr.bf16.mxu0 0
      %2056 = vmatpush1.bf16.msra.mxu0 0
      %2057 = vmatprep.subr.bf16.mxu0 0
      %2058 = vmatpush1.bf16.msra.mxu0 0
      %2059 = vmatprep.subr.bf16.mxu0 0
      %2060 = vmatpush1.bf16.msra.mxu0 0
      %2061 = vmatprep.subr.bf16.mxu0 0
      %2062 = vmatpush1.bf16.msra.mxu0 0
      %2063 = vmatprep.subr.bf16.mxu0 0
      %2064 = vmatpush1.bf16.msra.mxu0 0
      %2065 = vmatprep.subr.bf16.mxu0 0
      %2066 = vmatpush1.bf16.msra.mxu0 0
      %2067 = vmatprep.subr.bf16.mxu0 0
      %2068 = vmatpush1.bf16.msra.mxu0 0
      %2069 = vmatprep.subr.bf16.mxu0 0
      %2070 = vmatpush1.bf16.msra.mxu0 0
      %2071 = vmatprep.subr.bf16.mxu0 0
      %2072 = vmatpush1.bf16.msra.mxu0 0
      %2073 = vmatprep.subr.bf16.mxu0 0
      %2074 = vmatpush1.bf16.msra.mxu0 0
      %2075 = vmatprep.subr.bf16.mxu0 0
      %2076 = vmatpush1.bf16.msra.mxu0 0
      %2077 = vmatprep.mubr.bf16.mxu0 0
      %2078 = vmatmul.mubr.bf16.gmra.mrb[0].mxu0 %v1210
      %v2079 = vpop.f32.mrb[0].mxu0
      %v2080 = vadd.f32 0.0, %v2079
      %v2081 = vpop.f32.mrb[0].mxu0
      %v2082 = vpop.f32.mrb[0].mxu0
      %v2083 = vadd.f32 0.0, %v2082
      %v2084 = vpop.f32.mrb[0].mxu0
      %2085 = vmatprep.mubr.bf16.mxu0 0
      %2086 = vmatmul.mubr.bf16.gmra.mrb[0].mxu0 %v1213
      %v2087 = vpop.f32.mrb[0].mxu0
      %v2088 = vadd.f32 0.0, %v2087
      %v2089 = vpop.f32.mrb[0].mxu0
      %v2090 = vpop.f32.mrb[0].mxu0
      %v2091 = vadd.f32 0.0, %v2090
      %v2092 = vpop.f32.mrb[0].mxu0
      %2093 = vmatprep.mubr.bf16.mxu0 0
      %2094 = vmatmul.mubr.bf16.gmra.mrb[0].mxu0 %v1216
      %v2095 = vpop.f32.mrb[0].mxu0
      %v2096 = vadd.f32 0.0, %v2095
      %v2097 = vpop.f32.mrb[0].mxu0
      %v2098 = vpop.f32.mrb[0].mxu0
      %v2099 = vadd.f32 0.0, %v2098
      %v2100 = vpop.f32.mrb[0].mxu0
      %2101 = vmatprep.mubr.bf16.mxu0 0
      %2102 = vmatmul.mubr.bf16.gmra.mrb[0].mxu0 %v1219
      %v2103 = vpop.f32.mrb[0].mxu0
      %v2104 = vadd.f32 0.0, %v2103
      %v2105 = vpop.f32.mrb[0].mxu0
      %v2106 = vpop.f32.mrb[0].mxu0
      %v2107 = vadd.f32 0.0, %v2106
      %v2108 = vpop.f32.mrb[0].mxu0
      %2109 = vmatprep.mubr.bf16.mxu0 0
      %2110 = vmatmul.mubr.bf16.gmra.mrb[0].mxu0 %v1222
      %v2111 = vpop.f32.mrb[0].mxu0
      %v2112 = vadd.f32 0.0, %v2111
      %v2113 = vpop.f32.mrb[0].mxu0
      %v2114 = vpop.f32.mrb[0].mxu0
      %v2115 = vadd.f32 0.0, %v2114
      %v2116 = vpop.f32.mrb[0].mxu0
      %2117 = vmatprep.mubr.bf16.mxu0 0
      %2118 = vmatmul.mubr.bf16.gmra.mrb[0].mxu0 %v1225
      %v2119 = vpop.f32.mrb[0].mxu0
      %v2120 = vadd.f32 0.0, %v2119
      %v2121 = vpop.f32.mrb[0].mxu0
      %v2122 = vpop.f32.mrb[0].mxu0
      %v2123 = vadd.f32 0.0, %v2122
      %v2124 = vpop.f32.mrb[0].mxu0
      %2125 = vmatprep.mubr.bf16.mxu0 0
      %2126 = vmatmul.mubr.bf16.gmra.mrb[0].mxu0 %v1634
      %v2127 = vpop.f32.mrb[0].mxu0
      %v2128 = vadd.f32 0.0, %v2127
      %v2129 = vpop.f32.mrb[0].mxu0
      %v2130 = vpop.f32.mrb[0].mxu0
      %v2131 = vadd.f32 0.0, %v2130
      %v2132 = vpop.f32.mrb[0].mxu0
      %2133 = vmatprep.mubr.bf16.mxu0 0
      %2134 = vmatmul.mubr.bf16.gmra.mrb[0].mxu0 %v2043
      %v2135 = vpop.f32.mrb[0].mxu0
      %v2136 = vadd.f32 0.0, %v2135
      %v2137 = vpop.f32.mrb[0].mxu0
      %v2138 = vpop.f32.mrb[0].mxu0
      %v2139 = vadd.f32 0.0, %v2138
      %v2140 = vpop.f32.mrb[0].mxu0
      %2141 = vdwg.mxu0
      %v2142 = vadd.f32 %v2009, %v2080
      %v2143 = vadd.f32 %v2010, %v2083
      %v2144 = vadd.f32 %v2011, %v2088
      %v2145 = vadd.f32 %v2012, %v2091
      %v2146 = vadd.f32 %v2013, %v2096
      %v2147 = vadd.f32 %v2014, %v2099
      %v2148 = vadd.f32 %v2015, %v2104
      %v2149 = vadd.f32 %v2016, %v2107
      %v2150 = vadd.f32 %v2017, %v2112
      %v2151 = vadd.f32 %v2018, %v2115
      %v2152 = vadd.f32 %v2019, %v2120
      %v2153 = vadd.f32 %v2020, %v2123
      %v2154 = vadd.f32 %v2021, %v2128
      %v2155 = vadd.f32 %v2022, %v2131
      %v2156 = vadd.f32 %v2023, %v2136
      %v2157 = vadd.f32 %v2024, %v2139
      %v2158 = vld [vmem:[%s511] sm:$0xf]
      %v2159 = vld [vmem:[%s511 + $0x4] sm:$0xf]
      %v2160 = vld [vmem:[%s511 + $0x8] sm:$0x1]
      %v2161 = vld [vmem:[%s511 + $0xc] sm:$0xf]
      %v2162 = vld [vmem:[%s511 + $0x10] sm:$0xf]
      %v2163 = vld [vmem:[%s511 + $0x14] sm:$0x1]
      %v2164 = vld [vmem:[%s511 + $0x18] sm:$0xf]
      %v2165 = vld [vmem:[%s511 + $0x1c] sm:$0xf]
      %v2166 = vld [vmem:[%s511 + $0x20] sm:$0x1]
      %v2167 = vld [vmem:[%s511 + $0x24] sm:$0xf]
      %v2168 = vld [vmem:[%s511 + $0x28] sm:$0xf]
      %v2169 = vld [vmem:[%s511 + $0x2c] sm:$0x1]
      %v2170 = vld [vmem:[%s511 + $0x30] sm:$0xf]
      %v2171 = vld [vmem:[%s511 + $0x34] sm:$0xf]
      %v2172 = vld [vmem:[%s511 + $0x38] sm:$0x1]
      %v2173 = vld [vmem:[%s511 + $0x3c] sm:$0xf]
      %v2174 = vld [vmem:[%s511 + $0x40] sm:$0xf]
      %v2175 = vld [vmem:[%s511 + $0x44] sm:$0x1]
      %v2176 = vld [vmem:[%s511 + $0x48] sm:$0xf]
      %v2177 = vld [vmem:[%s511 + $0x4c] sm:$0xf]
      %v2178 = vld [vmem:[%s511 + $0x50] sm:$0x1]
      %v2179 = vld [vmem:[%s511 + $0x54] sm:$0xf]
      %v2180 = vld [vmem:[%s511 + $0x58] sm:$0xf]
      %v2181 = vld [vmem:[%s511 + $0x5c] sm:$0x1]
      %v2182 = vld [vmem:[%s529] sm:$0xf]
      %v2183 = vld [vmem:[%s529 + $0x4] sm:$0xf]
      %v2184 = vld [vmem:[%s529 + $0x8] sm:$0x1]
      %v2185 = vld [vmem:[%s529 + $0xc] sm:$0xf]
      %v2186 = vld [vmem:[%s529 + $0x10] sm:$0xf]
      %v2187 = vld [vmem:[%s529 + $0x14] sm:$0x1]
      %v2188 = vld [vmem:[%s5] sm:$0xf]
      %v2189 = vld [vmem:[%s5 + $0x4] sm:$0xf]
      %v2190 = vld [vmem:[%s5 + $0x8] sm:$0xf]
      %v2191 = vld [vmem:[%s5 + $0xc] sm:$0xf]
      %v2192 = vld [vmem:[%s5 + $0x10] sm:$0xf]
      %v2193 = vld [vmem:[%s5 + $0x14] sm:$0xf]
      %v2194 = vld [vmem:[%s5 + $0x18] sm:$0xf]
      %v2195 = vld [vmem:[%s5 + $0x1c] sm:$0xf]
      %v2196 = vld [vmem:[%s5 + $0x20] sm:$0xf]
      %v2197 = vld [vmem:[%s5 + $0x24] sm:$0xf]
      %v2198 = vld [vmem:[%s5 + $0x28] sm:$0xf]
      %v2199 = vld [vmem:[%s5 + $0x2c] sm:$0xf]
      %v2200 = vld [vmem:[%s5 + $0x30] sm:$0xf]
      %v2201 = vld [vmem:[%s5 + $0x34] sm:$0xf]
      %v2202 = vld [vmem:[%s5 + $0x38] sm:$0xf]
      %v2203 = vld [vmem:[%s5 + $0x3c] sm:$0xf]
      %v2204 = vld [vmem:[%s5 + $0x40] sm:$0xf]
      %v2205 = vld [vmem:[%s5 + $0x44] sm:$0xf]
      %v2222 = vunpack.c.l.b16 %v2158
      %v2223 = vunpack.c.l.b16 %v2159
      %v2224 = vunpack.c.l.b16 %v2161
      %v2225 = vunpack.c.l.b16 %v2162
      %v2226 = vunpack.c.l.b16 %v2164
      %v2227 = vunpack.c.l.b16 %v2165
      %v2228 = vunpack.c.l.b16 %v2167
      %v2229 = vunpack.c.l.b16 %v2168
      %v2230 = vunpack.c.l.b16 %v2170
      %v2231 = vunpack.c.l.b16 %v2171
      %v2232 = vunpack.c.l.b16 %v2173
      %v2233 = vunpack.c.l.b16 %v2174
      %v2234 = vunpack.c.l.b16 %v2176
      %v2235 = vunpack.c.l.b16 %v2177
      %v2236 = vunpack.c.l.b16 %v2179
      %v2237 = vunpack.c.l.b16 %v2180
      %v2238 = vpack.c.b16 %v2223, %v2222
      %v2239 = vpack.c.b16 %v2225, %v2224
      %v2240 = vpack.c.b16 %v2227, %v2226
      %v2241 = vpack.c.b16 %v2229, %v2228
      %v2242 = vpack.c.b16 %v2231, %v2230
      %v2243 = vpack.c.b16 %v2233, %v2232
      %v2244 = vpack.c.b16 %v2235, %v2234
      %v2245 = vpack.c.b16 %v2237, %v2236
      %v2248 = vunpack.c.l.b16 %v2188
      %v2249 = vunpack.c.l.b16 %v2189
      %v2250 = vpack.c.b16 %v2249, %v2248
      %v2253 = vsel %vm817, %v2238, 0
      %v2256 = vsel %vm817, %v2239, 0
      %v2259 = vsel %vm817, %v2240, 0
      %v2262 = vsel %vm817, %v2241, 0
      %v2265 = vsel %vm817, %v2242, 0
      %v2268 = vsel %vm817, %v2243, 0
      %v2271 = vsel %vm817, %v2244, 0
      %v2274 = vsel %vm817, %v2245, 0
      %2276 = vmatprep.subr.bf16.mxu0 0
      %2277 = vmatpush1.bf16.msra.mxu0 %v2250
      %2278 = vmatprep.subr.bf16.mxu0 0
      %2279 = vmatpush1.bf16.msra.mxu0 0
      %2280 = vmatprep.subr.bf16.mxu0 0
      %2281 = vmatpush1.bf16.msra.mxu0 0
      %2282 = vmatprep.subr.bf16.mxu0 0
      %2283 = vmatpush1.bf16.msra.mxu0 0
      %2284 = vmatprep.subr.bf16.mxu0 0
      %2285 = vmatpush1.bf16.msra.mxu0 0
      %2286 = vmatprep.subr.bf16.mxu0 0
      %2287 = vmatpush1.bf16.msra.mxu0 0
      %2288 = vmatprep.subr.bf16.mxu0 0
      %2289 = vmatpush1.bf16.msra.mxu0 0
      %2290 = vmatprep.subr.bf16.mxu0 0
      %2291 = vmatpush1.bf16.msra.mxu0 0
      %2292 = vmatprep.subr.bf16.mxu0 0
      %2293 = vmatpush1.bf16.msra.mxu0 0
      %2294 = vmatprep.subr.bf16.mxu0 0
      %2295 = vmatpush1.bf16.msra.mxu0 0
      %2296 = vmatprep.subr.bf16.mxu0 0
      %2297 = vmatpush1.bf16.msra.mxu0 0
      %2298 = vmatprep.subr.bf16.mxu0 0
      %2299 = vmatpush1.bf16.msra.mxu0 0
      %2300 = vmatprep.subr.bf16.mxu0 0
      %2301 = vmatpush1.bf16.msra.mxu0 0
      %2302 = vmatprep.subr.bf16.mxu0 0
      %2303 = vmatpush1.bf16.msra.mxu0 0
      %2304 = vmatprep.subr.bf16.mxu0 0
      %2305 = vmatpush1.bf16.msra.mxu0 0
      %2306 = vmatprep.subr.bf16.mxu0 0
      %2307 = vmatpush1.bf16.msra.mxu0 0
      %2308 = vmatprep.mubr.bf16.mxu0 0
      %2309 = vmatmul.mubr.bf16.gmra.mrb[0].mxu0 %v2253
      %v2310 = vpop.f32.mrb[0].mxu0
      %v2311 = vadd.f32 0.0, %v2310
      %v2312 = vpop.f32.mrb[0].mxu0
      %v2313 = vpop.f32.mrb[0].mxu0
      %v2314 = vadd.f32 0.0, %v2313
      %v2315 = vpop.f32.mrb[0].mxu0
      %2316 = vmatprep.mubr.bf16.mxu0 0
      %2317 = vmatmul.mubr.bf16.gmra.mrb[0].mxu0 %v2256
      %v2318 = vpop.f32.mrb[0].mxu0
      %v2319 = vadd.f32 0.0, %v2318
      %v2320 = vpop.f32.mrb[0].mxu0
      %v2321 = vpop.f32.mrb[0].mxu0
      %v2322 = vadd.f32 0.0, %v2321
      %v2323 = vpop.f32.mrb[0].mxu0
      %2324 = vmatprep.mubr.bf16.mxu0 0
      %2325 = vmatmul.mubr.bf16.gmra.mrb[0].mxu0 %v2259
      %v2326 = vpop.f32.mrb[0].mxu0
      %v2327 = vadd.f32 0.0, %v2326
      %v2328 = vpop.f32.mrb[0].mxu0
      %v2329 = vpop.f32.mrb[0].mxu0
      %v2330 = vadd.f32 0.0, %v2329
      %v2331 = vpop.f32.mrb[0].mxu0
      %2332 = vmatprep.mubr.bf16.mxu0 0
      %2333 = vmatmul.mubr.bf16.gmra.mrb[0].mxu0 %v2262
      %v2334 = vpop.f32.mrb[0].mxu0
      %v2335 = vadd.f32 0.0, %v2334
      %v2336 = vpop.f32.mrb[0].mxu0
      %v2337 = vpop.f32.mrb[0].mxu0
      %v2338 = vadd.f32 0.0, %v2337
      %v2339 = vpop.f32.mrb[0].mxu0
      %2340 = vmatprep.mubr.bf16.mxu0 0
      %2341 = vmatmul.mubr.bf16.gmra.mrb[0].mxu0 %v2265
      %v2342 = vpop.f32.mrb[0].mxu0
      %v2343 = vadd.f32 0.0, %v2342
      %v2344 = vpop.f32.mrb[0].mxu0
      %v2345 = vpop.f32.mrb[0].mxu0
      %v2346 = vadd.f32 0.0, %v2345
      %v2347 = vpop.f32.mrb[0].mxu0
      %2348 = vmatprep.mubr.bf16.mxu0 0
      %2349 = vmatmul.mubr.bf16.gmra.mrb[0].mxu0 %v2268
      %v2350 = vpop.f32.mrb[0].mxu0
      %v2351 = vadd.f32 0.0, %v2350
      %v2352 = vpop.f32.mrb[0].mxu0
      %v2353 = vpop.f32.mrb[0].mxu0
      %v2354 = vadd.f32 0.0, %v2353
      %v2355 = vpop.f32.mrb[0].mxu0
      %2356 = vmatprep.mubr.bf16.mxu0 0
      %2357 = vmatmul.mubr.bf16.gmra.mrb[0].mxu0 %v2271
      %v2358 = vpop.f32.mrb[0].mxu0
      %v2359 = vadd.f32 0.0, %v2358
      %v2360 = vpop.f32.mrb[0].mxu0
      %v2361 = vpop.f32.mrb[0].mxu0
      %v2362 = vadd.f32 0.0, %v2361
      %v2363 = vpop.f32.mrb[0].mxu0
      %2364 = vmatprep.mubr.bf16.mxu0 0
      %2365 = vmatmul.mubr.bf16.gmra.mrb[0].mxu0 %v2274
      %v2366 = vpop.f32.mrb[0].mxu0
      %v2367 = vadd.f32 0.0, %v2366
      %v2368 = vpop.f32.mrb[0].mxu0
      %v2369 = vpop.f32.mrb[0].mxu0
      %v2370 = vadd.f32 0.0, %v2369
      %v2371 = vpop.f32.mrb[0].mxu0
      %2372 = vdwg.mxu0
      %v2373 = vadd.f32 %v2142, %v2311
      %v2374 = vadd.f32 %v2143, %v2314
      %v2375 = vadd.f32 %v2144, %v2319
      %v2376 = vadd.f32 %v2145, %v2322
      %v2377 = vadd.f32 %v2146, %v2327
      %v2378 = vadd.f32 %v2147, %v2330
      %v2379 = vadd.f32 %v2148, %v2335
      %v2380 = vadd.f32 %v2149, %v2338
      %v2381 = vadd.f32 %v2150, %v2343
      %v2382 = vadd.f32 %v2151, %v2346
      %v2383 = vadd.f32 %v2152, %v2351
      %v2384 = vadd.f32 %v2153, %v2354
      %v2385 = vadd.f32 %v2154, %v2359
      %v2386 = vadd.f32 %v2155, %v2362
      %v2387 = vadd.f32 %v2156, %v2367
      %v2388 = vadd.f32 %v2157, %v2370
      %v2390 = vshrl.u32 %v2158, 16
      %v2392 = vrot.slane %v2390, 4
      %v2393 = vshll.u32 %v2158, 16
      %v2395 = vrot.slane %v2393, 5
      %v2396 = vor.u32 %v2392, %v2395
      %v2397 = vrot.slane %v2396, 4
      %v2399 = vshll.u32 %v2159, 16
      %v2401 = vrot.slane %v2399, 5
      %v2402 = vsel %vm594, %v2397, %v2401
      %v2403 = vshrl.u32 %v2159, 16
      %v2405 = vrot.slane %v2403, 4
      %v2406 = vor.u32 %v2405, %v2401
      %v2407 = vrot.slane %v2406, 4
      %v2409 = vshll.u32 %v2160, 16
      %v2411 = vrot.slane %v2409, 5
      %v2412 = vsel %vm594, %v2407, %v2411
      %v2414 = vshrl.u32 %v2161, 16
      %v2416 = vrot.slane %v2414, 4
      %v2417 = vshll.u32 %v2161, 16
      %v2419 = vrot.slane %v2417, 5
      %v2420 = vor.u32 %v2416, %v2419
      %v2421 = vrot.slane %v2420, 4
      %v2423 = vshll.u32 %v2162, 16
      %v2425 = vrot.slane %v2423, 5
      %v2426 = vsel %vm594, %v2421, %v2425
      %v2427 = vshrl.u32 %v2162, 16
      %v2429 = vrot.slane %v2427, 4
      %v2430 = vor.u32 %v2429, %v2425
      %v2431 = vrot.slane %v2430, 4
      %v2433 = vshll.u32 %v2163, 16
      %v2435 = vrot.slane %v2433, 5
      %v2436 = vsel %vm594, %v2431, %v2435
      %v2438 = vshrl.u32 %v2164, 16
      %v2440 = vrot.slane %v2438, 4
      %v2441 = vshll.u32 %v2164, 16
      %v2443 = vrot.slane %v2441, 5
      %v2444 = vor.u32 %v2440, %v2443
      %v2445 = vrot.slane %v2444, 4
      %v2447 = vshll.u32 %v2165, 16
      %v2449 = vrot.slane %v2447, 5
      %v2450 = vsel %vm594, %v2445, %v2449
      %v2451 = vshrl.u32 %v2165, 16
      %v2453 = vrot.slane %v2451, 4
      %v2454 = vor.u32 %v2453, %v2449
      %v2455 = vrot.slane %v2454, 4
      %v2457 = vshll.u32 %v2166, 16
      %v2459 = vrot.slane %v2457, 5
      %v2460 = vsel %vm594, %v2455, %v2459
      %v2462 = vshrl.u32 %v2167, 16
      %v2464 = vrot.slane %v2462, 4
      %v2465 = vshll.u32 %v2167, 16
      %v2467 = vrot.slane %v2465, 5
      %v2468 = vor.u32 %v2464, %v2467
      %v2469 = vrot.slane %v2468, 4
      %v2471 = vshll.u32 %v2168, 16
      %v2473 = vrot.slane %v2471, 5
      %v2474 = vsel %vm594, %v2469, %v2473
      %v2475 = vshrl.u32 %v2168, 16
      %v2477 = vrot.slane %v2475, 4
      %v2478 = vor.u32 %v2477, %v2473
      %v2479 = vrot.slane %v2478, 4
      %v2481 = vshll.u32 %v2169, 16
      %v2483 = vrot.slane %v2481, 5
      %v2484 = vsel %vm594, %v2479, %v2483
      %v2486 = vshrl.u32 %v2170, 16
      %v2488 = vrot.slane %v2486, 4
      %v2489 = vshll.u32 %v2170, 16
      %v2491 = vrot.slane %v2489, 5
      %v2492 = vor.u32 %v2488, %v2491
      %v2493 = vrot.slane %v2492, 4
      %v2495 = vshll.u32 %v2171, 16
      %v2497 = vrot.slane %v2495, 5
      %v2498 = vsel %vm594, %v2493, %v2497
      %v2499 = vshrl.u32 %v2171, 16
      %v2501 = vrot.slane %v2499, 4
      %v2502 = vor.u32 %v2501, %v2497
      %v2503 = vrot.slane %v2502, 4
      %v2505 = vshll.u32 %v2172, 16
      %v2507 = vrot.slane %v2505, 5
      %v2508 = vsel %vm594, %v2503, %v2507
      %v2510 = vshrl.u32 %v2173, 16
      %v2512 = vrot.slane %v2510, 4
      %v2513 = vshll.u32 %v2173, 16
      %v2515 = vrot.slane %v2513, 5
      %v2516 = vor.u32 %v2512, %v2515
      %v2517 = vrot.slane %v2516, 4
      %v2519 = vshll.u32 %v2174, 16
      %v2521 = vrot.slane %v2519, 5
      %v2522 = vsel %vm594, %v2517, %v2521
      %v2523 = vshrl.u32 %v2174, 16
      %v2525 = vrot.slane %v2523, 4
      %v2526 = vor.u32 %v2525, %v2521
      %v2527 = vrot.slane %v2526, 4
      %v2529 = vshll.u32 %v2175, 16
      %v2531 = vrot.slane %v2529, 5
      %v2532 = vsel %vm594, %v2527, %v2531
      %v2534 = vshrl.u32 %v2176, 16
      %v2536 = vrot.slane %v2534, 4
      %v2537 = vshll.u32 %v2176, 16
      %v2539 = vrot.slane %v2537, 5
      %v2540 = vor.u32 %v2536, %v2539
      %v2541 = vrot.slane %v2540, 4
      %v2543 = vshll.u32 %v2177, 16
      %v2545 = vrot.slane %v2543, 5
      %v2546 = vsel %vm594, %v2541, %v2545
      %v2547 = vshrl.u32 %v2177, 16
      %v2549 = vrot.slane %v2547, 4
      %v2550 = vor.u32 %v2549, %v2545
      %v2551 = vrot.slane %v2550, 4
      %v2553 = vshll.u32 %v2178, 16
      %v2555 = vrot.slane %v2553, 5
      %v2556 = vsel %vm594, %v2551, %v2555
      %v2558 = vshrl.u32 %v2179, 16
      %v2560 = vrot.slane %v2558, 4
      %v2561 = vshll.u32 %v2179, 16
      %v2563 = vrot.slane %v2561, 5
      %v2564 = vor.u32 %v2560, %v2563
      %v2565 = vrot.slane %v2564, 4
      %v2567 = vshll.u32 %v2180, 16
      %v2569 = vrot.slane %v2567, 5
      %v2570 = vsel %vm594, %v2565, %v2569
      %v2571 = vshrl.u32 %v2180, 16
      %v2573 = vrot.slane %v2571, 4
      %v2574 = vor.u32 %v2573, %v2569
      %v2575 = vrot.slane %v2574, 4
      %v2577 = vshll.u32 %v2181, 16
      %v2579 = vrot.slane %v2577, 5
      %v2580 = vsel %vm594, %v2575, %v2579
      %v2581 = vunpack.c.l.b16 %v2402
      %v2582 = vunpack.c.l.b16 %v2412
      %v2583 = vunpack.c.l.b16 %v2426
      %v2584 = vunpack.c.l.b16 %v2436
      %v2585 = vunpack.c.l.b16 %v2450
      %v2586 = vunpack.c.l.b16 %v2460
      %v2587 = vunpack.c.l.b16 %v2474
      %v2588 = vunpack.c.l.b16 %v2484
      %v2589 = vunpack.c.l.b16 %v2498
      %v2590 = vunpack.c.l.b16 %v2508
      %v2591 = vunpack.c.l.b16 %v2522
      %v2592 = vunpack.c.l.b16 %v2532
      %v2593 = vunpack.c.l.b16 %v2546
      %v2594 = vunpack.c.l.b16 %v2556
      %v2595 = vunpack.c.l.b16 %v2570
      %v2596 = vunpack.c.l.b16 %v2580
      %v2597 = vpack.c.b16 %v2582, %v2581
      %v2598 = vpack.c.b16 %v2584, %v2583
      %v2599 = vpack.c.b16 %v2586, %v2585
      %v2600 = vpack.c.b16 %v2588, %v2587
      %v2601 = vpack.c.b16 %v2590, %v2589
      %v2602 = vpack.c.b16 %v2592, %v2591
      %v2603 = vpack.c.b16 %v2594, %v2593
      %v2604 = vpack.c.b16 %v2596, %v2595
      %v2607 = vunpack.c.l.b16 %v2190
      %v2608 = vunpack.c.l.b16 %v2191
      %v2609 = vpack.c.b16 %v2608, %v2607
      %v2612 = vsel %vm817, %v2597, 0
      %v2615 = vsel %vm817, %v2598, 0
      %v2618 = vsel %vm817, %v2599, 0
      %v2621 = vsel %vm817, %v2600, 0
      %v2624 = vsel %vm817, %v2601, 0
      %v2627 = vsel %vm817, %v2602, 0
      %v2630 = vsel %vm817, %v2603, 0
      %v2633 = vsel %vm817, %v2604, 0
      %2635 = vmatprep.subr.bf16.mxu0 0
      %2636 = vmatpush1.bf16.msra.mxu0 %v2609
      %2637 = vmatprep.subr.bf16.mxu0 0
      %2638 = vmatpush1.bf16.msra.mxu0 0
      %2639 = vmatprep.subr.bf16.mxu0 0
      %2640 = vmatpush1.bf16.msra.mxu0 0
      %2641 = vmatprep.subr.bf16.mxu0 0
      %2642 = vmatpush1.bf16.msra.mxu0 0
      %2643 = vmatprep.subr.bf16.mxu0 0
      %2644 = vmatpush1.bf16.msra.mxu0 0
      %2645 = vmatprep.subr.bf16.mxu0 0
      %2646 = vmatpush1.bf16.msra.mxu0 0
      %2647 = vmatprep.subr.bf16.mxu0 0
      %2648 = vmatpush1.bf16.msra.mxu0 0
      %2649 = vmatprep.subr.bf16.mxu0 0
      %2650 = vmatpush1.bf16.msra.mxu0 0
      %2651 = vmatprep.subr.bf16.mxu0 0
      %2652 = vmatpush1.bf16.msra.mxu0 0
      %2653 = vmatprep.subr.bf16.mxu0 0
      %2654 = vmatpush1.bf16.msra.mxu0 0
      %2655 = vmatprep.subr.bf16.mxu0 0
      %2656 = vmatpush1.bf16.msra.mxu0 0
      %2657 = vmatprep.subr.bf16.mxu0 0
      %2658 = vmatpush1.bf16.msra.mxu0 0
      %2659 = vmatprep.subr.bf16.mxu0 0
      %2660 = vmatpush1.bf16.msra.mxu0 0
      %2661 = vmatprep.subr.bf16.mxu0 0
      %2662 = vmatpush1.bf16.msra.mxu0 0
      %2663 = vmatprep.subr.bf16.mxu0 0
      %2664 = vmatpush1.bf16.msra.mxu0 0
      %2665 = vmatprep.subr.bf16.mxu0 0
      %2666 = vmatpush1.bf16.msra.mxu0 0
      %2667 = vmatprep.mubr.bf16.mxu0 0
      %2668 = vmatmul.mubr.bf16.gmra.mrb[0].mxu0 %v2612
      %v2669 = vpop.f32.mrb[0].mxu0
      %v2670 = vadd.f32 0.0, %v2669
      %v2671 = vpop.f32.mrb[0].mxu0
      %v2672 = vpop.f32.mrb[0].mxu0
      %v2673 = vadd.f32 0.0, %v2672
      %v2674 = vpop.f32.mrb[0].mxu0
      %2675 = vmatprep.mubr.bf16.mxu0 0
      %2676 = vmatmul.mubr.bf16.gmra.mrb[0].mxu0 %v2615
      %v2677 = vpop.f32.mrb[0].mxu0
      %v2678 = vadd.f32 0.0, %v2677
      %v2679 = vpop.f32.mrb[0].mxu0
      %v2680 = vpop.f32.mrb[0].mxu0
      %v2681 = vadd.f32 0.0, %v2680
      %v2682 = vpop.f32.mrb[0].mxu0
      %2683 = vmatprep.mubr.bf16.mxu0 0
      %2684 = vmatmul.mubr.bf16.gmra.mrb[0].mxu0 %v2618
      %v2685 = vpop.f32.mrb[0].mxu0
      %v2686 = vadd.f32 0.0, %v2685
      %v2687 = vpop.f32.mrb[0].mxu0
      %v2688 = vpop.f32.mrb[0].mxu0
      %v2689 = vadd.f32 0.0, %v2688
      %v2690 = vpop.f32.mrb[0].mxu0
      %2691 = vmatprep.mubr.bf16.mxu0 0
      %2692 = vmatmul.mubr.bf16.gmra.mrb[0].mxu0 %v2621
      %v2693 = vpop.f32.mrb[0].mxu0
      %v2694 = vadd.f32 0.0, %v2693
      %v2695 = vpop.f32.mrb[0].mxu0
      %v2696 = vpop.f32.mrb[0].mxu0
      %v2697 = vadd.f32 0.0, %v2696
      %v2698 = vpop.f32.mrb[0].mxu0
      %2699 = vmatprep.mubr.bf16.mxu0 0
      %2700 = vmatmul.mubr.bf16.gmra.mrb[0].mxu0 %v2624
      %v2701 = vpop.f32.mrb[0].mxu0
      %v2702 = vadd.f32 0.0, %v2701
      %v2703 = vpop.f32.mrb[0].mxu0
      %v2704 = vpop.f32.mrb[0].mxu0
      %v2705 = vadd.f32 0.0, %v2704
      %v2706 = vpop.f32.mrb[0].mxu0
      %2707 = vmatprep.mubr.bf16.mxu0 0
      %2708 = vmatmul.mubr.bf16.gmra.mrb[0].mxu0 %v2627
      %v2709 = vpop.f32.mrb[0].mxu0
      %v2710 = vadd.f32 0.0, %v2709
      %v2711 = vpop.f32.mrb[0].mxu0
      %v2712 = vpop.f32.mrb[0].mxu0
      %v2713 = vadd.f32 0.0, %v2712
      %v2714 = vpop.f32.mrb[0].mxu0
      %2715 = vmatprep.mubr.bf16.mxu0 0
      %2716 = vmatmul.mubr.bf16.gmra.mrb[0].mxu0 %v2630
      %v2717 = vpop.f32.mrb[0].mxu0
      %v2718 = vadd.f32 0.0, %v2717
      %v2719 = vpop.f32.mrb[0].mxu0
      %v2720 = vpop.f32.mrb[0].mxu0
      %v2721 = vadd.f32 0.0, %v2720
      %v2722 = vpop.f32.mrb[0].mxu0
      %2723 = vmatprep.mubr.bf16.mxu0 0
      %2724 = vmatmul.mubr.bf16.gmra.mrb[0].mxu0 %v2633
      %v2725 = vpop.f32.mrb[0].mxu0
      %v2726 = vadd.f32 0.0, %v2725
      %v2727 = vpop.f32.mrb[0].mxu0
      %v2728 = vpop.f32.mrb[0].mxu0
      %v2729 = vadd.f32 0.0, %v2728
      %v2730 = vpop.f32.mrb[0].mxu0
      %2731 = vdwg.mxu0
      %v2732 = vadd.f32 %v2373, %v2670
      %v2733 = vadd.f32 %v2374, %v2673
      %v2734 = vadd.f32 %v2375, %v2678
      %v2735 = vadd.f32 %v2376, %v2681
      %v2736 = vadd.f32 %v2377, %v2686
      %v2737 = vadd.f32 %v2378, %v2689
      %v2738 = vadd.f32 %v2379, %v2694
      %v2739 = vadd.f32 %v2380, %v2697
      %v2740 = vadd.f32 %v2381, %v2702
      %v2741 = vadd.f32 %v2382, %v2705
      %v2742 = vadd.f32 %v2383, %v2710
      %v2743 = vadd.f32 %v2384, %v2713
      %v2744 = vadd.f32 %v2385, %v2718
      %v2745 = vadd.f32 %v2386, %v2721
      %v2746 = vadd.f32 %v2387, %v2726
      %v2747 = vadd.f32 %v2388, %v2729
      %v2756 = vrot.slane %v2158, 5
      %v2757 = vrot.slane %v2756, 4
      %v2758 = vrot.slane %v2159, 5
      %v2759 = vsel %vm1116, %v2757, %v2758
      %v2760 = vrot.slane %v2758, 4
      %v2761 = vrot.slane %v2160, 5
      %v2762 = vsel %vm1116, %v2760, %v2761
      %v2763 = vrot.slane %v2161, 5
      %v2764 = vrot.slane %v2763, 4
      %v2765 = vrot.slane %v2162, 5
      %v2766 = vsel %vm1116, %v2764, %v2765
      %v2767 = vrot.slane %v2765, 4
      %v2768 = vrot.slane %v2163, 5
      %v2769 = vsel %vm1116, %v2767, %v2768
      %v2770 = vrot.slane %v2164, 5
      %v2771 = vrot.slane %v2770, 4
      %v2772 = vrot.slane %v2165, 5
      %v2773 = vsel %vm1116, %v2771, %v2772
      %v2774 = vrot.slane %v2772, 4
      %v2775 = vrot.slane %v2166, 5
      %v2776 = vsel %vm1116, %v2774, %v2775
      %v2777 = vrot.slane %v2167, 5
      %v2778 = vrot.slane %v2777, 4
      %v2779 = vrot.slane %v2168, 5
      %v2780 = vsel %vm1116, %v2778, %v2779
      %v2781 = vrot.slane %v2779, 4
      %v2782 = vrot.slane %v2169, 5
      %v2783 = vsel %vm1116, %v2781, %v2782
      %v2784 = vrot.slane %v2170, 5
      %v2785 = vrot.slane %v2784, 4
      %v2786 = vrot.slane %v2171, 5
      %v2787 = vsel %vm1116, %v2785, %v2786
      %v2788 = vrot.slane %v2786, 4
      %v2789 = vrot.slane %v2172, 5
      %v2790 = vsel %vm1116, %v2788, %v2789
      %v2791 = vrot.slane %v2173, 5
      %v2792 = vrot.slane %v2791, 4
      %v2793 = vrot.slane %v2174, 5
      %v2794 = vsel %vm1116, %v2792, %v2793
      %v2795 = vrot.slane %v2793, 4
      %v2796 = vrot.slane %v2175, 5
      %v2797 = vsel %vm1116, %v2795, %v2796
      %v2798 = vrot.slane %v2176, 5
      %v2799 = vrot.slane %v2798, 4
      %v2800 = vrot.slane %v2177, 5
      %v2801 = vsel %vm1116, %v2799, %v2800
      %v2802 = vrot.slane %v2800, 4
      %v2803 = vrot.slane %v2178, 5
      %v2804 = vsel %vm1116, %v2802, %v2803
      %v2805 = vrot.slane %v2179, 5
      %v2806 = vrot.slane %v2805, 4
      %v2807 = vrot.slane %v2180, 5
      %v2808 = vsel %vm1116, %v2806, %v2807
      %v2809 = vrot.slane %v2807, 4
      %v2810 = vrot.slane %v2181, 5
      %v2811 = vsel %vm1116, %v2809, %v2810
      %v2812 = vunpack.c.l.b16 %v2759
      %v2813 = vunpack.c.l.b16 %v2762
      %v2814 = vunpack.c.l.b16 %v2766
      %v2815 = vunpack.c.l.b16 %v2769
      %v2816 = vunpack.c.l.b16 %v2773
      %v2817 = vunpack.c.l.b16 %v2776
      %v2818 = vunpack.c.l.b16 %v2780
      %v2819 = vunpack.c.l.b16 %v2783
      %v2820 = vunpack.c.l.b16 %v2787
      %v2821 = vunpack.c.l.b16 %v2790
      %v2822 = vunpack.c.l.b16 %v2794
      %v2823 = vunpack.c.l.b16 %v2797
      %v2824 = vunpack.c.l.b16 %v2801
      %v2825 = vunpack.c.l.b16 %v2804
      %v2826 = vunpack.c.l.b16 %v2808
      %v2827 = vunpack.c.l.b16 %v2811
      %v2828 = vpack.c.b16 %v2813, %v2812
      %v2829 = vpack.c.b16 %v2815, %v2814
      %v2830 = vpack.c.b16 %v2817, %v2816
      %v2831 = vpack.c.b16 %v2819, %v2818
      %v2832 = vpack.c.b16 %v2821, %v2820
      %v2833 = vpack.c.b16 %v2823, %v2822
      %v2834 = vpack.c.b16 %v2825, %v2824
      %v2835 = vpack.c.b16 %v2827, %v2826
      %v2838 = vunpack.c.l.b16 %v2192
      %v2839 = vunpack.c.l.b16 %v2193
      %v2840 = vpack.c.b16 %v2839, %v2838
      %v2843 = vsel %vm817, %v2828, 0
      %v2846 = vsel %vm817, %v2829, 0
      %v2849 = vsel %vm817, %v2830, 0
      %v2852 = vsel %vm817, %v2831, 0
      %v2855 = vsel %vm817, %v2832, 0
      %v2858 = vsel %vm817, %v2833, 0
      %v2861 = vsel %vm817, %v2834, 0
      %v2864 = vsel %vm817, %v2835, 0
      %2866 = vmatprep.subr.bf16.mxu0 0
      %2867 = vmatpush1.bf16.msra.mxu0 %v2840
      %2868 = vmatprep.subr.bf16.mxu0 0
      %2869 = vmatpush1.bf16.msra.mxu0 0
      %2870 = vmatprep.subr.bf16.mxu0 0
      %2871 = vmatpush1.bf16.msra.mxu0 0
      %2872 = vmatprep.subr.bf16.mxu0 0
      %2873 = vmatpush1.bf16.msra.mxu0 0
      %2874 = vmatprep.subr.bf16.mxu0 0
      %2875 = vmatpush1.bf16.msra.mxu0 0
      %2876 = vmatprep.subr.bf16.mxu0 0
      %2877 = vmatpush1.bf16.msra.mxu0 0
      %2878 = vmatprep.subr.bf16.mxu0 0
      %2879 = vmatpush1.bf16.msra.mxu0 0
      %2880 = vmatprep.subr.bf16.mxu0 0
      %2881 = vmatpush1.bf16.msra.mxu0 0
      %2882 = vmatprep.subr.bf16.mxu0 0
      %2883 = vmatpush1.bf16.msra.mxu0 0
      %2884 = vmatprep.subr.bf16.mxu0 0
      %2885 = vmatpush1.bf16.msra.mxu0 0
      %2886 = vmatprep.subr.bf16.mxu0 0
      %2887 = vmatpush1.bf16.msra.mxu0 0
      %2888 = vmatprep.subr.bf16.mxu0 0
      %2889 = vmatpush1.bf16.msra.mxu0 0
      %2890 = vmatprep.subr.bf16.mxu0 0
      %2891 = vmatpush1.bf16.msra.mxu0 0
      %2892 = vmatprep.subr.bf16.mxu0 0
      %2893 = vmatpush1.bf16.msra.mxu0 0
      %2894 = vmatprep.subr.bf16.mxu0 0
      %2895 = vmatpush1.bf16.msra.mxu0 0
      %2896 = vmatprep.subr.bf16.mxu0 0
      %2897 = vmatpush1.bf16.msra.mxu0 0
      %2898 = vmatprep.mubr.bf16.mxu0 0
      %2899 = vmatmul.mubr.bf16.gmra.mrb[0].mxu0 %v2843
      %v2900 = vpop.f32.mrb[0].mxu0
      %v2901 = vadd.f32 0.0, %v2900
      %v2902 = vpop.f32.mrb[0].mxu0
      %v2903 = vpop.f32.mrb[0].mxu0
      %v2904 = vadd.f32 0.0, %v2903
      %v2905 = vpop.f32.mrb[0].mxu0
      %2906 = vmatprep.mubr.bf16.mxu0 0
      %2907 = vmatmul.mubr.bf16.gmra.mrb[0].mxu0 %v2846
      %v2908 = vpop.f32.mrb[0].mxu0
      %v2909 = vadd.f32 0.0, %v2908
      %v2910 = vpop.f32.mrb[0].mxu0
      %v2911 = vpop.f32.mrb[0].mxu0
      %v2912 = vadd.f32 0.0, %v2911
      %v2913 = vpop.f32.mrb[0].mxu0
      %2914 = vmatprep.mubr.bf16.mxu0 0
      %2915 = vmatmul.mubr.bf16.gmra.mrb[0].mxu0 %v2849
      %v2916 = vpop.f32.mrb[0].mxu0
      %v2917 = vadd.f32 0.0, %v2916
      %v2918 = vpop.f32.mrb[0].mxu0
      %v2919 = vpop.f32.mrb[0].mxu0
      %v2920 = vadd.f32 0.0, %v2919
      %v2921 = vpop.f32.mrb[0].mxu0
      %2922 = vmatprep.mubr.bf16.mxu0 0
      %2923 = vmatmul.mubr.bf16.gmra.mrb[0].mxu0 %v2852
      %v2924 = vpop.f32.mrb[0].mxu0
      %v2925 = vadd.f32 0.0, %v2924
      %v2926 = vpop.f32.mrb[0].mxu0
      %v2927 = vpop.f32.mrb[0].mxu0
      %v2928 = vadd.f32 0.0, %v2927
      %v2929 = vpop.f32.mrb[0].mxu0
      %2930 = vmatprep.mubr.bf16.mxu0 0
      %2931 = vmatmul.mubr.bf16.gmra.mrb[0].mxu0 %v2855
      %v2932 = vpop.f32.mrb[0].mxu0
      %v2933 = vadd.f32 0.0, %v2932
      %v2934 = vpop.f32.mrb[0].mxu0
      %v2935 = vpop.f32.mrb[0].mxu0
      %v2936 = vadd.f32 0.0, %v2935
      %v2937 = vpop.f32.mrb[0].mxu0
      %2938 = vmatprep.mubr.bf16.mxu0 0
      %2939 = vmatmul.mubr.bf16.gmra.mrb[0].mxu0 %v2858
      %v2940 = vpop.f32.mrb[0].mxu0
      %v2941 = vadd.f32 0.0, %v2940
      %v2942 = vpop.f32.mrb[0].mxu0
      %v2943 = vpop.f32.mrb[0].mxu0
      %v2944 = vadd.f32 0.0, %v2943
      %v2945 = vpop.f32.mrb[0].mxu0
      %2946 = vmatprep.mubr.bf16.mxu0 0
      %2947 = vmatmul.mubr.bf16.gmra.mrb[0].mxu0 %v2861
      %v2948 = vpop.f32.mrb[0].mxu0
      %v2949 = vadd.f32 0.0, %v2948
      %v2950 = vpop.f32.mrb[0].mxu0
      %v2951 = vpop.f32.mrb[0].mxu0
      %v2952 = vadd.f32 0.0, %v2951
      %v2953 = vpop.f32.mrb[0].mxu0
      %2954 = vmatprep.mubr.bf16.mxu0 0
      %2955 = vmatmul.mubr.bf16.gmra.mrb[0].mxu0 %v2864
      %v2956 = vpop.f32.mrb[0].mxu0
      %v2957 = vadd.f32 0.0, %v2956
      %v2958 = vpop.f32.mrb[0].mxu0
      %v2959 = vpop.f32.mrb[0].mxu0
      %v2960 = vadd.f32 0.0, %v2959
      %v2961 = vpop.f32.mrb[0].mxu0
      %2962 = vdwg.mxu0
      %v2963 = vadd.f32 %v2732, %v2901
      %v2964 = vadd.f32 %v2733, %v2904
      %v2965 = vadd.f32 %v2734, %v2909
      %v2966 = vadd.f32 %v2735, %v2912
      %v2967 = vadd.f32 %v2736, %v2917
      %v2968 = vadd.f32 %v2737, %v2920
      %v2969 = vadd.f32 %v2738, %v2925
      %v2970 = vadd.f32 %v2739, %v2928
      %v2971 = vadd.f32 %v2740, %v2933
      %v2972 = vadd.f32 %v2741, %v2936
      %v2973 = vadd.f32 %v2742, %v2941
      %v2974 = vadd.f32 %v2743, %v2944
      %v2975 = vadd.f32 %v2744, %v2949
      %v2976 = vadd.f32 %v2745, %v2952
      %v2977 = vadd.f32 %v2746, %v2957
      %v2978 = vadd.f32 %v2747, %v2960
      %v2981 = vunpack.c.l.b16 %v2182
      %v2982 = vunpack.c.l.b16 %v2183
      %v2983 = vpack.c.b16 %v2982, %v2981
      %v2986 = vunpack.c.l.b16 %v2194
      %v2987 = vunpack.c.l.b16 %v2195
      %v2988 = vpack.c.b16 %v2987, %v2986
      %v2991 = vsel %vm817, %v2983, 0
      %2993 = vmatprep.subr.bf16.mxu0 0
      %2994 = vmatpush1.bf16.msra.mxu0 %v2988
      %2995 = vmatprep.subr.bf16.mxu0 0
      %2996 = vmatpush1.bf16.msra.mxu0 0
      %2997 = vmatprep.subr.bf16.mxu0 0
      %2998 = vmatpush1.bf16.msra.mxu0 0
      %2999 = vmatprep.subr.bf16.mxu0 0
      %3000 = vmatpush1.bf16.msra.mxu0 0
      %3001 = vmatprep.subr.bf16.mxu0 0
      %3002 = vmatpush1.bf16.msra.mxu0 0
      %3003 = vmatprep.subr.bf16.mxu0 0
      %3004 = vmatpush1.bf16.msra.mxu0 0
      %3005 = vmatprep.subr.bf16.mxu0 0
      %3006 = vmatpush1.bf16.msra.mxu0 0
      %3007 = vmatprep.subr.bf16.mxu0 0
      %3008 = vmatpush1.bf16.msra.mxu0 0
      %3009 = vmatprep.subr.bf16.mxu0 0
      %3010 = vmatpush1.bf16.msra.mxu0 0
      %3011 = vmatprep.subr.bf16.mxu0 0
      %3012 = vmatpush1.bf16.msra.mxu0 0
      %3013 = vmatprep.subr.bf16.mxu0 0
      %3014 = vmatpush1.bf16.msra.mxu0 0
      %3015 = vmatprep.subr.bf16.mxu0 0
      %3016 = vmatpush1.bf16.msra.mxu0 0
      %3017 = vmatprep.subr.bf16.mxu0 0
      %3018 = vmatpush1.bf16.msra.mxu0 0
      %3019 = vmatprep.subr.bf16.mxu0 0
      %3020 = vmatpush1.bf16.msra.mxu0 0
      %3021 = vmatprep.subr.bf16.mxu0 0
      %3022 = vmatpush1.bf16.msra.mxu0 0
      %3023 = vmatprep.subr.bf16.mxu0 0
      %3024 = vmatpush1.bf16.msra.mxu0 0
      %3025 = vmatprep.mubr.bf16.mxu0 0
      %3026 = vmatmul.mubr.bf16.gmra.mrb[0].mxu0 %v2256
      %v3027 = vpop.f32.mrb[0].mxu0
      %v3028 = vadd.f32 0.0, %v3027
      %v3029 = vpop.f32.mrb[0].mxu0
      %v3030 = vpop.f32.mrb[0].mxu0
      %v3031 = vadd.f32 0.0, %v3030
      %v3032 = vpop.f32.mrb[0].mxu0
      %3033 = vmatprep.mubr.bf16.mxu0 0
      %3034 = vmatmul.mubr.bf16.gmra.mrb[0].mxu0 %v2259
      %v3035 = vpop.f32.mrb[0].mxu0
      %v3036 = vadd.f32 0.0, %v3035
      %v3037 = vpop.f32.mrb[0].mxu0
      %v3038 = vpop.f32.mrb[0].mxu0
      %v3039 = vadd.f32 0.0, %v3038
      %v3040 = vpop.f32.mrb[0].mxu0
      %3041 = vmatprep.mubr.bf16.mxu0 0
      %3042 = vmatmul.mubr.bf16.gmra.mrb[0].mxu0 %v2262
      %v3043 = vpop.f32.mrb[0].mxu0
      %v3044 = vadd.f32 0.0, %v3043
      %v3045 = vpop.f32.mrb[0].mxu0
      %v3046 = vpop.f32.mrb[0].mxu0
      %v3047 = vadd.f32 0.0, %v3046
      %v3048 = vpop.f32.mrb[0].mxu0
      %3049 = vmatprep.mubr.bf16.mxu0 0
      %3050 = vmatmul.mubr.bf16.gmra.mrb[0].mxu0 %v2265
      %v3051 = vpop.f32.mrb[0].mxu0
      %v3052 = vadd.f32 0.0, %v3051
      %v3053 = vpop.f32.mrb[0].mxu0
      %v3054 = vpop.f32.mrb[0].mxu0
      %v3055 = vadd.f32 0.0, %v3054
      %v3056 = vpop.f32.mrb[0].mxu0
      %3057 = vmatprep.mubr.bf16.mxu0 0
      %3058 = vmatmul.mubr.bf16.gmra.mrb[0].mxu0 %v2268
      %v3059 = vpop.f32.mrb[0].mxu0
      %v3060 = vadd.f32 0.0, %v3059
      %v3061 = vpop.f32.mrb[0].mxu0
      %v3062 = vpop.f32.mrb[0].mxu0
      %v3063 = vadd.f32 0.0, %v3062
      %v3064 = vpop.f32.mrb[0].mxu0
      %3065 = vmatprep.mubr.bf16.mxu0 0
      %3066 = vmatmul.mubr.bf16.gmra.mrb[0].mxu0 %v2271
      %v3067 = vpop.f32.mrb[0].mxu0
      %v3068 = vadd.f32 0.0, %v3067
      %v3069 = vpop.f32.mrb[0].mxu0
      %v3070 = vpop.f32.mrb[0].mxu0
      %v3071 = vadd.f32 0.0, %v3070
      %v3072 = vpop.f32.mrb[0].mxu0
      %3073 = vmatprep.mubr.bf16.mxu0 0
      %3074 = vmatmul.mubr.bf16.gmra.mrb[0].mxu0 %v2274
      %v3075 = vpop.f32.mrb[0].mxu0
      %v3076 = vadd.f32 0.0, %v3075
      %v3077 = vpop.f32.mrb[0].mxu0
      %v3078 = vpop.f32.mrb[0].mxu0
      %v3079 = vadd.f32 0.0, %v3078
      %v3080 = vpop.f32.mrb[0].mxu0
      %3081 = vmatprep.mubr.bf16.mxu0 0
      %3082 = vmatmul.mubr.bf16.gmra.mrb[0].mxu0 %v2991
      %v3083 = vpop.f32.mrb[0].mxu0
      %v3084 = vadd.f32 0.0, %v3083
      %v3085 = vpop.f32.mrb[0].mxu0
      %v3086 = vpop.f32.mrb[0].mxu0
      %v3087 = vadd.f32 0.0, %v3086
      %v3088 = vpop.f32.mrb[0].mxu0
      %3089 = vdwg.mxu0
      %v3090 = vadd.f32 %v2963, %v3028
      %v3091 = vadd.f32 %v2964, %v3031
      %v3092 = vadd.f32 %v2965, %v3036
      %v3093 = vadd.f32 %v2966, %v3039
      %v3094 = vadd.f32 %v2967, %v3044
      %v3095 = vadd.f32 %v2968, %v3047
      %v3096 = vadd.f32 %v2969, %v3052
      %v3097 = vadd.f32 %v2970, %v3055
      %v3098 = vadd.f32 %v2971, %v3060
      %v3099 = vadd.f32 %v2972, %v3063
      %v3100 = vadd.f32 %v2973, %v3068
      %v3101 = vadd.f32 %v2974, %v3071
      %v3102 = vadd.f32 %v2975, %v3076
      %v3103 = vadd.f32 %v2976, %v3079
      %v3104 = vadd.f32 %v2977, %v3084
      %v3105 = vadd.f32 %v2978, %v3087
      %v3107 = vshrl.u32 %v2182, 16
      %v3109 = vrot.slane %v3107, 4
      %v3110 = vshll.u32 %v2182, 16
      %v3112 = vrot.slane %v3110, 5
      %v3113 = vor.u32 %v3109, %v3112
      %v3114 = vrot.slane %v3113, 4
      %v3116 = vshll.u32 %v2183, 16
      %v3118 = vrot.slane %v3116, 5
      %v3119 = vsel %vm594, %v3114, %v3118
      %v3120 = vshrl.u32 %v2183, 16
      %v3122 = vrot.slane %v3120, 4
      %v3123 = vor.u32 %v3122, %v3118
      %v3124 = vrot.slane %v3123, 4
      %v3126 = vshll.u32 %v2184, 16
      %v3128 = vrot.slane %v3126, 5
      %v3129 = vsel %vm594, %v3124, %v3128
      %v3130 = vunpack.c.l.b16 %v3119
      %v3131 = vunpack.c.l.b16 %v3129
      %v3132 = vpack.c.b16 %v3131, %v3130
      %v3135 = vunpack.c.l.b16 %v2196
      %v3136 = vunpack.c.l.b16 %v2197
      %v3137 = vpack.c.b16 %v3136, %v3135
      %v3140 = vsel %vm817, %v3132, 0
      %3142 = vmatprep.subr.bf16.mxu0 0
      %3143 = vmatpush1.bf16.msra.mxu0 %v3137
      %3144 = vmatprep.subr.bf16.mxu0 0
      %3145 = vmatpush1.bf16.msra.mxu0 0
      %3146 = vmatprep.subr.bf16.mxu0 0
      %3147 = vmatpush1.bf16.msra.mxu0 0
      %3148 = vmatprep.subr.bf16.mxu0 0
      %3149 = vmatpush1.bf16.msra.mxu0 0
      %3150 = vmatprep.subr.bf16.mxu0 0
      %3151 = vmatpush1.bf16.msra.mxu0 0
      %3152 = vmatprep.subr.bf16.mxu0 0
      %3153 = vmatpush1.bf16.msra.mxu0 0
      %3154 = vmatprep.subr.bf16.mxu0 0
      %3155 = vmatpush1.bf16.msra.mxu0 0
      %3156 = vmatprep.subr.bf16.mxu0 0
      %3157 = vmatpush1.bf16.msra.mxu0 0
      %3158 = vmatprep.subr.bf16.mxu0 0
      %3159 = vmatpush1.bf16.msra.mxu0 0
      %3160 = vmatprep.subr.bf16.mxu0 0
      %3161 = vmatpush1.bf16.msra.mxu0 0
      %3162 = vmatprep.subr.bf16.mxu0 0
      %3163 = vmatpush1.bf16.msra.mxu0 0
      %3164 = vmatprep.subr.bf16.mxu0 0
      %3165 = vmatpush1.bf16.msra.mxu0 0
      %3166 = vmatprep.subr.bf16.mxu0 0
      %3167 = vmatpush1.bf16.msra.mxu0 0
      %3168 = vmatprep.subr.bf16.mxu0 0
      %3169 = vmatpush1.bf16.msra.mxu0 0
      %3170 = vmatprep.subr.bf16.mxu0 0
      %3171 = vmatpush1.bf16.msra.mxu0 0
      %3172 = vmatprep.subr.bf16.mxu0 0
      %3173 = vmatpush1.bf16.msra.mxu0 0
      %3174 = vmatprep.mubr.bf16.mxu0 0
      %3175 = vmatmul.mubr.bf16.gmra.mrb[0].mxu0 %v2615
      %v3176 = vpop.f32.mrb[0].mxu0
      %v3177 = vadd.f32 0.0, %v3176
      %v3178 = vpop.f32.mrb[0].mxu0
      %v3179 = vpop.f32.mrb[0].mxu0
      %v3180 = vadd.f32 0.0, %v3179
      %v3181 = vpop.f32.mrb[0].mxu0
      %3182 = vmatprep.mubr.bf16.mxu0 0
      %3183 = vmatmul.mubr.bf16.gmra.mrb[0].mxu0 %v2618
      %v3184 = vpop.f32.mrb[0].mxu0
      %v3185 = vadd.f32 0.0, %v3184
      %v3186 = vpop.f32.mrb[0].mxu0
      %v3187 = vpop.f32.mrb[0].mxu0
      %v3188 = vadd.f32 0.0, %v3187
      %v3189 = vpop.f32.mrb[0].mxu0
      %3190 = vmatprep.mubr.bf16.mxu0 0
      %3191 = vmatmul.mubr.bf16.gmra.mrb[0].mxu0 %v2621
      %v3192 = vpop.f32.mrb[0].mxu0
      %v3193 = vadd.f32 0.0, %v3192
      %v3194 = vpop.f32.mrb[0].mxu0
      %v3195 = vpop.f32.mrb[0].mxu0
      %v3196 = vadd.f32 0.0, %v3195
      %v3197 = vpop.f32.mrb[0].mxu0
      %3198 = vmatprep.mubr.bf16.mxu0 0
      %3199 = vmatmul.mubr.bf16.gmra.mrb[0].mxu0 %v2624
      %v3200 = vpop.f32.mrb[0].mxu0
      %v3201 = vadd.f32 0.0, %v3200
      %v3202 = vpop.f32.mrb[0].mxu0
      %v3203 = vpop.f32.mrb[0].mxu0
      %v3204 = vadd.f32 0.0, %v3203
      %v3205 = vpop.f32.mrb[0].mxu0
      %3206 = vmatprep.mubr.bf16.mxu0 0
      %3207 = vmatmul.mubr.bf16.gmra.mrb[0].mxu0 %v2627
      %v3208 = vpop.f32.mrb[0].mxu0
      %v3209 = vadd.f32 0.0, %v3208
      %v3210 = vpop.f32.mrb[0].mxu0
      %v3211 = vpop.f32.mrb[0].mxu0
      %v3212 = vadd.f32 0.0, %v3211
      %v3213 = vpop.f32.mrb[0].mxu0
      %3214 = vmatprep.mubr.bf16.mxu0 0
      %3215 = vmatmul.mubr.bf16.gmra.mrb[0].mxu0 %v2630
      %v3216 = vpop.f32.mrb[0].mxu0
      %v3217 = vadd.f32 0.0, %v3216
      %v3218 = vpop.f32.mrb[0].mxu0
      %v3219 = vpop.f32.mrb[0].mxu0
      %v3220 = vadd.f32 0.0, %v3219
      %v3221 = vpop.f32.mrb[0].mxu0
      %3222 = vmatprep.mubr.bf16.mxu0 0
      %3223 = vmatmul.mubr.bf16.gmra.mrb[0].mxu0 %v2633
      %v3224 = vpop.f32.mrb[0].mxu0
      %v3225 = vadd.f32 0.0, %v3224
      %v3226 = vpop.f32.mrb[0].mxu0
      %v3227 = vpop.f32.mrb[0].mxu0
      %v3228 = vadd.f32 0.0, %v3227
      %v3229 = vpop.f32.mrb[0].mxu0
      %3230 = vmatprep.mubr.bf16.mxu0 0
      %3231 = vmatmul.mubr.bf16.gmra.mrb[0].mxu0 %v3140
      %v3232 = vpop.f32.mrb[0].mxu0
      %v3233 = vadd.f32 0.0, %v3232
      %v3234 = vpop.f32.mrb[0].mxu0
      %v3235 = vpop.f32.mrb[0].mxu0
      %v3236 = vadd.f32 0.0, %v3235
      %v3237 = vpop.f32.mrb[0].mxu0
      %3238 = vdwg.mxu0
      %v3239 = vadd.f32 %v3090, %v3177
      %v3240 = vadd.f32 %v3091, %v3180
      %v3241 = vadd.f32 %v3092, %v3185
      %v3242 = vadd.f32 %v3093, %v3188
      %v3243 = vadd.f32 %v3094, %v3193
      %v3244 = vadd.f32 %v3095, %v3196
      %v3245 = vadd.f32 %v3096, %v3201
      %v3246 = vadd.f32 %v3097, %v3204
      %v3247 = vadd.f32 %v3098, %v3209
      %v3248 = vadd.f32 %v3099, %v3212
      %v3249 = vadd.f32 %v3100, %v3217
      %v3250 = vadd.f32 %v3101, %v3220
      %v3251 = vadd.f32 %v3102, %v3225
      %v3252 = vadd.f32 %v3103, %v3228
      %v3253 = vadd.f32 %v3104, %v3233
      %v3254 = vadd.f32 %v3105, %v3236
      %v3256 = vrot.slane %v2182, 5
      %v3257 = vrot.slane %v3256, 4
      %v3258 = vrot.slane %v2183, 5
      %v3259 = vsel %vm1116, %v3257, %v3258
      %v3260 = vrot.slane %v3258, 4
      %v3261 = vrot.slane %v2184, 5
      %v3262 = vsel %vm1116, %v3260, %v3261
      %v3263 = vunpack.c.l.b16 %v3259
      %v3264 = vunpack.c.l.b16 %v3262
      %v3265 = vpack.c.b16 %v3264, %v3263
      %v3268 = vunpack.c.l.b16 %v2198
      %v3269 = vunpack.c.l.b16 %v2199
      %v3270 = vpack.c.b16 %v3269, %v3268
      %v3273 = vsel %vm817, %v3265, 0
      %3275 = vmatprep.subr.bf16.mxu0 0
      %3276 = vmatpush1.bf16.msra.mxu0 %v3270
      %3277 = vmatprep.subr.bf16.mxu0 0
      %3278 = vmatpush1.bf16.msra.mxu0 0
      %3279 = vmatprep.subr.bf16.mxu0 0
      %3280 = vmatpush1.bf16.msra.mxu0 0
      %3281 = vmatprep.subr.bf16.mxu0 0
      %3282 = vmatpush1.bf16.msra.mxu0 0
      %3283 = vmatprep.subr.bf16.mxu0 0
      %3284 = vmatpush1.bf16.msra.mxu0 0
      %3285 = vmatprep.subr.bf16.mxu0 0
      %3286 = vmatpush1.bf16.msra.mxu0 0
      %3287 = vmatprep.subr.bf16.mxu0 0
      %3288 = vmatpush1.bf16.msra.mxu0 0
      %3289 = vmatprep.subr.bf16.mxu0 0
      %3290 = vmatpush1.bf16.msra.mxu0 0
      %3291 = vmatprep.subr.bf16.mxu0 0
      %3292 = vmatpush1.bf16.msra.mxu0 0
      %3293 = vmatprep.subr.bf16.mxu0 0
      %3294 = vmatpush1.bf16.msra.mxu0 0
      %3295 = vmatprep.subr.bf16.mxu0 0
      %3296 = vmatpush1.bf16.msra.mxu0 0
      %3297 = vmatprep.subr.bf16.mxu0 0
      %3298 = vmatpush1.bf16.msra.mxu0 0
      %3299 = vmatprep.subr.bf16.mxu0 0
      %3300 = vmatpush1.bf16.msra.mxu0 0
      %3301 = vmatprep.subr.bf16.mxu0 0
      %3302 = vmatpush1.bf16.msra.mxu0 0
      %3303 = vmatprep.subr.bf16.mxu0 0
      %3304 = vmatpush1.bf16.msra.mxu0 0
      %3305 = vmatprep.subr.bf16.mxu0 0
      %3306 = vmatpush1.bf16.msra.mxu0 0
      %3307 = vmatprep.mubr.bf16.mxu0 0
      %3308 = vmatmul.mubr.bf16.gmra.mrb[0].mxu0 %v2846
      %v3309 = vpop.f32.mrb[0].mxu0
      %v3310 = vadd.f32 0.0, %v3309
      %v3311 = vpop.f32.mrb[0].mxu0
      %v3312 = vpop.f32.mrb[0].mxu0
      %v3313 = vadd.f32 0.0, %v3312
      %v3314 = vpop.f32.mrb[0].mxu0
      %3315 = vmatprep.mubr.bf16.mxu0 0
      %3316 = vmatmul.mubr.bf16.gmra.mrb[0].mxu0 %v2849
      %v3317 = vpop.f32.mrb[0].mxu0
      %v3318 = vadd.f32 0.0, %v3317
      %v3319 = vpop.f32.mrb[0].mxu0
      %v3320 = vpop.f32.mrb[0].mxu0
      %v3321 = vadd.f32 0.0, %v3320
      %v3322 = vpop.f32.mrb[0].mxu0
      %3323 = vmatprep.mubr.bf16.mxu0 0
      %3324 = vmatmul.mubr.bf16.gmra.mrb[0].mxu0 %v2852
      %v3325 = vpop.f32.mrb[0].mxu0
      %v3326 = vadd.f32 0.0, %v3325
      %v3327 = vpop.f32.mrb[0].mxu0
      %v3328 = vpop.f32.mrb[0].mxu0
      %v3329 = vadd.f32 0.0, %v3328
      %v3330 = vpop.f32.mrb[0].mxu0
      %3331 = vmatprep.mubr.bf16.mxu0 0
      %3332 = vmatmul.mubr.bf16.gmra.mrb[0].mxu0 %v2855
      %v3333 = vpop.f32.mrb[0].mxu0
      %v3334 = vadd.f32 0.0, %v3333
      %v3335 = vpop.f32.mrb[0].mxu0
      %v3336 = vpop.f32.mrb[0].mxu0
      %v3337 = vadd.f32 0.0, %v3336
      %v3338 = vpop.f32.mrb[0].mxu0
      %3339 = vmatprep.mubr.bf16.mxu0 0
      %3340 = vmatmul.mubr.bf16.gmra.mrb[0].mxu0 %v2858
      %v3341 = vpop.f32.mrb[0].mxu0
      %v3342 = vadd.f32 0.0, %v3341
      %v3343 = vpop.f32.mrb[0].mxu0
      %v3344 = vpop.f32.mrb[0].mxu0
      %v3345 = vadd.f32 0.0, %v3344
      %v3346 = vpop.f32.mrb[0].mxu0
      %3347 = vmatprep.mubr.bf16.mxu0 0
      %3348 = vmatmul.mubr.bf16.gmra.mrb[0].mxu0 %v2861
      %v3349 = vpop.f32.mrb[0].mxu0
      %v3350 = vadd.f32 0.0, %v3349
      %v3351 = vpop.f32.mrb[0].mxu0
      %v3352 = vpop.f32.mrb[0].mxu0
      %v3353 = vadd.f32 0.0, %v3352
      %v3354 = vpop.f32.mrb[0].mxu0
      %3355 = vmatprep.mubr.bf16.mxu0 0
      %3356 = vmatmul.mubr.bf16.gmra.mrb[0].mxu0 %v2864
      %v3357 = vpop.f32.mrb[0].mxu0
      %v3358 = vadd.f32 0.0, %v3357
      %v3359 = vpop.f32.mrb[0].mxu0
      %v3360 = vpop.f32.mrb[0].mxu0
      %v3361 = vadd.f32 0.0, %v3360
      %v3362 = vpop.f32.mrb[0].mxu0
      %3363 = vmatprep.mubr.bf16.mxu0 0
      %3364 = vmatmul.mubr.bf16.gmra.mrb[0].mxu0 %v3273
      %v3365 = vpop.f32.mrb[0].mxu0
      %v3366 = vadd.f32 0.0, %v3365
      %v3367 = vpop.f32.mrb[0].mxu0
      %v3368 = vpop.f32.mrb[0].mxu0
      %v3369 = vadd.f32 0.0, %v3368
      %v3370 = vpop.f32.mrb[0].mxu0
      %3371 = vdwg.mxu0
      %v3372 = vadd.f32 %v3239, %v3310
      %v3373 = vadd.f32 %v3240, %v3313
      %v3374 = vadd.f32 %v3241, %v3318
      %v3375 = vadd.f32 %v3242, %v3321
      %v3376 = vadd.f32 %v3243, %v3326
      %v3377 = vadd.f32 %v3244, %v3329
      %v3378 = vadd.f32 %v3245, %v3334
      %v3379 = vadd.f32 %v3246, %v3337
      %v3380 = vadd.f32 %v3247, %v3342
      %v3381 = vadd.f32 %v3248, %v3345
      %v3382 = vadd.f32 %v3249, %v3350
      %v3383 = vadd.f32 %v3250, %v3353
      %v3384 = vadd.f32 %v3251, %v3358
      %v3385 = vadd.f32 %v3252, %v3361
      %v3386 = vadd.f32 %v3253, %v3366
      %v3387 = vadd.f32 %v3254, %v3369
      %v3390 = vunpack.c.l.b16 %v2185
      %v3391 = vunpack.c.l.b16 %v2186
      %v3392 = vpack.c.b16 %v3391, %v3390
      %v3395 = vunpack.c.l.b16 %v2200
      %v3396 = vunpack.c.l.b16 %v2201
      %v3397 = vpack.c.b16 %v3396, %v3395
      %v3400 = vsel %vm817, %v3392, 0
      %3402 = vmatprep.subr.bf16.mxu0 0
      %3403 = vmatpush1.bf16.msra.mxu0 %v3397
      %3404 = vmatprep.subr.bf16.mxu0 0
      %3405 = vmatpush1.bf16.msra.mxu0 0
      %3406 = vmatprep.subr.bf16.mxu0 0
      %3407 = vmatpush1.bf16.msra.mxu0 0
      %3408 = vmatprep.subr.bf16.mxu0 0
      %3409 = vmatpush1.bf16.msra.mxu0 0
      %3410 = vmatprep.subr.bf16.mxu0 0
      %3411 = vmatpush1.bf16.msra.mxu0 0
      %3412 = vmatprep.subr.bf16.mxu0 0
      %3413 = vmatpush1.bf16.msra.mxu0 0
      %3414 = vmatprep.subr.bf16.mxu0 0
      %3415 = vmatpush1.bf16.msra.mxu0 0
      %3416 = vmatprep.subr.bf16.mxu0 0
      %3417 = vmatpush1.bf16.msra.mxu0 0
      %3418 = vmatprep.subr.bf16.mxu0 0
      %3419 = vmatpush1.bf16.msra.mxu0 0
      %3420 = vmatprep.subr.bf16.mxu0 0
      %3421 = vmatpush1.bf16.msra.mxu0 0
      %3422 = vmatprep.subr.bf16.mxu0 0
      %3423 = vmatpush1.bf16.msra.mxu0 0
      %3424 = vmatprep.subr.bf16.mxu0 0
      %3425 = vmatpush1.bf16.msra.mxu0 0
      %3426 = vmatprep.subr.bf16.mxu0 0
      %3427 = vmatpush1.bf16.msra.mxu0 0
      %3428 = vmatprep.subr.bf16.mxu0 0
      %3429 = vmatpush1.bf16.msra.mxu0 0
      %3430 = vmatprep.subr.bf16.mxu0 0
      %3431 = vmatpush1.bf16.msra.mxu0 0
      %3432 = vmatprep.subr.bf16.mxu0 0
      %3433 = vmatpush1.bf16.msra.mxu0 0
      %3434 = vmatprep.mubr.bf16.mxu0 0
      %3435 = vmatmul.mubr.bf16.gmra.mrb[0].mxu0 %v2259
      %v3436 = vpop.f32.mrb[0].mxu0
      %v3437 = vadd.f32 0.0, %v3436
      %v3438 = vpop.f32.mrb[0].mxu0
      %v3439 = vpop.f32.mrb[0].mxu0
      %v3440 = vadd.f32 0.0, %v3439
      %v3441 = vpop.f32.mrb[0].mxu0
      %3442 = vmatprep.mubr.bf16.mxu0 0
      %3443 = vmatmul.mubr.bf16.gmra.mrb[0].mxu0 %v2262
      %v3444 = vpop.f32.mrb[0].mxu0
      %v3445 = vadd.f32 0.0, %v3444
      %v3446 = vpop.f32.mrb[0].mxu0
      %v3447 = vpop.f32.mrb[0].mxu0
      %v3448 = vadd.f32 0.0, %v3447
      %v3449 = vpop.f32.mrb[0].mxu0
      %3450 = vmatprep.mubr.bf16.mxu0 0
      %3451 = vmatmul.mubr.bf16.gmra.mrb[0].mxu0 %v2265
      %v3452 = vpop.f32.mrb[0].mxu0
      %v3453 = vadd.f32 0.0, %v3452
      %v3454 = vpop.f32.mrb[0].mxu0
      %v3455 = vpop.f32.mrb[0].mxu0
      %v3456 = vadd.f32 0.0, %v3455
      %v3457 = vpop.f32.mrb[0].mxu0
      %3458 = vmatprep.mubr.bf16.mxu0 0
      %3459 = vmatmul.mubr.bf16.gmra.mrb[0].mxu0 %v2268
      %v3460 = vpop.f32.mrb[0].mxu0
      %v3461 = vadd.f32 0.0, %v3460
      %v3462 = vpop.f32.mrb[0].mxu0
      %v3463 = vpop.f32.mrb[0].mxu0
      %v3464 = vadd.f32 0.0, %v3463
      %v3465 = vpop.f32.mrb[0].mxu0
      %3466 = vmatprep.mubr.bf16.mxu0 0
      %3467 = vmatmul.mubr.bf16.gmra.mrb[0].mxu0 %v2271
      %v3468 = vpop.f32.mrb[0].mxu0
      %v3469 = vadd.f32 0.0, %v3468
      %v3470 = vpop.f32.mrb[0].mxu0
      %v3471 = vpop.f32.mrb[0].mxu0
      %v3472 = vadd.f32 0.0, %v3471
      %v3473 = vpop.f32.mrb[0].mxu0
      %3474 = vmatprep.mubr.bf16.mxu0 0
      %3475 = vmatmul.mubr.bf16.gmra.mrb[0].mxu0 %v2274
      %v3476 = vpop.f32.mrb[0].mxu0
      %v3477 = vadd.f32 0.0, %v3476
      %v3478 = vpop.f32.mrb[0].mxu0
      %v3479 = vpop.f32.mrb[0].mxu0
      %v3480 = vadd.f32 0.0, %v3479
      %v3481 = vpop.f32.mrb[0].mxu0
      %3482 = vmatprep.mubr.bf16.mxu0 0
      %3483 = vmatmul.mubr.bf16.gmra.mrb[0].mxu0 %v2991
      %v3484 = vpop.f32.mrb[0].mxu0
      %v3485 = vadd.f32 0.0, %v3484
      %v3486 = vpop.f32.mrb[0].mxu0
      %v3487 = vpop.f32.mrb[0].mxu0
      %v3488 = vadd.f32 0.0, %v3487
      %v3489 = vpop.f32.mrb[0].mxu0
      %3490 = vmatprep.mubr.bf16.mxu0 0
      %3491 = vmatmul.mubr.bf16.gmra.mrb[0].mxu0 %v3400
      %v3492 = vpop.f32.mrb[0].mxu0
      %v3493 = vadd.f32 0.0, %v3492
      %v3494 = vpop.f32.mrb[0].mxu0
      %v3495 = vpop.f32.mrb[0].mxu0
      %v3496 = vadd.f32 0.0, %v3495
      %v3497 = vpop.f32.mrb[0].mxu0
      %3498 = vdwg.mxu0
      %v3499 = vadd.f32 %v3372, %v3437
      %v3500 = vadd.f32 %v3373, %v3440
      %v3501 = vadd.f32 %v3374, %v3445
      %v3502 = vadd.f32 %v3375, %v3448
      %v3503 = vadd.f32 %v3376, %v3453
      %v3504 = vadd.f32 %v3377, %v3456
      %v3505 = vadd.f32 %v3378, %v3461
      %v3506 = vadd.f32 %v3379, %v3464
      %v3507 = vadd.f32 %v3380, %v3469
      %v3508 = vadd.f32 %v3381, %v3472
      %v3509 = vadd.f32 %v3382, %v3477
      %v3510 = vadd.f32 %v3383, %v3480
      %v3511 = vadd.f32 %v3384, %v3485
      %v3512 = vadd.f32 %v3385, %v3488
      %v3513 = vadd.f32 %v3386, %v3493
      %v3514 = vadd.f32 %v3387, %v3496
      %v3516 = vshrl.u32 %v2185, 16
      %v3518 = vrot.slane %v3516, 4
      %v3519 = vshll.u32 %v2185, 16
      %v3521 = vrot.slane %v3519, 5
      %v3522 = vor.u32 %v3518, %v3521
      %v3523 = vrot.slane %v3522, 4
      %v3525 = vshll.u32 %v2186, 16
      %v3527 = vrot.slane %v3525, 5
      %v3528 = vsel %vm594, %v3523, %v3527
      %v3529 = vshrl.u32 %v2186, 16
      %v3531 = vrot.slane %v3529, 4
      %v3532 = vor.u32 %v3531, %v3527
      %v3533 = vrot.slane %v3532, 4
      %v3535 = vshll.u32 %v2187, 16
      %v3537 = vrot.slane %v3535, 5
      %v3538 = vsel %vm594, %v3533, %v3537
      %v3539 = vunpack.c.l.b16 %v3528
      %v3540 = vunpack.c.l.b16 %v3538
      %v3541 = vpack.c.b16 %v3540, %v3539
      %v3544 = vunpack.c.l.b16 %v2202
      %v3545 = vunpack.c.l.b16 %v2203
      %v3546 = vpack.c.b16 %v3545, %v3544
      %v3549 = vsel %vm817, %v3541, 0
      %3551 = vmatprep.subr.bf16.mxu0 0
      %3552 = vmatpush1.bf16.msra.mxu0 %v3546
      %3553 = vmatprep.subr.bf16.mxu0 0
      %3554 = vmatpush1.bf16.msra.mxu0 0
      %3555 = vmatprep.subr.bf16.mxu0 0
      %3556 = vmatpush1.bf16.msra.mxu0 0
      %3557 = vmatprep.subr.bf16.mxu0 0
      %3558 = vmatpush1.bf16.msra.mxu0 0
      %3559 = vmatprep.subr.bf16.mxu0 0
      %3560 = vmatpush1.bf16.msra.mxu0 0
      %3561 = vmatprep.subr.bf16.mxu0 0
      %3562 = vmatpush1.bf16.msra.mxu0 0
      %3563 = vmatprep.subr.bf16.mxu0 0
      %3564 = vmatpush1.bf16.msra.mxu0 0
      %3565 = vmatprep.subr.bf16.mxu0 0
      %3566 = vmatpush1.bf16.msra.mxu0 0
      %3567 = vmatprep.subr.bf16.mxu0 0
      %3568 = vmatpush1.bf16.msra.mxu0 0
      %3569 = vmatprep.subr.bf16.mxu0 0
      %3570 = vmatpush1.bf16.msra.mxu0 0
      %3571 = vmatprep.subr.bf16.mxu0 0
      %3572 = vmatpush1.bf16.msra.mxu0 0
      %3573 = vmatprep.subr.bf16.mxu0 0
      %3574 = vmatpush1.bf16.msra.mxu0 0
      %3575 = vmatprep.subr.bf16.mxu0 0
      %3576 = vmatpush1.bf16.msra.mxu0 0
      %3577 = vmatprep.subr.bf16.mxu0 0
      %3578 = vmatpush1.bf16.msra.mxu0 0
      %3579 = vmatprep.subr.bf16.mxu0 0
      %3580 = vmatpush1.bf16.msra.mxu0 0
      %3581 = vmatprep.subr.bf16.mxu0 0
      %3582 = vmatpush1.bf16.msra.mxu0 0
      %3583 = vmatprep.mubr.bf16.mxu0 0
      %3584 = vmatmul.mubr.bf16.gmra.mrb[0].mxu0 %v2618
      %v3585 = vpop.f32.mrb[0].mxu0
      %v3586 = vadd.f32 0.0, %v3585
      %v3587 = vpop.f32.mrb[0].mxu0
      %v3588 = vpop.f32.mrb[0].mxu0
      %v3589 = vadd.f32 0.0, %v3588
      %v3590 = vpop.f32.mrb[0].mxu0
      %3591 = vmatprep.mubr.bf16.mxu0 0
      %3592 = vmatmul.mubr.bf16.gmra.mrb[0].mxu0 %v2621
      %v3593 = vpop.f32.mrb[0].mxu0
      %v3594 = vadd.f32 0.0, %v3593
      %v3595 = vpop.f32.mrb[0].mxu0
      %v3596 = vpop.f32.mrb[0].mxu0
      %v3597 = vadd.f32 0.0, %v3596
      %v3598 = vpop.f32.mrb[0].mxu0
      %3599 = vmatprep.mubr.bf16.mxu0 0
      %3600 = vmatmul.mubr.bf16.gmra.mrb[0].mxu0 %v2624
      %v3601 = vpop.f32.mrb[0].mxu0
      %v3602 = vadd.f32 0.0, %v3601
      %v3603 = vpop.f32.mrb[0].mxu0
      %v3604 = vpop.f32.mrb[0].mxu0
      %v3605 = vadd.f32 0.0, %v3604
      %v3606 = vpop.f32.mrb[0].mxu0
      %3607 = vmatprep.mubr.bf16.mxu0 0
      %3608 = vmatmul.mubr.bf16.gmra.mrb[0].mxu0 %v2627
      %v3609 = vpop.f32.mrb[0].mxu0
      %v3610 = vadd.f32 0.0, %v3609
      %v3611 = vpop.f32.mrb[0].mxu0
      %v3612 = vpop.f32.mrb[0].mxu0
      %v3613 = vadd.f32 0.0, %v3612
      %v3614 = vpop.f32.mrb[0].mxu0
      %3615 = vmatprep.mubr.bf16.mxu0 0
      %3616 = vmatmul.mubr.bf16.gmra.mrb[0].mxu0 %v2630
      %v3617 = vpop.f32.mrb[0].mxu0
      %v3618 = vadd.f32 0.0, %v3617
      %v3619 = vpop.f32.mrb[0].mxu0
      %v3620 = vpop.f32.mrb[0].mxu0
      %v3621 = vadd.f32 0.0, %v3620
      %v3622 = vpop.f32.mrb[0].mxu0
      %3623 = vmatprep.mubr.bf16.mxu0 0
      %3624 = vmatmul.mubr.bf16.gmra.mrb[0].mxu0 %v2633
      %v3625 = vpop.f32.mrb[0].mxu0
      %v3626 = vadd.f32 0.0, %v3625
      %v3627 = vpop.f32.mrb[0].mxu0
      %v3628 = vpop.f32.mrb[0].mxu0
      %v3629 = vadd.f32 0.0, %v3628
      %v3630 = vpop.f32.mrb[0].mxu0
      %3631 = vmatprep.mubr.bf16.mxu0 0
      %3632 = vmatmul.mubr.bf16.gmra.mrb[0].mxu0 %v3140
      %v3633 = vpop.f32.mrb[0].mxu0
      %v3634 = vadd.f32 0.0, %v3633
      %v3635 = vpop.f32.mrb[0].mxu0
      %v3636 = vpop.f32.mrb[0].mxu0
      %v3637 = vadd.f32 0.0, %v3636
      %v3638 = vpop.f32.mrb[0].mxu0
      %3639 = vmatprep.mubr.bf16.mxu0 0
      %3640 = vmatmul.mubr.bf16.gmra.mrb[0].mxu0 %v3549
      %v3641 = vpop.f32.mrb[0].mxu0
      %v3642 = vadd.f32 0.0, %v3641
      %v3643 = vpop.f32.mrb[0].mxu0
      %v3644 = vpop.f32.mrb[0].mxu0
      %v3645 = vadd.f32 0.0, %v3644
      %v3646 = vpop.f32.mrb[0].mxu0
      %3647 = vdwg.mxu0
      %v3648 = vadd.f32 %v3499, %v3586
      %v3649 = vadd.f32 %v3500, %v3589
      %v3650 = vadd.f32 %v3501, %v3594
      %v3651 = vadd.f32 %v3502, %v3597
      %v3652 = vadd.f32 %v3503, %v3602
      %v3653 = vadd.f32 %v3504, %v3605
      %v3654 = vadd.f32 %v3505, %v3610
      %v3655 = vadd.f32 %v3506, %v3613
      %v3656 = vadd.f32 %v3507, %v3618
      %v3657 = vadd.f32 %v3508, %v3621
      %v3658 = vadd.f32 %v3509, %v3626
      %v3659 = vadd.f32 %v3510, %v3629
      %v3660 = vadd.f32 %v3511, %v3634
      %v3661 = vadd.f32 %v3512, %v3637
      %v3662 = vadd.f32 %v3513, %v3642
      %v3663 = vadd.f32 %v3514, %v3645
      %v3665 = vrot.slane %v2185, 5
      %v3666 = vrot.slane %v3665, 4
      %v3667 = vrot.slane %v2186, 5
      %v3668 = vsel %vm1116, %v3666, %v3667
      %v3669 = vrot.slane %v3667, 4
      %v3670 = vrot.slane %v2187, 5
      %v3671 = vsel %vm1116, %v3669, %v3670
      %v3672 = vunpack.c.l.b16 %v3668
      %v3673 = vunpack.c.l.b16 %v3671
      %v3674 = vpack.c.b16 %v3673, %v3672
      %v3677 = vunpack.c.l.b16 %v2204
      %v3678 = vunpack.c.l.b16 %v2205
      %v3679 = vpack.c.b16 %v3678, %v3677
      %v3682 = vsel %vm817, %v3674, 0
      %3684 = vmatprep.subr.bf16.mxu0 0
      %3685 = vmatpush1.bf16.msra.mxu0 %v3679
      %3686 = vmatprep.subr.bf16.mxu0 0
      %3687 = vmatpush1.bf16.msra.mxu0 0
      %3688 = vmatprep.subr.bf16.mxu0 0
      %3689 = vmatpush1.bf16.msra.mxu0 0
      %3690 = vmatprep.subr.bf16.mxu0 0
      %3691 = vmatpush1.bf16.msra.mxu0 0
      %3692 = vmatprep.subr.bf16.mxu0 0
      %3693 = vmatpush1.bf16.msra.mxu0 0
      %3694 = vmatprep.subr.bf16.mxu0 0
      %3695 = vmatpush1.bf16.msra.mxu0 0
      %3696 = vmatprep.subr.bf16.mxu0 0
      %3697 = vmatpush1.bf16.msra.mxu0 0
      %3698 = vmatprep.subr.bf16.mxu0 0
      %3699 = vmatpush1.bf16.msra.mxu0 0
      %3700 = vmatprep.subr.bf16.mxu0 0
      %3701 = vmatpush1.bf16.msra.mxu0 0
      %3702 = vmatprep.subr.bf16.mxu0 0
      %3703 = vmatpush1.bf16.msra.mxu0 0
      %3704 = vmatprep.subr.bf16.mxu0 0
      %3705 = vmatpush1.bf16.msra.mxu0 0
      %3706 = vmatprep.subr.bf16.mxu0 0
      %3707 = vmatpush1.bf16.msra.mxu0 0
      %3708 = vmatprep.subr.bf16.mxu0 0
      %3709 = vmatpush1.bf16.msra.mxu0 0
      %3710 = vmatprep.subr.bf16.mxu0 0
      %3711 = vmatpush1.bf16.msra.mxu0 0
      %3712 = vmatprep.subr.bf16.mxu0 0
      %3713 = vmatpush1.bf16.msra.mxu0 0
      %3714 = vmatprep.subr.bf16.mxu0 0
      %3715 = vmatpush1.bf16.msra.mxu0 0
      %3716 = vmatprep.mubr.bf16.mxu0 0
      %3717 = vmatmul.mubr.bf16.gmra.mrb[0].mxu0 %v2849
      %v3718 = vpop.f32.mrb[0].mxu0
      %v3719 = vadd.f32 0.0, %v3718
      %v3720 = vpop.f32.mrb[0].mxu0
      %v3721 = vpop.f32.mrb[0].mxu0
      %v3722 = vadd.f32 0.0, %v3721
      %v3723 = vpop.f32.mrb[0].mxu0
      %3724 = vmatprep.mubr.bf16.mxu0 0
      %3725 = vmatmul.mubr.bf16.gmra.mrb[0].mxu0 %v2852
      %v3726 = vpop.f32.mrb[0].mxu0
      %v3727 = vadd.f32 0.0, %v3726
      %v3728 = vpop.f32.mrb[0].mxu0
      %v3729 = vpop.f32.mrb[0].mxu0
      %v3730 = vadd.f32 0.0, %v3729
      %v3731 = vpop.f32.mrb[0].mxu0
      %3732 = vmatprep.mubr.bf16.mxu0 0
      %3733 = vmatmul.mubr.bf16.gmra.mrb[0].mxu0 %v2855
      %v3734 = vpop.f32.mrb[0].mxu0
      %v3735 = vadd.f32 0.0, %v3734
      %v3736 = vpop.f32.mrb[0].mxu0
      %v3737 = vpop.f32.mrb[0].mxu0
      %v3738 = vadd.f32 0.0, %v3737
      %v3739 = vpop.f32.mrb[0].mxu0
      %3740 = vmatprep.mubr.bf16.mxu0 0
      %3741 = vmatmul.mubr.bf16.gmra.mrb[0].mxu0 %v2858
      %v3742 = vpop.f32.mrb[0].mxu0
      %v3743 = vadd.f32 0.0, %v3742
      %v3744 = vpop.f32.mrb[0].mxu0
      %v3745 = vpop.f32.mrb[0].mxu0
      %v3746 = vadd.f32 0.0, %v3745
      %v3747 = vpop.f32.mrb[0].mxu0
      %3748 = vmatprep.mubr.bf16.mxu0 0
      %3749 = vmatmul.mubr.bf16.gmra.mrb[0].mxu0 %v2861
      %v3750 = vpop.f32.mrb[0].mxu0
      %v3751 = vadd.f32 0.0, %v3750
      %v3752 = vpop.f32.mrb[0].mxu0
      %v3753 = vpop.f32.mrb[0].mxu0
      %v3754 = vadd.f32 0.0, %v3753
      %v3755 = vpop.f32.mrb[0].mxu0
      %3756 = vmatprep.mubr.bf16.mxu0 0
      %3757 = vmatmul.mubr.bf16.gmra.mrb[0].mxu0 %v2864
      %v3758 = vpop.f32.mrb[0].mxu0
      %v3759 = vadd.f32 0.0, %v3758
      %v3760 = vpop.f32.mrb[0].mxu0
      %v3761 = vpop.f32.mrb[0].mxu0
      %v3762 = vadd.f32 0.0, %v3761
      %v3763 = vpop.f32.mrb[0].mxu0
      %3764 = vmatprep.mubr.bf16.mxu0 0
      %3765 = vmatmul.mubr.bf16.gmra.mrb[0].mxu0 %v3273
      %v3766 = vpop.f32.mrb[0].mxu0
      %v3767 = vadd.f32 0.0, %v3766
      %v3768 = vpop.f32.mrb[0].mxu0
      %v3769 = vpop.f32.mrb[0].mxu0
      %v3770 = vadd.f32 0.0, %v3769
      %v3771 = vpop.f32.mrb[0].mxu0
      %3772 = vmatprep.mubr.bf16.mxu0 0
      %3773 = vmatmul.mubr.bf16.gmra.mrb[0].mxu0 %v3682
      %v3774 = vpop.f32.mrb[0].mxu0
      %v3775 = vadd.f32 0.0, %v3774
      %v3776 = vpop.f32.mrb[0].mxu0
      %v3777 = vpop.f32.mrb[0].mxu0
      %v3778 = vadd.f32 0.0, %v3777
      %v3779 = vpop.f32.mrb[0].mxu0
      %3780 = vdwg.mxu0
      %v3781 = vadd.f32 %v3648, %v3719
      %v3782 = vadd.f32 %v3649, %v3722
      %v3783 = vadd.f32 %v3650, %v3727
      %v3784 = vadd.f32 %v3651, %v3730
      %v3785 = vadd.f32 %v3652, %v3735
      %v3786 = vadd.f32 %v3653, %v3738
      %v3787 = vadd.f32 %v3654, %v3743
      %v3788 = vadd.f32 %v3655, %v3746
      %v3789 = vadd.f32 %v3656, %v3751
      %v3790 = vadd.f32 %v3657, %v3754
      %v3791 = vadd.f32 %v3658, %v3759
      %v3792 = vadd.f32 %v3659, %v3762
      %v3793 = vadd.f32 %v3660, %v3767
      %v3794 = vadd.f32 %v3661, %v3770
      %v3795 = vadd.f32 %v3662, %v3775
      %v3796 = vadd.f32 %v3663, %v3778
      %v3797 = vld [vmem:[%s6] sm:$0x1]
      %v3799 = vlaneseq
      %v3800 = vshrl.u32 %v3799, 7
      %v3801 = vsub.s32 0, %v3800
      %v3802 = vrot.slane %v3797, %v3801
      %v3804 = vmul.f32 %v3781, %v3802
      %v3805 = vmul.f32 %v3782, %v3802
      %v3806 = vmul.f32 %v3783, %v3802
      %v3807 = vmul.f32 %v3784, %v3802
      %v3808 = vmul.f32 %v3785, %v3802
      %v3809 = vmul.f32 %v3786, %v3802
      %v3810 = vmul.f32 %v3787, %v3802
      %v3811 = vmul.f32 %v3788, %v3802
      %v3812 = vmul.f32 %v3789, %v3802
      %v3813 = vmul.f32 %v3790, %v3802
      %v3814 = vmul.f32 %v3791, %v3802
      %v3815 = vmul.f32 %v3792, %v3802
      %v3816 = vmul.f32 %v3793, %v3802
      %v3817 = vmul.f32 %v3794, %v3802
      %v3818 = vmul.f32 %v3795, %v3802
      %v3819 = vmul.f32 %v3796, %v3802
      %v3820 = vld [vmem:[%s7] sm:$0x1]
      %v3822 = vlaneseq
      %v3823 = vshrl.u32 %v3822, 7
      %v3824 = vsub.s32 0, %v3823
      %v3825 = vrot.slane %v3820, %v3824
      %v3827 = vadd.f32 %v3804, %v3825
      %v3828 = vadd.f32 %v3805, %v3825
      %v3829 = vadd.f32 %v3806, %v3825
      %v3830 = vadd.f32 %v3807, %v3825
      %v3831 = vadd.f32 %v3808, %v3825
      %v3832 = vadd.f32 %v3809, %v3825
      %v3833 = vadd.f32 %v3810, %v3825
      %v3834 = vadd.f32 %v3811, %v3825
      %v3835 = vadd.f32 %v3812, %v3825
      %v3836 = vadd.f32 %v3813, %v3825
      %v3837 = vadd.f32 %v3814, %v3825
      %v3838 = vadd.f32 %v3815, %v3825
      %v3839 = vadd.f32 %v3816, %v3825
      %v3840 = vadd.f32 %v3817, %v3825
      %v3841 = vadd.f32 %v3818, %v3825
      %v3842 = vadd.f32 %v3819, %v3825
      %vm3843 = vcmp.ge.f32.partialorder %v3827, 0.0
      %vm3844 = vcmp.ge.f32.partialorder %v3828, 0.0
      %vm3845 = vcmp.ge.f32.partialorder %v3829, 0.0
      %vm3846 = vcmp.ge.f32.partialorder %v3830, 0.0
      %vm3847 = vcmp.ge.f32.partialorder %v3831, 0.0
      %vm3848 = vcmp.ge.f32.partialorder %v3832, 0.0
      %vm3849 = vcmp.ge.f32.partialorder %v3833, 0.0
      %vm3850 = vcmp.ge.f32.partialorder %v3834, 0.0
      %vm3851 = vcmp.ge.f32.partialorder %v3835, 0.0
      %vm3852 = vcmp.ge.f32.partialorder %v3836, 0.0
      %vm3853 = vcmp.ge.f32.partialorder %v3837, 0.0
      %vm3854 = vcmp.ge.f32.partialorder %v3838, 0.0
      %vm3855 = vcmp.ge.f32.partialorder %v3839, 0.0
      %vm3856 = vcmp.ge.f32.partialorder %v3840, 0.0
      %vm3857 = vcmp.ge.f32.partialorder %v3841, 0.0
      %vm3858 = vcmp.ge.f32.partialorder %v3842, 0.0
      %v3859 = vmul.f32 %v3827, 0.01
      %v3860 = vmul.f32 %v3828, 0.01
      %v3861 = vmul.f32 %v3829, 0.01
      %v3862 = vmul.f32 %v3830, 0.01
      %v3863 = vmul.f32 %v3831, 0.01
      %v3864 = vmul.f32 %v3832, 0.01
      %v3865 = vmul.f32 %v3833, 0.01
      %v3866 = vmul.f32 %v3834, 0.01
      %v3867 = vmul.f32 %v3835, 0.01
      %v3868 = vmul.f32 %v3836, 0.01
      %v3869 = vmul.f32 %v3837, 0.01
      %v3870 = vmul.f32 %v3838, 0.01
      %v3871 = vmul.f32 %v3839, 0.01
      %v3872 = vmul.f32 %v3840, 0.01
      %v3873 = vmul.f32 %v3841, 0.01
      %v3874 = vmul.f32 %v3842, 0.01
      %v3875 = vsel %vm3843, %v3827, %v3859
      %v3876 = vsel %vm3844, %v3828, %v3860
      %v3877 = vsel %vm3845, %v3829, %v3861
      %v3878 = vsel %vm3846, %v3830, %v3862
      %v3879 = vsel %vm3847, %v3831, %v3863
      %v3880 = vsel %vm3848, %v3832, %v3864
      %v3881 = vsel %vm3849, %v3833, %v3865
      %v3882 = vsel %vm3850, %v3834, %v3866
      %v3883 = vsel %vm3851, %v3835, %v3867
      %v3884 = vsel %vm3852, %v3836, %v3868
      %v3885 = vsel %vm3853, %v3837, %v3869
      %v3886 = vsel %vm3854, %v3838, %v3870
      %v3887 = vsel %vm3855, %v3839, %v3871
      %v3888 = vsel %vm3856, %v3840, %v3872
      %v3889 = vsel %vm3857, %v3841, %v3873
      %v3890 = vsel %vm3858, %v3842, %v3874
      %v3891 = vpack.c.bf16 %v3876, %v3875
      %v3892 = vpack.c.bf16 %v3878, %v3877
      %v3893 = vpack.c.bf16 %v3880, %v3879
      %v3894 = vpack.c.bf16 %v3882, %v3881
      %v3895 = vpack.c.bf16 %v3884, %v3883
      %v3896 = vpack.c.bf16 %v3886, %v3885
      %v3897 = vpack.c.bf16 %v3888, %v3887
      %v3898 = vpack.c.bf16 %v3890, %v3889
      %v3907 = vunpack.c.l.b16 %v3891
      %v3908 = vunpack.c.h.b16 %v3891
      %v3909 = vunpack.c.l.b16 %v3892
      %v3910 = vunpack.c.h.b16 %v3892
      %v3911 = vunpack.c.l.b16 %v3893
      %v3912 = vunpack.c.h.b16 %v3893
      %v3913 = vunpack.c.l.b16 %v3894
      %v3914 = vunpack.c.h.b16 %v3894
      %v3915 = vunpack.c.l.b16 %v3895
      %v3916 = vunpack.c.h.b16 %v3895
      %v3917 = vunpack.c.l.b16 %v3896
      %v3918 = vunpack.c.h.b16 %v3896
      %v3919 = vunpack.c.l.b16 %v3897
      %v3920 = vunpack.c.h.b16 %v3897
      %v3921 = vunpack.c.l.b16 %v3898
      %v3922 = vunpack.c.h.b16 %v3898
      %v3923 = vpack.c.b16 %v3907, %v3907
      %v3924 = vpack.c.b16 %v3908, %v3908
      %v3925 = vpack.c.b16 %v3909, %v3909
      %v3926 = vpack.c.b16 %v3910, %v3910
      %v3927 = vpack.c.b16 %v3911, %v3911
      %v3928 = vpack.c.b16 %v3912, %v3912
      %v3929 = vpack.c.b16 %v3913, %v3913
      %v3930 = vpack.c.b16 %v3914, %v3914
      %v3931 = vpack.c.b16 %v3915, %v3915
      %v3932 = vpack.c.b16 %v3916, %v3916
      %v3933 = vpack.c.b16 %v3917, %v3917
      %v3934 = vpack.c.b16 %v3918, %v3918
      %v3935 = vpack.c.b16 %v3919, %v3919
      %v3936 = vpack.c.b16 %v3920, %v3920
      %v3937 = vpack.c.b16 %v3921, %v3921
      %v3938 = vpack.c.b16 %v3922, %v3922
      %vm3955 = vcmask 257024
      %3956 = vst.msk [vmem:[%s541] sm:$0xf] %vm3955, %v3923
      %3957 = vst.msk [vmem:[%s541 + $0x4] sm:$0xf] %vm3955, %v3924
      %3958 = vst.msk [vmem:[%s541 + $0x8] sm:$0xf] %vm3955, %v3925
      %3959 = vst.msk [vmem:[%s541 + $0xc] sm:$0xf] %vm3955, %v3926
      %3960 = vst.msk [vmem:[%s541 + $0x10] sm:$0xf] %vm3955, %v3927
      %3961 = vst.msk [vmem:[%s541 + $0x14] sm:$0xf] %vm3955, %v3928
      %3962 = vst.msk [vmem:[%s541 + $0x18] sm:$0xf] %vm3955, %v3929
      %3963 = vst.msk [vmem:[%s541 + $0x1c] sm:$0xf] %vm3955, %v3930
      %3964 = vst.msk [vmem:[%s541 + $0x20] sm:$0xf] %vm3955, %v3931
      %3965 = vst.msk [vmem:[%s541 + $0x24] sm:$0xf] %vm3955, %v3932
      %3966 = vst.msk [vmem:[%s541 + $0x28] sm:$0xf] %vm3955, %v3933
      %3967 = vst.msk [vmem:[%s541 + $0x2c] sm:$0xf] %vm3955, %v3934
      %3968 = vst.msk [vmem:[%s541 + $0x30] sm:$0xf] %vm3955, %v3935
      %3969 = vst.msk [vmem:[%s541 + $0x34] sm:$0xf] %vm3955, %v3936
      %3970 = vst.msk [vmem:[%s541 + $0x38] sm:$0xf] %vm3955, %v3937
      %3971 = vst.msk [vmem:[%s541 + $0x3c] sm:$0xf] %vm3955, %v3938
      %s3972 = smul.u32 16, %s24
      %p3973 = scmp.lt.s32.totalorder %s23, 1
      %s3974 = scalar_select %p3973, %s23, 1
      %p3975 = scmp.lt.s32.totalorder %s3972, 31
      %s3976 = scalar_select %p3975, %s3972, 31
      %s3977 = smul.addr %s3974, 32
      %s3978 = sadd.s32 %s3976, %s3977
      %s3979 = smul.addr %s3978, 4
      %s3980 = scalar_lea.vmem %s8, %s3979
      // Predicated region
      $region53: #{upsample_bn_forward.2} parent=51 // pred_check
        %p3981 = pneg %p255
      $region54: #{upsample_bn_forward.2} parent=51 // pred_check_branch
        %3983 = sbr.rel (%p3981) target = $region56
      $region55: #{upsample_bn_forward.2} parent=51 // pred_region
        %s3984 = smul.u32 16, %s24
      $region56: #{upsample_bn_forward.2} parent=51 // pred_fallthru
        _
    $region52: #{upsample_bn_forward.2} parent=5 // pred_fallthru
      _
    %p3985 = scmp.le.s32.totalorder 2, %s14
    // Predicated region
    $region57: #{upsample_bn_forward.2} parent=5 // pred_check
      %p3986 = pneg %p3985
    $region58: #{upsample_bn_forward.2} parent=5 // pred_check_branch
      %3988 = sbr.rel (%p3986) target = $region60
    $region59: #{upsample_bn_forward.2} parent=5 // pred_region
      %s3989 = ssub.s32 %s14, 2
      // Predicated region
      $region61: #{upsample_bn_forward.2} parent=59 // pred_check
        %p3990 = pneg %p261
      $region62: #{upsample_bn_forward.2} parent=59 // pred_check_branch
        %3992 = sbr.rel (%p3990) target = $region64
      $region63: #{upsample_bn_forward.2} parent=59 // pred_region
        %s3993 = smul.u32 16, %s26
        %p3994 = scmp.lt.s32.totalorder %s25, 1
        %s3995 = scalar_select %p3994, %s25, 1
        %p3996 = scmp.lt.s32.totalorder %s3993, 31
        %s3997 = scalar_select %p3996, %s3993, 31
        %s3998 = smul.addr %s3995, 32
        %s3999 = sadd.s32 %s3997, %s3998
        %s4000 = smul.addr %s3999, 4
        %s4001 = scalar_lea.vmem %s8, %s4000
      $region64: #{upsample_bn_forward.2} parent=59 // pred_fallthru
        _
    $region60: #{upsample_bn_forward.2} parent=5 // pred_fallthru
      _
  $region6: #{upsample_bn_forward.2} parent=0 // loop_footer
    %s18 = sadd.s32 1, %s14
  $region7: #{upsample_bn_forward.2} parent=0 // loop_footer_branch
    %13 = sbr.rel target = $region3
  $region8: #{upsample_bn_forward.2} parent=0 // loop_exit
    _

</llo_original>
